<compile_context>
chip_gen: v7x
topology: tpu7x:2x2x1
jax: 0.10.0
libtpu: 0.0.40
codegen_flags: <defaults>
</compile_context>

<pallas_src>
import jax
import jax.numpy as jnp
from jax.experimental import pallas as pl
from jax.experimental.pallas import tpu as pltpu

NEG_SLOPE = 0.2    # DGL GATConv default LeakyReLU negative slope
MASK_VAL = -1e30   # additive mask for non-edges (keep f32)


# ------------------------- fused Pallas kernel body -------------------------

def _gat_block(adj_mask, feat, w, att, b, heads):
    """One dense GATConv on in-VMEM values, dst-major attention.

    adj_mask: (N_dst, N_src) bool   transposed edge mask
    feat:     (N, Fin)
    w:        (Fin, H*D)            projection weight
    att:      (H*D, 2H)             block-diag [a_l | a_r] attention matrix
    b:        (1, H*D)              bias
    returns:  (N, H*D)
    """
    z = jnp.dot(feat, w, preferred_element_type=jnp.float32)        # (N, H*D)
    s = jnp.dot(z, att, preferred_element_type=jnp.float32)         # (N, 2H)
    d = w.shape[1] // heads
    el_t = jnp.transpose(s[:, :heads])                              # (H, N) src scores as rows
    outs = []
    for h in range(heads):                                          # H small, static unroll
        # e[dst, src] = er[dst] + el[src]; softmax over the src (lane) axis.
        e = s[:, heads + h:heads + h + 1] + el_t[h:h + 1, :]        # (N_dst, N_src)
        e = jnp.where(e > 0, e, NEG_SLOPE * e)                      # LeakyReLU
        e = jnp.where(adj_mask, e, MASK_VAL)
        m = jnp.max(e, axis=-1, keepdims=True)
        p = jnp.where(adj_mask, jnp.exp(e - m), 0.0)
        denom = jnp.maximum(jnp.sum(p, axis=-1, keepdims=True), 1e-30)  # zero-in-degree guard
        alpha = p * pl.reciprocal(denom, approx=True)               # EUP slot, ~free
        outs.append(jnp.dot(alpha, z[:, h * d:(h + 1) * d],
                            preferred_element_type=jnp.float32))    # (N_dst, D), no transpose
    # one lane-dense per-layer value; bias add hoisted out of the head loop
    return jnp.concatenate(outs, axis=-1) + b


def build_duplex_kernel(args):
    heads = args["head"]
    n_layers = args["n_layers"]
    fusion_add = args["fusion"] == "add"
    fusion_layer = args["fusion_layer"]

    def kernel(*refs):
        adj_t_ref, am_ref, ph_ref = refs[0], refs[1], refs[2]
        out_ref = refs[-1]
        wrefs = refs[3:-1]

        adj_mask = adj_t_ref[...] > 0.0      # hoisted: shared by every GAT conv
        h_am = am_ref[...]
        h_ph = ph_ref[...]

        pos = [0]

        def take_gat():
            w = wrefs[pos[0]][...]
            a = wrefs[pos[0] + 1][...]
            b = wrefs[pos[0] + 2][...]
            pos[0] += 3
            return w, a, b

        for i in range(n_layers):
            pam = take_gat()
            pph = take_gat()
            if fusion_add and i == fusion_layer:
                pamg = take_gat()
                pphg = take_gat()
                h_am_agg = _gat_block(adj_mask, h_ph, *pamg, heads=heads)
                h_ph_agg = _gat_block(adj_mask, h_am, *pphg, heads=heads)
                h_am_new = _gat_block(adj_mask, h_am, *pam, heads=heads)
                h_ph_new = _gat_block(adj_mask, h_ph, *pph, heads=heads)
                h_am = h_am_new + h_am_agg   # flat (N, H*D) add == per-head add
                h_ph = h_ph_new + h_ph_agg
            else:
                h_am = _gat_block(adj_mask, h_am, *pam, heads=heads)
                h_ph = _gat_block(adj_mask, h_ph, *pph, heads=heads)
            if i < n_layers - 1:
                # flatten(1) is a no-op in the flat layout; torch applies
                # relu+dropout twice (relu idempotent, dropout=identity).
                h_am = jnp.maximum(h_am, 0.0)
                h_ph = jnp.maximum(h_ph, 0.0)
            else:
                pw = wrefs[pos[0]][...]
                pb = wrefs[pos[0] + 1][...]
                d = h_am.shape[1] // heads
                inv_h = 1.0 / float(heads)
                am_mean = sum(h_am[:, h * d:(h + 1) * d] for h in range(heads)) * inv_h
                ph_mean = sum(h_ph[:, h * d:(h + 1) * d] for h in range(heads)) * inv_h
                # projector on concat([am_mean, ph_mean]) expressed as two
                # matmuls against the row-split weight (no in-kernel concat).
                out_ref[...] = (
                    jnp.dot(am_mean, pw[:d, :], preferred_element_type=jnp.float32)
                    + jnp.dot(ph_mean, pw[d:, :], preferred_element_type=jnp.float32)
                    + pb)

    return kernel


# ------------------------------ host-side prep ------------------------------

def _attention_matrix(al, ar):
    """Fold per-head a_l / a_r into a block-diagonal (H*D, 2H) matrix so the
    attention logits for every head come out of a single MXU matmul:
    (z @ A)[:, :H] = el per head, (z @ A)[:, H:] = er per head."""
    H, D = al.shape
    A = jnp.zeros((H * D, 2 * H), jnp.float32)
    for h in range(H):
        A = A.at[h * D:(h + 1) * D, h].set(al[h])
        A = A.at[h * D:(h + 1) * D, H + h].set(ar[h])
    return A


def _flatten_params(params, args):
    n_layers = args["n_layers"]
    fusion_add = args["fusion"] == "add"
    fusion_layer = args["fusion_layer"]

    def gat_arrays(p):
        return [p["w"], _attention_matrix(p["al"], p["ar"]), p["b"]]

    flat = []
    for i in range(n_layers):
        flat += gat_arrays(params["am"][i])
        flat += gat_arrays(params["ph"][i])
        if fusion_add and i == fusion_layer:
            flat += gat_arrays(params["am_agg"])
            flat += gat_arrays(params["ph_agg"])
    flat += [params["proj_w"], params["proj_b"]]
    return flat


def duplex_forward_pallas(params, adj, input_am, input_ph, args):
    """Whole DUPLEX forward in a single pallas_call (graph + weights in VMEM)."""
    flat = _flatten_params(params, args)
    kernel = build_duplex_kernel(args)
    n_nodes = input_am.shape[0]
    out_dim = params["proj_w"].shape[1]
    vmem = pl.BlockSpec(memory_space=pltpu.MemorySpace.VMEM)
    # TODO(synk): for large graphs, tile the dst axis with a grid
    # (adj block (N_src, tile_dst), dimension_semantics=("parallel","arbitrary"),
    # dst tile sized for v7x's 64 MiB VMEM); whole-graph-in-VMEM is toy-N only.
    return pl.pallas_call(
        kernel,
        out_shape=jax.ShapeDtypeStruct((n_nodes, out_dim), jnp.float32),
        in_specs=[vmem] * (3 + len(flat)),
        out_specs=vmem,
    )(adj.T, input_am, input_ph, *flat)


# --------------------------- pure-JAX reference -----------------------------

def gat_conv_ref(adj, feat, p):
    H, D = p["al"].shape
    z = jnp.dot(feat, p["w"], precision=jax.lax.Precision.HIGHEST)
    outs = []
    for h in range(H):
        zh = z[:, h * D:(h + 1) * D]
        el = jnp.sum(zh * p["al"][h], axis=-1, keepdims=True)
        er = jnp.sum(zh * p["ar"][h], axis=-1, keepdims=True)
        e = el + er.T
        e = jnp.where(e > 0, e, NEG_SLOPE * e)
        e = jnp.where(adj > 0, e, MASK_VAL)
        pe = jnp.where(adj > 0, jnp.exp(e - e.max(axis=0, keepdims=True)), 0.0)
        alpha = pe / pe.sum(axis=0, keepdims=True)
        outs.append(jnp.dot(alpha.T, zh, precision=jax.lax.Precision.HIGHEST)
                    + p["b"][:, h * D:(h + 1) * D])
    return jnp.concatenate(outs, axis=-1)


def duplex_forward_ref(params, adj, input_am, input_ph, args):
    H = args["head"]
    n_layers = args["n_layers"]
    h_am, h_ph = input_am, input_ph
    output = None
    for i in range(n_layers):
        pam, pph = params["am"][i], params["ph"][i]
        if args["fusion"] == "add" and i == args["fusion_layer"]:
            h_am_agg = gat_conv_ref(adj, h_ph, params["am_agg"])
            h_ph_agg = gat_conv_ref(adj, h_am, params["ph_agg"])
            h_am_new = gat_conv_ref(adj, h_am, pam)
            h_ph_new = gat_conv_ref(adj, h_ph, pph)
            h_am = h_am_new + h_am_agg
            h_ph = h_ph_new + h_ph_agg
        else:
            h_am = gat_conv_ref(adj, h_am, pam)
            h_ph = gat_conv_ref(adj, h_ph, pph)
        if i < n_layers - 1:
            h_am = jax.nn.relu(h_am)
            h_ph = jax.nn.relu(h_ph)
        else:
            N = h_am.shape[0]
            D = h_am.shape[1] // H
            h_am_m = h_am.reshape(N, H, D).mean(axis=1)
            h_ph_m = h_ph.reshape(N, H, D).mean(axis=1)
            output = jnp.dot(jnp.concatenate([h_am_m, h_ph_m], axis=-1),
                             params["proj_w"],
                             precision=jax.lax.Precision.HIGHEST) + params["proj_b"]
    return output


# ------------------------------- param init ---------------------------------

def init_gat_params(key, in_dim, out_dim, heads):
    k1, k2, k3, k4 = jax.random.split(key, 4)
    scale = 1.0 / jnp.sqrt(jnp.float32(in_dim))
    return dict(
        w=jax.random.normal(k1, (in_dim, heads * out_dim), jnp.float32) * scale,
        al=jax.random.normal(k2, (heads, out_dim), jnp.float32) * 0.1,
        ar=jax.random.normal(k3, (heads, out_dim), jnp.float32) * 0.1,
        b=jax.random.normal(k4, (1, heads * out_dim), jnp.float32) * 0.01,
    )


def init_duplex_params(key, args):
    H = args["head"]
    keys = jax.random.split(key, 8)
    am0 = init_gat_params(keys[0], args["input_dim"], args["hidden_dim"] // H, H)
    ph0 = init_gat_params(keys[1], args["input_dim"], args["hidden_dim"] // H, H)
    am1 = init_gat_params(keys[2], args["hidden_dim"], args["output_dim"], H)
    ph1 = init_gat_params(keys[3], args["hidden_dim"], args["output_dim"], H)
    am_agg = init_gat_params(keys[4], args["hidden_dim"], args["hidden_dim"] // H, H)
    ph_agg = init_gat_params(keys[5], args["hidden_dim"], args["hidden_dim"] // H, H)
    pin = args["output_dim"] * 2
    proj_w = jax.random.normal(keys[6], (pin, args["output_dim"]), jnp.float32) / jnp.sqrt(
        jnp.float32(pin))
    proj_b = jax.random.normal(keys[7], (1, args["output_dim"]), jnp.float32) * 0.01
    return dict(am=[am0, am1], ph=[ph0, ph1], am_agg=am_agg, ph_agg=ph_agg,
                proj_w=proj_w, proj_b=proj_b)


# ---------------------------------- main -------------------------------------

if __name__ == "__main__":
    # Args implied by DUPLEX.__init__ (fusion='add'; output_dim == hidden_dim//head
    # so the fusion add at the last layer broadcasts correctly).
    args = dict(input_dim=8, hidden_dim=16, output_dim=8, head=2,
                n_layers=2, fusion="add", fusion_layer=1, dr_rate=0.0)
    N = 16  # number of graph nodes

    key = jax.random.PRNGKey(0)
    k_adj, k_am, k_ph, k_par = jax.random.split(key, 4)

    # Dense adjacency mask (src, dst) with self-loops (no zero in-degree nodes).
    adj = jax.random.bernoulli(k_adj, 0.3, (N, N)).astype(jnp.float32)
    adj = jnp.maximum(adj, jnp.eye(N, dtype=jnp.float32))

    input_am = jax.random.normal(k_am, (N, args["input_dim"]), jnp.float32)
    input_ph = jax.random.normal(k_ph, (N, args["input_dim"]), jnp.float32)
    params = init_duplex_params(k_par, args)

    fwd = jax.jit(lambda p, a, xa, xp: duplex_forward_pallas(p, a, xa, xp, args))
    out = jax.block_until_ready(fwd(params, adj, input_am, input_ph))

    # Pure-JAX reference check.
    ref = duplex_forward_ref(params, adj, input_am, input_ph, args)
    assert out.shape == (N, args["output_dim"])
    assert jnp.allclose(out, ref, atol=3e-3, rtol=3e-3), (
        f"max abs diff {jnp.max(jnp.abs(out - ref))}")

    print("KERNEL_OK")
</pallas_src>

<mosaic_0001>
module attributes {stable_mosaic.version = 11 : i64} {
  func.func @kernel(%arg0: memref<16x16xf32, #tpu.memory_space<vmem>>, %arg1: memref<16x8xf32, #tpu.memory_space<vmem>>, %arg2: memref<16x8xf32, #tpu.memory_space<vmem>>, %arg3: memref<8x16xf32, #tpu.memory_space<vmem>>, %arg4: memref<16x4xf32, #tpu.memory_space<vmem>>, %arg5: memref<1x16xf32, #tpu.memory_space<vmem>>, %arg6: memref<8x16xf32, #tpu.memory_space<vmem>>, %arg7: memref<16x4xf32, #tpu.memory_space<vmem>>, %arg8: memref<1x16xf32, #tpu.memory_space<vmem>>, %arg9: memref<16x16xf32, #tpu.memory_space<vmem>>, %arg10: memref<16x4xf32, #tpu.memory_space<vmem>>, %arg11: memref<1x16xf32, #tpu.memory_space<vmem>>, %arg12: memref<16x16xf32, #tpu.memory_space<vmem>>, %arg13: memref<16x4xf32, #tpu.memory_space<vmem>>, %arg14: memref<1x16xf32, #tpu.memory_space<vmem>>, %arg15: memref<16x16xf32, #tpu.memory_space<vmem>>, %arg16: memref<16x4xf32, #tpu.memory_space<vmem>>, %arg17: memref<1x16xf32, #tpu.memory_space<vmem>>, %arg18: memref<16x16xf32, #tpu.memory_space<vmem>>, %arg19: memref<16x4xf32, #tpu.memory_space<vmem>>, %arg20: memref<1x16xf32, #tpu.memory_space<vmem>>, %arg21: memref<16x8xf32, #tpu.memory_space<vmem>>, %arg22: memref<1x8xf32, #tpu.memory_space<vmem>>, %arg23: memref<16x8xf32, #tpu.memory_space<vmem>>) attributes {dimension_semantics = [], scalar_prefetch = 0 : i64, scratch_operands = 0 : i64, tpu.core_type = #tpu.core_type<tc>} {
    %c0 = arith.constant 0 : index
    %c0_0 = arith.constant 0 : index
    %0 = vector.load %arg0[%c0, %c0_0] : memref<16x16xf32, #tpu.memory_space<vmem>>, vector<16x16xf32>
    %cst = arith.constant 0.000000e+00 : f32
    %1 = vector.broadcast %cst : f32 to vector<16x16xf32>
    %2 = arith.cmpf ogt, %0, %1 : vector<16x16xf32>
    %c0_1 = arith.constant 0 : index
    %c0_2 = arith.constant 0 : index
    %3 = vector.load %arg1[%c0_1, %c0_2] : memref<16x8xf32, #tpu.memory_space<vmem>>, vector<16x8xf32>
    %c0_3 = arith.constant 0 : index
    %c0_4 = arith.constant 0 : index
    %4 = vector.load %arg2[%c0_3, %c0_4] : memref<16x8xf32, #tpu.memory_space<vmem>>, vector<16x8xf32>
    %c0_5 = arith.constant 0 : index
    %c0_6 = arith.constant 0 : index
    %5 = vector.load %arg3[%c0_5, %c0_6] : memref<8x16xf32, #tpu.memory_space<vmem>>, vector<8x16xf32>
    %c0_7 = arith.constant 0 : index
    %c0_8 = arith.constant 0 : index
    %6 = vector.load %arg4[%c0_7, %c0_8] : memref<16x4xf32, #tpu.memory_space<vmem>>, vector<16x4xf32>
    %c0_9 = arith.constant 0 : index
    %c0_10 = arith.constant 0 : index
    %7 = vector.load %arg5[%c0_9, %c0_10] : memref<1x16xf32, #tpu.memory_space<vmem>>, vector<1x16xf32>
    %c0_11 = arith.constant 0 : index
    %c0_12 = arith.constant 0 : index
    %8 = vector.load %arg6[%c0_11, %c0_12] : memref<8x16xf32, #tpu.memory_space<vmem>>, vector<8x16xf32>
    %c0_13 = arith.constant 0 : index
    %c0_14 = arith.constant 0 : index
    %9 = vector.load %arg7[%c0_13, %c0_14] : memref<16x4xf32, #tpu.memory_space<vmem>>, vector<16x4xf32>
    %c0_15 = arith.constant 0 : index
    %c0_16 = arith.constant 0 : index
    %10 = vector.load %arg8[%c0_15, %c0_16] : memref<1x16xf32, #tpu.memory_space<vmem>>, vector<1x16xf32>
    %cst_17 = arith.constant dense<0.000000e+00> : vector<16x16xf32>
    %11 = tpu.matmul %3, %5, %cst_17 {dimension_numbers = #tpu.dot_dimension_numbers<[1], [0], [0], [1], [0, 0, 1, 1], [], []>} : vector<16x8xf32>, vector<8x16xf32>, vector<16x16xf32> -> vector<16x16xf32>
    %cst_18 = arith.constant dense<0.000000e+00> : vector<16x4xf32>
    %12 = tpu.matmul %11, %6, %cst_18 {dimension_numbers = #tpu.dot_dimension_numbers<[1], [0], [0], [1], [0, 0, 1, 1], [], []>} : vector<16x16xf32>, vector<16x4xf32>, vector<16x4xf32> -> vector<16x4xf32>
    %13 = vector.extract_strided_slice %12 {offsets = [0, 0], sizes = [16, 2], strides = [1, 1]} : vector<16x4xf32> to vector<16x2xf32>
    %14 = tpu.transpose %13, [1, 0] : vector<16x2xf32> -> vector<2x16xf32>
    %15 = vector.extract_strided_slice %12 {offsets = [0, 2], sizes = [16, 1], strides = [1, 1]} : vector<16x4xf32> to vector<16x1xf32>
    %16 = vector.extract_strided_slice %14 {offsets = [0, 0], sizes = [1, 16], strides = [1, 1]} : vector<2x16xf32> to vector<1x16xf32>
    %17 = vector.broadcast %15 : vector<16x1xf32> to vector<16x16xf32>
    %18 = vector.broadcast %16 : vector<1x16xf32> to vector<16x16xf32>
    %19 = arith.addf %17, %18 : vector<16x16xf32>
    %cst_19 = arith.constant 0.000000e+00 : f32
    %20 = vector.broadcast %cst_19 : f32 to vector<16x16xf32>
    %21 = arith.cmpf ogt, %19, %20 : vector<16x16xf32>
    %cst_20 = arith.constant 2.000000e-01 : f32
    %22 = vector.broadcast %cst_20 : f32 to vector<16x16xf32>
    %23 = arith.mulf %22, %19 : vector<16x16xf32>
    %24 = arith.select %21, %19, %23 : vector<16x16xi1>, vector<16x16xf32>
    %cst_21 = arith.constant -1.000000e+30 : f32
    %25 = vector.broadcast %cst_21 : f32 to vector<16x16xf32>
    %26 = arith.select %2, %24, %25 : vector<16x16xi1>, vector<16x16xf32>
    %cst_22 = arith.constant dense<0xFF800000> : vector<16xf32>
    %27 = vector.multi_reduction <maximumf>, %26, %cst_22 [1] : vector<16x16xf32> to vector<16xf32>
    %28 = vector.shape_cast %27 : vector<16xf32> to vector<16x1xf32>
    %29 = vector.broadcast %28 : vector<16x1xf32> to vector<16x16xf32>
    %30 = arith.subf %26, %29 : vector<16x16xf32>
    %31 = math.exp %30 : vector<16x16xf32>
    %cst_23 = arith.constant 0.000000e+00 : f32
    %32 = vector.broadcast %cst_23 : f32 to vector<16x16xf32>
    %33 = arith.select %2, %31, %32 : vector<16x16xi1>, vector<16x16xf32>
    %cst_24 = arith.constant dense<0.000000e+00> : vector<16xf32>
    %34 = vector.multi_reduction <add>, %33, %cst_24 [1] : vector<16x16xf32> to vector<16xf32>
    %35 = vector.shape_cast %34 : vector<16xf32> to vector<16x1xf32>
    %cst_25 = arith.constant 1.000000e-30 : f32
    %36 = vector.broadcast %cst_25 : f32 to vector<16x1xf32>
    %37 = arith.maximumf %35, %36 : vector<16x1xf32>
    %38 = tpu.reciprocal %37 {approx = true} : vector<16x1xf32> -> vector<16x1xf32>
    %39 = vector.broadcast %38 : vector<16x1xf32> to vector<16x16xf32>
    %40 = arith.mulf %33, %39 : vector<16x16xf32>
    %41 = vector.extract_strided_slice %11 {offsets = [0, 0], sizes = [16, 8], strides = [1, 1]} : vector<16x16xf32> to vector<16x8xf32>
    %cst_26 = arith.constant dense<0.000000e+00> : vector<16x8xf32>
    %42 = tpu.matmul %40, %41, %cst_26 {dimension_numbers = #tpu.dot_dimension_numbers<[1], [0], [0], [1], [0, 0, 1, 1], [], []>} : vector<16x16xf32>, vector<16x8xf32>, vector<16x8xf32> -> vector<16x8xf32>
    %43 = vector.extract_strided_slice %12 {offsets = [0, 3], sizes = [16, 1], strides = [1, 1]} : vector<16x4xf32> to vector<16x1xf32>
    %44 = vector.extract_strided_slice %14 {offsets = [1, 0], sizes = [1, 16], strides = [1, 1]} : vector<2x16xf32> to vector<1x16xf32>
    %45 = vector.broadcast %43 : vector<16x1xf32> to vector<16x16xf32>
    %46 = vector.broadcast %44 : vector<1x16xf32> to vector<16x16xf32>
    %47 = arith.addf %45, %46 : vector<16x16xf32>
    %cst_27 = arith.constant 0.000000e+00 : f32
    %48 = vector.broadcast %cst_27 : f32 to vector<16x16xf32>
    %49 = arith.cmpf ogt, %47, %48 : vector<16x16xf32>
    %cst_28 = arith.constant 2.000000e-01 : f32
    %50 = vector.broadcast %cst_28 : f32 to vector<16x16xf32>
    %51 = arith.mulf %50, %47 : vector<16x16xf32>
    %52 = arith.select %49, %47, %51 : vector<16x16xi1>, vector<16x16xf32>
    %cst_29 = arith.constant -1.000000e+30 : f32
    %53 = vector.broadcast %cst_29 : f32 to vector<16x16xf32>
    %54 = arith.select %2, %52, %53 : vector<16x16xi1>, vector<16x16xf32>
    %cst_30 = arith.constant dense<0xFF800000> : vector<16xf32>
    %55 = vector.multi_reduction <maximumf>, %54, %cst_30 [1] : vector<16x16xf32> to vector<16xf32>
    %56 = vector.shape_cast %55 : vector<16xf32> to vector<16x1xf32>
    %57 = vector.broadcast %56 : vector<16x1xf32> to vector<16x16xf32>
    %58 = arith.subf %54, %57 : vector<16x16xf32>
    %59 = math.exp %58 : vector<16x16xf32>
    %cst_31 = arith.constant 0.000000e+00 : f32
    %60 = vector.broadcast %cst_31 : f32 to vector<16x16xf32>
    %61 = arith.select %2, %59, %60 : vector<16x16xi1>, vector<16x16xf32>
    %cst_32 = arith.constant dense<0.000000e+00> : vector<16xf32>
    %62 = vector.multi_reduction <add>, %61, %cst_32 [1] : vector<16x16xf32> to vector<16xf32>
    %63 = vector.shape_cast %62 : vector<16xf32> to vector<16x1xf32>
    %cst_33 = arith.constant 1.000000e-30 : f32
    %64 = vector.broadcast %cst_33 : f32 to vector<16x1xf32>
    %65 = arith.maximumf %63, %64 : vector<16x1xf32>
    %66 = tpu.reciprocal %65 {approx = true} : vector<16x1xf32> -> vector<16x1xf32>
    %67 = vector.broadcast %66 : vector<16x1xf32> to vector<16x16xf32>
    %68 = arith.mulf %61, %67 : vector<16x16xf32>
    %69 = vector.extract_strided_slice %11 {offsets = [0, 8], sizes = [16, 8], strides = [1, 1]} : vector<16x16xf32> to vector<16x8xf32>
    %cst_34 = arith.constant dense<0.000000e+00> : vector<16x8xf32>
    %70 = tpu.matmul %68, %69, %cst_34 {dimension_numbers = #tpu.dot_dimension_numbers<[1], [0], [0], [1], [0, 0, 1, 1], [], []>} : vector<16x16xf32>, vector<16x8xf32>, vector<16x8xf32> -> vector<16x8xf32>
    %71 = tpu.concatenate %42, %70 in 1 : vector<16x8xf32>, vector<16x8xf32> -> vector<16x16xf32>
    %72 = vector.broadcast %7 : vector<1x16xf32> to vector<16x16xf32>
    %73 = arith.addf %71, %72 : vector<16x16xf32>
    %cst_35 = arith.constant dense<0.000000e+00> : vector<16x16xf32>
    %74 = tpu.matmul %4, %8, %cst_35 {dimension_numbers = #tpu.dot_dimension_numbers<[1], [0], [0], [1], [0, 0, 1, 1], [], []>} : vector<16x8xf32>, vector<8x16xf32>, vector<16x16xf32> -> vector<16x16xf32>
    %cst_36 = arith.constant dense<0.000000e+00> : vector<16x4xf32>
    %75 = tpu.matmul %74, %9, %cst_36 {dimension_numbers = #tpu.dot_dimension_numbers<[1], [0], [0], [1], [0, 0, 1, 1], [], []>} : vector<16x16xf32>, vector<16x4xf32>, vector<16x4xf32> -> vector<16x4xf32>
    %76 = vector.extract_strided_slice %75 {offsets = [0, 0], sizes = [16, 2], strides = [1, 1]} : vector<16x4xf32> to vector<16x2xf32>
    %77 = tpu.transpose %76, [1, 0] : vector<16x2xf32> -> vector<2x16xf32>
    %78 = vector.extract_strided_slice %75 {offsets = [0, 2], sizes = [16, 1], strides = [1, 1]} : vector<16x4xf32> to vector<16x1xf32>
    %79 = vector.extract_strided_slice %77 {offsets = [0, 0], sizes = [1, 16], strides = [1, 1]} : vector<2x16xf32> to vector<1x16xf32>
    %80 = vector.broadcast %78 : vector<16x1xf32> to vector<16x16xf32>
    %81 = vector.broadcast %79 : vector<1x16xf32> to vector<16x16xf32>
    %82 = arith.addf %80, %81 : vector<16x16xf32>
    %cst_37 = arith.constant 0.000000e+00 : f32
    %83 = vector.broadcast %cst_37 : f32 to vector<16x16xf32>
    %84 = arith.cmpf ogt, %82, %83 : vector<16x16xf32>
    %cst_38 = arith.constant 2.000000e-01 : f32
    %85 = vector.broadcast %cst_38 : f32 to vector<16x16xf32>
    %86 = arith.mulf %85, %82 : vector<16x16xf32>
    %87 = arith.select %84, %82, %86 : vector<16x16xi1>, vector<16x16xf32>
    %cst_39 = arith.constant -1.000000e+30 : f32
    %88 = vector.broadcast %cst_39 : f32 to vector<16x16xf32>
    %89 = arith.select %2, %87, %88 : vector<16x16xi1>, vector<16x16xf32>
    %cst_40 = arith.constant dense<0xFF800000> : vector<16xf32>
    %90 = vector.multi_reduction <maximumf>, %89, %cst_40 [1] : vector<16x16xf32> to vector<16xf32>
    %91 = vector.shape_cast %90 : vector<16xf32> to vector<16x1xf32>
    %92 = vector.broadcast %91 : vector<16x1xf32> to vector<16x16xf32>
    %93 = arith.subf %89, %92 : vector<16x16xf32>
    %94 = math.exp %93 : vector<16x16xf32>
    %cst_41 = arith.constant 0.000000e+00 : f32
    %95 = vector.broadcast %cst_41 : f32 to vector<16x16xf32>
    %96 = arith.select %2, %94, %95 : vector<16x16xi1>, vector<16x16xf32>
    %cst_42 = arith.constant dense<0.000000e+00> : vector<16xf32>
    %97 = vector.multi_reduction <add>, %96, %cst_42 [1] : vector<16x16xf32> to vector<16xf32>
    %98 = vector.shape_cast %97 : vector<16xf32> to vector<16x1xf32>
    %cst_43 = arith.constant 1.000000e-30 : f32
    %99 = vector.broadcast %cst_43 : f32 to vector<16x1xf32>
    %100 = arith.maximumf %98, %99 : vector<16x1xf32>
    %101 = tpu.reciprocal %100 {approx = true} : vector<16x1xf32> -> vector<16x1xf32>
    %102 = vector.broadcast %101 : vector<16x1xf32> to vector<16x16xf32>
    %103 = arith.mulf %96, %102 : vector<16x16xf32>
    %104 = vector.extract_strided_slice %74 {offsets = [0, 0], sizes = [16, 8], strides = [1, 1]} : vector<16x16xf32> to vector<16x8xf32>
    %cst_44 = arith.constant dense<0.000000e+00> : vector<16x8xf32>
    %105 = tpu.matmul %103, %104, %cst_44 {dimension_numbers = #tpu.dot_dimension_numbers<[1], [0], [0], [1], [0, 0, 1, 1], [], []>} : vector<16x16xf32>, vector<16x8xf32>, vector<16x8xf32> -> vector<16x8xf32>
    %106 = vector.extract_strided_slice %75 {offsets = [0, 3], sizes = [16, 1], strides = [1, 1]} : vector<16x4xf32> to vector<16x1xf32>
    %107 = vector.extract_strided_slice %77 {offsets = [1, 0], sizes = [1, 16], strides = [1, 1]} : vector<2x16xf32> to vector<1x16xf32>
    %108 = vector.broadcast %106 : vector<16x1xf32> to vector<16x16xf32>
    %109 = vector.broadcast %107 : vector<1x16xf32> to vector<16x16xf32>
    %110 = arith.addf %108, %109 : vector<16x16xf32>
    %cst_45 = arith.constant 0.000000e+00 : f32
    %111 = vector.broadcast %cst_45 : f32 to vector<16x16xf32>
    %112 = arith.cmpf ogt, %110, %111 : vector<16x16xf32>
    %cst_46 = arith.constant 2.000000e-01 : f32
    %113 = vector.broadcast %cst_46 : f32 to vector<16x16xf32>
    %114 = arith.mulf %113, %110 : vector<16x16xf32>
    %115 = arith.select %112, %110, %114 : vector<16x16xi1>, vector<16x16xf32>
    %cst_47 = arith.constant -1.000000e+30 : f32
    %116 = vector.broadcast %cst_47 : f32 to vector<16x16xf32>
    %117 = arith.select %2, %115, %116 : vector<16x16xi1>, vector<16x16xf32>
    %cst_48 = arith.constant dense<0xFF800000> : vector<16xf32>
    %118 = vector.multi_reduction <maximumf>, %117, %cst_48 [1] : vector<16x16xf32> to vector<16xf32>
    %119 = vector.shape_cast %118 : vector<16xf32> to vector<16x1xf32>
    %120 = vector.broadcast %119 : vector<16x1xf32> to vector<16x16xf32>
    %121 = arith.subf %117, %120 : vector<16x16xf32>
    %122 = math.exp %121 : vector<16x16xf32>
    %cst_49 = arith.constant 0.000000e+00 : f32
    %123 = vector.broadcast %cst_49 : f32 to vector<16x16xf32>
    %124 = arith.select %2, %122, %123 : vector<16x16xi1>, vector<16x16xf32>
    %cst_50 = arith.constant dense<0.000000e+00> : vector<16xf32>
    %125 = vector.multi_reduction <add>, %124, %cst_50 [1] : vector<16x16xf32> to vector<16xf32>
    %126 = vector.shape_cast %125 : vector<16xf32> to vector<16x1xf32>
    %cst_51 = arith.constant 1.000000e-30 : f32
    %127 = vector.broadcast %cst_51 : f32 to vector<16x1xf32>
    %128 = arith.maximumf %126, %127 : vector<16x1xf32>
    %129 = tpu.reciprocal %128 {approx = true} : vector<16x1xf32> -> vector<16x1xf32>
    %130 = vector.broadcast %129 : vector<16x1xf32> to vector<16x16xf32>
    %131 = arith.mulf %124, %130 : vector<16x16xf32>
    %132 = vector.extract_strided_slice %74 {offsets = [0, 8], sizes = [16, 8], strides = [1, 1]} : vector<16x16xf32> to vector<16x8xf32>
    %cst_52 = arith.constant dense<0.000000e+00> : vector<16x8xf32>
    %133 = tpu.matmul %131, %132, %cst_52 {dimension_numbers = #tpu.dot_dimension_numbers<[1], [0], [0], [1], [0, 0, 1, 1], [], []>} : vector<16x16xf32>, vector<16x8xf32>, vector<16x8xf32> -> vector<16x8xf32>
    %134 = tpu.concatenate %105, %133 in 1 : vector<16x8xf32>, vector<16x8xf32> -> vector<16x16xf32>
    %135 = vector.broadcast %10 : vector<1x16xf32> to vector<16x16xf32>
    %136 = arith.addf %134, %135 : vector<16x16xf32>
    %cst_53 = arith.constant 0.000000e+00 : f32
    %137 = vector.broadcast %cst_53 : f32 to vector<16x16xf32>
    %138 = arith.maximumf %73, %137 : vector<16x16xf32>
    %cst_54 = arith.constant 0.000000e+00 : f32
    %139 = vector.broadcast %cst_54 : f32 to vector<16x16xf32>
    %140 = arith.maximumf %136, %139 : vector<16x16xf32>
    %c0_55 = arith.constant 0 : index
    %c0_56 = arith.constant 0 : index
    %141 = vector.load %arg9[%c0_55, %c0_56] : memref<16x16xf32, #tpu.memory_space<vmem>>, vector<16x16xf32>
    %c0_57 = arith.constant 0 : index
    %c0_58 = arith.constant 0 : index
    %142 = vector.load %arg10[%c0_57, %c0_58] : memref<16x4xf32, #tpu.memory_space<vmem>>, vector<16x4xf32>
    %c0_59 = arith.constant 0 : index
    %c0_60 = arith.constant 0 : index
    %143 = vector.load %arg11[%c0_59, %c0_60] : memref<1x16xf32, #tpu.memory_space<vmem>>, vector<1x16xf32>
    %c0_61 = arith.constant 0 : index
    %c0_62 = arith.constant 0 : index
    %144 = vector.load %arg12[%c0_61, %c0_62] : memref<16x16xf32, #tpu.memory_space<vmem>>, vector<16x16xf32>
    %c0_63 = arith.constant 0 : index
    %c0_64 = arith.constant 0 : index
    %145 = vector.load %arg13[%c0_63, %c0_64] : memref<16x4xf32, #tpu.memory_space<vmem>>, vector<16x4xf32>
    %c0_65 = arith.constant 0 : index
    %c0_66 = arith.constant 0 : index
    %146 = vector.load %arg14[%c0_65, %c0_66] : memref<1x16xf32, #tpu.memory_space<vmem>>, vector<1x16xf32>
    %c0_67 = arith.constant 0 : index
    %c0_68 = arith.constant 0 : index
    %147 = vector.load %arg15[%c0_67, %c0_68] : memref<16x16xf32, #tpu.memory_space<vmem>>, vector<16x16xf32>
    %c0_69 = arith.constant 0 : index
    %c0_70 = arith.constant 0 : index
    %148 = vector.load %arg16[%c0_69, %c0_70] : memref<16x4xf32, #tpu.memory_space<vmem>>, vector<16x4xf32>
    %c0_71 = arith.constant 0 : index
    %c0_72 = arith.constant 0 : index
    %149 = vector.load %arg17[%c0_71, %c0_72] : memref<1x16xf32, #tpu.memory_space<vmem>>, vector<1x16xf32>
    %c0_73 = arith.constant 0 : index
    %c0_74 = arith.constant 0 : index
    %150 = vector.load %arg18[%c0_73, %c0_74] : memref<16x16xf32, #tpu.memory_space<vmem>>, vector<16x16xf32>
    %c0_75 = arith.constant 0 : index
    %c0_76 = arith.constant 0 : index
    %151 = vector.load %arg19[%c0_75, %c0_76] : memref<16x4xf32, #tpu.memory_space<vmem>>, vector<16x4xf32>
    %c0_77 = arith.constant 0 : index
    %c0_78 = arith.constant 0 : index
    %152 = vector.load %arg20[%c0_77, %c0_78] : memref<1x16xf32, #tpu.memory_space<vmem>>, vector<1x16xf32>
    %cst_79 = arith.constant dense<0.000000e+00> : vector<16x16xf32>
    %153 = tpu.matmul %140, %147, %cst_79 {dimension_numbers = #tpu.dot_dimension_numbers<[1], [0], [0], [1], [0, 0, 1, 1], [], []>} : vector<16x16xf32>, vector<16x16xf32>, vector<16x16xf32> -> vector<16x16xf32>
    %cst_80 = arith.constant dense<0.000000e+00> : vector<16x4xf32>
    %154 = tpu.matmul %153, %148, %cst_80 {dimension_numbers = #tpu.dot_dimension_numbers<[1], [0], [0], [1], [0, 0, 1, 1], [], []>} : vector<16x16xf32>, vector<16x4xf32>, vector<16x4xf32> -> vector<16x4xf32>
    %155 = vector.extract_strided_slice %154 {offsets = [0, 0], sizes = [16, 2], strides = [1, 1]} : vector<16x4xf32> to vector<16x2xf32>
    %156 = tpu.transpose %155, [1, 0] : vector<16x2xf32> -> vector<2x16xf32>
    %157 = vector.extract_strided_slice %154 {offsets = [0, 2], sizes = [16, 1], strides = [1, 1]} : vector<16x4xf32> to vector<16x1xf32>
    %158 = vector.extract_strided_slice %156 {offsets = [0, 0], sizes = [1, 16], strides = [1, 1]} : vector<2x16xf32> to vector<1x16xf32>
    %159 = vector.broadcast %157 : vector<16x1xf32> to vector<16x16xf32>
    %160 = vector.broadcast %158 : vector<1x16xf32> to vector<16x16xf32>
    %161 = arith.addf %159, %160 : vector<16x16xf32>
    %cst_81 = arith.constant 0.000000e+00 : f32
    %162 = vector.broadcast %cst_81 : f32 to vector<16x16xf32>
    %163 = arith.cmpf ogt, %161, %162 : vector<16x16xf32>
    %cst_82 = arith.constant 2.000000e-01 : f32
    %164 = vector.broadcast %cst_82 : f32 to vector<16x16xf32>
    %165 = arith.mulf %164, %161 : vector<16x16xf32>
    %166 = arith.select %163, %161, %165 : vector<16x16xi1>, vector<16x16xf32>
    %cst_83 = arith.constant -1.000000e+30 : f32
    %167 = vector.broadcast %cst_83 : f32 to vector<16x16xf32>
    %168 = arith.select %2, %166, %167 : vector<16x16xi1>, vector<16x16xf32>
    %cst_84 = arith.constant dense<0xFF800000> : vector<16xf32>
    %169 = vector.multi_reduction <maximumf>, %168, %cst_84 [1] : vector<16x16xf32> to vector<16xf32>
    %170 = vector.shape_cast %169 : vector<16xf32> to vector<16x1xf32>
    %171 = vector.broadcast %170 : vector<16x1xf32> to vector<16x16xf32>
    %172 = arith.subf %168, %171 : vector<16x16xf32>
    %173 = math.exp %172 : vector<16x16xf32>
    %cst_85 = arith.constant 0.000000e+00 : f32
    %174 = vector.broadcast %cst_85 : f32 to vector<16x16xf32>
    %175 = arith.select %2, %173, %174 : vector<16x16xi1>, vector<16x16xf32>
    %cst_86 = arith.constant dense<0.000000e+00> : vector<16xf32>
    %176 = vector.multi_reduction <add>, %175, %cst_86 [1] : vector<16x16xf32> to vector<16xf32>
    %177 = vector.shape_cast %176 : vector<16xf32> to vector<16x1xf32>
    %cst_87 = arith.constant 1.000000e-30 : f32
    %178 = vector.broadcast %cst_87 : f32 to vector<16x1xf32>
    %179 = arith.maximumf %177, %178 : vector<16x1xf32>
    %180 = tpu.reciprocal %179 {approx = true} : vector<16x1xf32> -> vector<16x1xf32>
    %181 = vector.broadcast %180 : vector<16x1xf32> to vector<16x16xf32>
    %182 = arith.mulf %175, %181 : vector<16x16xf32>
    %183 = vector.extract_strided_slice %153 {offsets = [0, 0], sizes = [16, 8], strides = [1, 1]} : vector<16x16xf32> to vector<16x8xf32>
    %cst_88 = arith.constant dense<0.000000e+00> : vector<16x8xf32>
    %184 = tpu.matmul %182, %183, %cst_88 {dimension_numbers = #tpu.dot_dimension_numbers<[1], [0], [0], [1], [0, 0, 1, 1], [], []>} : vector<16x16xf32>, vector<16x8xf32>, vector<16x8xf32> -> vector<16x8xf32>
    %185 = vector.extract_strided_slice %154 {offsets = [0, 3], sizes = [16, 1], strides = [1, 1]} : vector<16x4xf32> to vector<16x1xf32>
    %186 = vector.extract_strided_slice %156 {offsets = [1, 0], sizes = [1, 16], strides = [1, 1]} : vector<2x16xf32> to vector<1x16xf32>
    %187 = vector.broadcast %185 : vector<16x1xf32> to vector<16x16xf32>
    %188 = vector.broadcast %186 : vector<1x16xf32> to vector<16x16xf32>
    %189 = arith.addf %187, %188 : vector<16x16xf32>
    %cst_89 = arith.constant 0.000000e+00 : f32
    %190 = vector.broadcast %cst_89 : f32 to vector<16x16xf32>
    %191 = arith.cmpf ogt, %189, %190 : vector<16x16xf32>
    %cst_90 = arith.constant 2.000000e-01 : f32
    %192 = vector.broadcast %cst_90 : f32 to vector<16x16xf32>
    %193 = arith.mulf %192, %189 : vector<16x16xf32>
    %194 = arith.select %191, %189, %193 : vector<16x16xi1>, vector<16x16xf32>
    %cst_91 = arith.constant -1.000000e+30 : f32
    %195 = vector.broadcast %cst_91 : f32 to vector<16x16xf32>
    %196 = arith.select %2, %194, %195 : vector<16x16xi1>, vector<16x16xf32>
    %cst_92 = arith.constant dense<0xFF800000> : vector<16xf32>
    %197 = vector.multi_reduction <maximumf>, %196, %cst_92 [1] : vector<16x16xf32> to vector<16xf32>
    %198 = vector.shape_cast %197 : vector<16xf32> to vector<16x1xf32>
    %199 = vector.broadcast %198 : vector<16x1xf32> to vector<16x16xf32>
    %200 = arith.subf %196, %199 : vector<16x16xf32>
    %201 = math.exp %200 : vector<16x16xf32>
    %cst_93 = arith.constant 0.000000e+00 : f32
    %202 = vector.broadcast %cst_93 : f32 to vector<16x16xf32>
    %203 = arith.select %2, %201, %202 : vector<16x16xi1>, vector<16x16xf32>
    %cst_94 = arith.constant dense<0.000000e+00> : vector<16xf32>
    %204 = vector.multi_reduction <add>, %203, %cst_94 [1] : vector<16x16xf32> to vector<16xf32>
    %205 = vector.shape_cast %204 : vector<16xf32> to vector<16x1xf32>
    %cst_95 = arith.constant 1.000000e-30 : f32
    %206 = vector.broadcast %cst_95 : f32 to vector<16x1xf32>
    %207 = arith.maximumf %205, %206 : vector<16x1xf32>
    %208 = tpu.reciprocal %207 {approx = true} : vector<16x1xf32> -> vector<16x1xf32>
    %209 = vector.broadcast %208 : vector<16x1xf32> to vector<16x16xf32>
    %210 = arith.mulf %203, %209 : vector<16x16xf32>
    %211 = vector.extract_strided_slice %153 {offsets = [0, 8], sizes = [16, 8], strides = [1, 1]} : vector<16x16xf32> to vector<16x8xf32>
    %cst_96 = arith.constant dense<0.000000e+00> : vector<16x8xf32>
    %212 = tpu.matmul %210, %211, %cst_96 {dimension_numbers = #tpu.dot_dimension_numbers<[1], [0], [0], [1], [0, 0, 1, 1], [], []>} : vector<16x16xf32>, vector<16x8xf32>, vector<16x8xf32> -> vector<16x8xf32>
    %213 = tpu.concatenate %184, %212 in 1 : vector<16x8xf32>, vector<16x8xf32> -> vector<16x16xf32>
    %214 = vector.broadcast %149 : vector<1x16xf32> to vector<16x16xf32>
    %215 = arith.addf %213, %214 : vector<16x16xf32>
    %cst_97 = arith.constant dense<0.000000e+00> : vector<16x16xf32>
    %216 = tpu.matmul %138, %150, %cst_97 {dimension_numbers = #tpu.dot_dimension_numbers<[1], [0], [0], [1], [0, 0, 1, 1], [], []>} : vector<16x16xf32>, vector<16x16xf32>, vector<16x16xf32> -> vector<16x16xf32>
    %cst_98 = arith.constant dense<0.000000e+00> : vector<16x4xf32>
    %217 = tpu.matmul %216, %151, %cst_98 {dimension_numbers = #tpu.dot_dimension_numbers<[1], [0], [0], [1], [0, 0, 1, 1], [], []>} : vector<16x16xf32>, vector<16x4xf32>, vector<16x4xf32> -> vector<16x4xf32>
    %218 = vector.extract_strided_slice %217 {offsets = [0, 0], sizes = [16, 2], strides = [1, 1]} : vector<16x4xf32> to vector<16x2xf32>
    %219 = tpu.transpose %218, [1, 0] : vector<16x2xf32> -> vector<2x16xf32>
    %220 = vector.extract_strided_slice %217 {offsets = [0, 2], sizes = [16, 1], strides = [1, 1]} : vector<16x4xf32> to vector<16x1xf32>
    %221 = vector.extract_strided_slice %219 {offsets = [0, 0], sizes = [1, 16], strides = [1, 1]} : vector<2x16xf32> to vector<1x16xf32>
    %222 = vector.broadcast %220 : vector<16x1xf32> to vector<16x16xf32>
    %223 = vector.broadcast %221 : vector<1x16xf32> to vector<16x16xf32>
    %224 = arith.addf %222, %223 : vector<16x16xf32>
    %cst_99 = arith.constant 0.000000e+00 : f32
    %225 = vector.broadcast %cst_99 : f32 to vector<16x16xf32>
    %226 = arith.cmpf ogt, %224, %225 : vector<16x16xf32>
    %cst_100 = arith.constant 2.000000e-01 : f32
    %227 = vector.broadcast %cst_100 : f32 to vector<16x16xf32>
    %228 = arith.mulf %227, %224 : vector<16x16xf32>
    %229 = arith.select %226, %224, %228 : vector<16x16xi1>, vector<16x16xf32>
    %cst_101 = arith.constant -1.000000e+30 : f32
    %230 = vector.broadcast %cst_101 : f32 to vector<16x16xf32>
    %231 = arith.select %2, %229, %230 : vector<16x16xi1>, vector<16x16xf32>
    %cst_102 = arith.constant dense<0xFF800000> : vector<16xf32>
    %232 = vector.multi_reduction <maximumf>, %231, %cst_102 [1] : vector<16x16xf32> to vector<16xf32>
    %233 = vector.shape_cast %232 : vector<16xf32> to vector<16x1xf32>
    %234 = vector.broadcast %233 : vector<16x1xf32> to vector<16x16xf32>
    %235 = arith.subf %231, %234 : vector<16x16xf32>
    %236 = math.exp %235 : vector<16x16xf32>
    %cst_103 = arith.constant 0.000000e+00 : f32
    %237 = vector.broadcast %cst_103 : f32 to vector<16x16xf32>
    %238 = arith.select %2, %236, %237 : vector<16x16xi1>, vector<16x16xf32>
    %cst_104 = arith.constant dense<0.000000e+00> : vector<16xf32>
    %239 = vector.multi_reduction <add>, %238, %cst_104 [1] : vector<16x16xf32> to vector<16xf32>
    %240 = vector.shape_cast %239 : vector<16xf32> to vector<16x1xf32>
    %cst_105 = arith.constant 1.000000e-30 : f32
    %241 = vector.broadcast %cst_105 : f32 to vector<16x1xf32>
    %242 = arith.maximumf %240, %241 : vector<16x1xf32>
    %243 = tpu.reciprocal %242 {approx = true} : vector<16x1xf32> -> vector<16x1xf32>
    %244 = vector.broadcast %243 : vector<16x1xf32> to vector<16x16xf32>
    %245 = arith.mulf %238, %244 : vector<16x16xf32>
    %246 = vector.extract_strided_slice %216 {offsets = [0, 0], sizes = [16, 8], strides = [1, 1]} : vector<16x16xf32> to vector<16x8xf32>
    %cst_106 = arith.constant dense<0.000000e+00> : vector<16x8xf32>
    %247 = tpu.matmul %245, %246, %cst_106 {dimension_numbers = #tpu.dot_dimension_numbers<[1], [0], [0], [1], [0, 0, 1, 1], [], []>} : vector<16x16xf32>, vector<16x8xf32>, vector<16x8xf32> -> vector<16x8xf32>
    %248 = vector.extract_strided_slice %217 {offsets = [0, 3], sizes = [16, 1], strides = [1, 1]} : vector<16x4xf32> to vector<16x1xf32>
    %249 = vector.extract_strided_slice %219 {offsets = [1, 0], sizes = [1, 16], strides = [1, 1]} : vector<2x16xf32> to vector<1x16xf32>
    %250 = vector.broadcast %248 : vector<16x1xf32> to vector<16x16xf32>
    %251 = vector.broadcast %249 : vector<1x16xf32> to vector<16x16xf32>
    %252 = arith.addf %250, %251 : vector<16x16xf32>
    %cst_107 = arith.constant 0.000000e+00 : f32
    %253 = vector.broadcast %cst_107 : f32 to vector<16x16xf32>
    %254 = arith.cmpf ogt, %252, %253 : vector<16x16xf32>
    %cst_108 = arith.constant 2.000000e-01 : f32
    %255 = vector.broadcast %cst_108 : f32 to vector<16x16xf32>
    %256 = arith.mulf %255, %252 : vector<16x16xf32>
    %257 = arith.select %254, %252, %256 : vector<16x16xi1>, vector<16x16xf32>
    %cst_109 = arith.constant -1.000000e+30 : f32
    %258 = vector.broadcast %cst_109 : f32 to vector<16x16xf32>
    %259 = arith.select %2, %257, %258 : vector<16x16xi1>, vector<16x16xf32>
    %cst_110 = arith.constant dense<0xFF800000> : vector<16xf32>
    %260 = vector.multi_reduction <maximumf>, %259, %cst_110 [1] : vector<16x16xf32> to vector<16xf32>
    %261 = vector.shape_cast %260 : vector<16xf32> to vector<16x1xf32>
    %262 = vector.broadcast %261 : vector<16x1xf32> to vector<16x16xf32>
    %263 = arith.subf %259, %262 : vector<16x16xf32>
    %264 = math.exp %263 : vector<16x16xf32>
    %cst_111 = arith.constant 0.000000e+00 : f32
    %265 = vector.broadcast %cst_111 : f32 to vector<16x16xf32>
    %266 = arith.select %2, %264, %265 : vector<16x16xi1>, vector<16x16xf32>
    %cst_112 = arith.constant dense<0.000000e+00> : vector<16xf32>
    %267 = vector.multi_reduction <add>, %266, %cst_112 [1] : vector<16x16xf32> to vector<16xf32>
    %268 = vector.shape_cast %267 : vector<16xf32> to vector<16x1xf32>
    %cst_113 = arith.constant 1.000000e-30 : f32
    %269 = vector.broadcast %cst_113 : f32 to vector<16x1xf32>
    %270 = arith.maximumf %268, %269 : vector<16x1xf32>
    %271 = tpu.reciprocal %270 {approx = true} : vector<16x1xf32> -> vector<16x1xf32>
    %272 = vector.broadcast %271 : vector<16x1xf32> to vector<16x16xf32>
    %273 = arith.mulf %266, %272 : vector<16x16xf32>
    %274 = vector.extract_strided_slice %216 {offsets = [0, 8], sizes = [16, 8], strides = [1, 1]} : vector<16x16xf32> to vector<16x8xf32>
    %cst_114 = arith.constant dense<0.000000e+00> : vector<16x8xf32>
    %275 = tpu.matmul %273, %274, %cst_114 {dimension_numbers = #tpu.dot_dimension_numbers<[1], [0], [0], [1], [0, 0, 1, 1], [], []>} : vector<16x16xf32>, vector<16x8xf32>, vector<16x8xf32> -> vector<16x8xf32>
    %276 = tpu.concatenate %247, %275 in 1 : vector<16x8xf32>, vector<16x8xf32> -> vector<16x16xf32>
    %277 = vector.broadcast %152 : vector<1x16xf32> to vector<16x16xf32>
    %278 = arith.addf %276, %277 : vector<16x16xf32>
    %cst_115 = arith.constant dense<0.000000e+00> : vector<16x16xf32>
    %279 = tpu.matmul %138, %141, %cst_115 {dimension_numbers = #tpu.dot_dimension_numbers<[1], [0], [0], [1], [0, 0, 1, 1], [], []>} : vector<16x16xf32>, vector<16x16xf32>, vector<16x16xf32> -> vector<16x16xf32>
    %cst_116 = arith.constant dense<0.000000e+00> : vector<16x4xf32>
    %280 = tpu.matmul %279, %142, %cst_116 {dimension_numbers = #tpu.dot_dimension_numbers<[1], [0], [0], [1], [0, 0, 1, 1], [], []>} : vector<16x16xf32>, vector<16x4xf32>, vector<16x4xf32> -> vector<16x4xf32>
    %281 = vector.extract_strided_slice %280 {offsets = [0, 0], sizes = [16, 2], strides = [1, 1]} : vector<16x4xf32> to vector<16x2xf32>
    %282 = tpu.transpose %281, [1, 0] : vector<16x2xf32> -> vector<2x16xf32>
    %283 = vector.extract_strided_slice %280 {offsets = [0, 2], sizes = [16, 1], strides = [1, 1]} : vector<16x4xf32> to vector<16x1xf32>
    %284 = vector.extract_strided_slice %282 {offsets = [0, 0], sizes = [1, 16], strides = [1, 1]} : vector<2x16xf32> to vector<1x16xf32>
    %285 = vector.broadcast %283 : vector<16x1xf32> to vector<16x16xf32>
    %286 = vector.broadcast %284 : vector<1x16xf32> to vector<16x16xf32>
    %287 = arith.addf %285, %286 : vector<16x16xf32>
    %cst_117 = arith.constant 0.000000e+00 : f32
    %288 = vector.broadcast %cst_117 : f32 to vector<16x16xf32>
    %289 = arith.cmpf ogt, %287, %288 : vector<16x16xf32>
    %cst_118 = arith.constant 2.000000e-01 : f32
    %290 = vector.broadcast %cst_118 : f32 to vector<16x16xf32>
    %291 = arith.mulf %290, %287 : vector<16x16xf32>
    %292 = arith.select %289, %287, %291 : vector<16x16xi1>, vector<16x16xf32>
    %cst_119 = arith.constant -1.000000e+30 : f32
    %293 = vector.broadcast %cst_119 : f32 to vector<16x16xf32>
    %294 = arith.select %2, %292, %293 : vector<16x16xi1>, vector<16x16xf32>
    %cst_120 = arith.constant dense<0xFF800000> : vector<16xf32>
    %295 = vector.multi_reduction <maximumf>, %294, %cst_120 [1] : vector<16x16xf32> to vector<16xf32>
    %296 = vector.shape_cast %295 : vector<16xf32> to vector<16x1xf32>
    %297 = vector.broadcast %296 : vector<16x1xf32> to vector<16x16xf32>
    %298 = arith.subf %294, %297 : vector<16x16xf32>
    %299 = math.exp %298 : vector<16x16xf32>
    %cst_121 = arith.constant 0.000000e+00 : f32
    %300 = vector.broadcast %cst_121 : f32 to vector<16x16xf32>
    %301 = arith.select %2, %299, %300 : vector<16x16xi1>, vector<16x16xf32>
    %cst_122 = arith.constant dense<0.000000e+00> : vector<16xf32>
    %302 = vector.multi_reduction <add>, %301, %cst_122 [1] : vector<16x16xf32> to vector<16xf32>
    %303 = vector.shape_cast %302 : vector<16xf32> to vector<16x1xf32>
    %cst_123 = arith.constant 1.000000e-30 : f32
    %304 = vector.broadcast %cst_123 : f32 to vector<16x1xf32>
    %305 = arith.maximumf %303, %304 : vector<16x1xf32>
    %306 = tpu.reciprocal %305 {approx = true} : vector<16x1xf32> -> vector<16x1xf32>
    %307 = vector.broadcast %306 : vector<16x1xf32> to vector<16x16xf32>
    %308 = arith.mulf %301, %307 : vector<16x16xf32>
    %309 = vector.extract_strided_slice %279 {offsets = [0, 0], sizes = [16, 8], strides = [1, 1]} : vector<16x16xf32> to vector<16x8xf32>
    %cst_124 = arith.constant dense<0.000000e+00> : vector<16x8xf32>
    %310 = tpu.matmul %308, %309, %cst_124 {dimension_numbers = #tpu.dot_dimension_numbers<[1], [0], [0], [1], [0, 0, 1, 1], [], []>} : vector<16x16xf32>, vector<16x8xf32>, vector<16x8xf32> -> vector<16x8xf32>
    %311 = vector.extract_strided_slice %280 {offsets = [0, 3], sizes = [16, 1], strides = [1, 1]} : vector<16x4xf32> to vector<16x1xf32>
    %312 = vector.extract_strided_slice %282 {offsets = [1, 0], sizes = [1, 16], strides = [1, 1]} : vector<2x16xf32> to vector<1x16xf32>
    %313 = vector.broadcast %311 : vector<16x1xf32> to vector<16x16xf32>
    %314 = vector.broadcast %312 : vector<1x16xf32> to vector<16x16xf32>
    %315 = arith.addf %313, %314 : vector<16x16xf32>
    %cst_125 = arith.constant 0.000000e+00 : f32
    %316 = vector.broadcast %cst_125 : f32 to vector<16x16xf32>
    %317 = arith.cmpf ogt, %315, %316 : vector<16x16xf32>
    %cst_126 = arith.constant 2.000000e-01 : f32
    %318 = vector.broadcast %cst_126 : f32 to vector<16x16xf32>
    %319 = arith.mulf %318, %315 : vector<16x16xf32>
    %320 = arith.select %317, %315, %319 : vector<16x16xi1>, vector<16x16xf32>
    %cst_127 = arith.constant -1.000000e+30 : f32
    %321 = vector.broadcast %cst_127 : f32 to vector<16x16xf32>
    %322 = arith.select %2, %320, %321 : vector<16x16xi1>, vector<16x16xf32>
    %cst_128 = arith.constant dense<0xFF800000> : vector<16xf32>
    %323 = vector.multi_reduction <maximumf>, %322, %cst_128 [1] : vector<16x16xf32> to vector<16xf32>
    %324 = vector.shape_cast %323 : vector<16xf32> to vector<16x1xf32>
    %325 = vector.broadcast %324 : vector<16x1xf32> to vector<16x16xf32>
    %326 = arith.subf %322, %325 : vector<16x16xf32>
    %327 = math.exp %326 : vector<16x16xf32>
    %cst_129 = arith.constant 0.000000e+00 : f32
    %328 = vector.broadcast %cst_129 : f32 to vector<16x16xf32>
    %329 = arith.select %2, %327, %328 : vector<16x16xi1>, vector<16x16xf32>
    %cst_130 = arith.constant dense<0.000000e+00> : vector<16xf32>
    %330 = vector.multi_reduction <add>, %329, %cst_130 [1] : vector<16x16xf32> to vector<16xf32>
    %331 = vector.shape_cast %330 : vector<16xf32> to vector<16x1xf32>
    %cst_131 = arith.constant 1.000000e-30 : f32
    %332 = vector.broadcast %cst_131 : f32 to vector<16x1xf32>
    %333 = arith.maximumf %331, %332 : vector<16x1xf32>
    %334 = tpu.reciprocal %333 {approx = true} : vector<16x1xf32> -> vector<16x1xf32>
    %335 = vector.broadcast %334 : vector<16x1xf32> to vector<16x16xf32>
    %336 = arith.mulf %329, %335 : vector<16x16xf32>
    %337 = vector.extract_strided_slice %279 {offsets = [0, 8], sizes = [16, 8], strides = [1, 1]} : vector<16x16xf32> to vector<16x8xf32>
    %cst_132 = arith.constant dense<0.000000e+00> : vector<16x8xf32>
    %338 = tpu.matmul %336, %337, %cst_132 {dimension_numbers = #tpu.dot_dimension_numbers<[1], [0], [0], [1], [0, 0, 1, 1], [], []>} : vector<16x16xf32>, vector<16x8xf32>, vector<16x8xf32> -> vector<16x8xf32>
    %339 = tpu.concatenate %310, %338 in 1 : vector<16x8xf32>, vector<16x8xf32> -> vector<16x16xf32>
    %340 = vector.broadcast %143 : vector<1x16xf32> to vector<16x16xf32>
    %341 = arith.addf %339, %340 : vector<16x16xf32>
    %cst_133 = arith.constant dense<0.000000e+00> : vector<16x16xf32>
    %342 = tpu.matmul %140, %144, %cst_133 {dimension_numbers = #tpu.dot_dimension_numbers<[1], [0], [0], [1], [0, 0, 1, 1], [], []>} : vector<16x16xf32>, vector<16x16xf32>, vector<16x16xf32> -> vector<16x16xf32>
    %cst_134 = arith.constant dense<0.000000e+00> : vector<16x4xf32>
    %343 = tpu.matmul %342, %145, %cst_134 {dimension_numbers = #tpu.dot_dimension_numbers<[1], [0], [0], [1], [0, 0, 1, 1], [], []>} : vector<16x16xf32>, vector<16x4xf32>, vector<16x4xf32> -> vector<16x4xf32>
    %344 = vector.extract_strided_slice %343 {offsets = [0, 0], sizes = [16, 2], strides = [1, 1]} : vector<16x4xf32> to vector<16x2xf32>
    %345 = tpu.transpose %344, [1, 0] : vector<16x2xf32> -> vector<2x16xf32>
    %346 = vector.extract_strided_slice %343 {offsets = [0, 2], sizes = [16, 1], strides = [1, 1]} : vector<16x4xf32> to vector<16x1xf32>
    %347 = vector.extract_strided_slice %345 {offsets = [0, 0], sizes = [1, 16], strides = [1, 1]} : vector<2x16xf32> to vector<1x16xf32>
    %348 = vector.broadcast %346 : vector<16x1xf32> to vector<16x16xf32>
    %349 = vector.broadcast %347 : vector<1x16xf32> to vector<16x16xf32>
    %350 = arith.addf %348, %349 : vector<16x16xf32>
    %cst_135 = arith.constant 0.000000e+00 : f32
    %351 = vector.broadcast %cst_135 : f32 to vector<16x16xf32>
    %352 = arith.cmpf ogt, %350, %351 : vector<16x16xf32>
    %cst_136 = arith.constant 2.000000e-01 : f32
    %353 = vector.broadcast %cst_136 : f32 to vector<16x16xf32>
    %354 = arith.mulf %353, %350 : vector<16x16xf32>
    %355 = arith.select %352, %350, %354 : vector<16x16xi1>, vector<16x16xf32>
    %cst_137 = arith.constant -1.000000e+30 : f32
    %356 = vector.broadcast %cst_137 : f32 to vector<16x16xf32>
    %357 = arith.select %2, %355, %356 : vector<16x16xi1>, vector<16x16xf32>
    %cst_138 = arith.constant dense<0xFF800000> : vector<16xf32>
    %358 = vector.multi_reduction <maximumf>, %357, %cst_138 [1] : vector<16x16xf32> to vector<16xf32>
    %359 = vector.shape_cast %358 : vector<16xf32> to vector<16x1xf32>
    %360 = vector.broadcast %359 : vector<16x1xf32> to vector<16x16xf32>
    %361 = arith.subf %357, %360 : vector<16x16xf32>
    %362 = math.exp %361 : vector<16x16xf32>
    %cst_139 = arith.constant 0.000000e+00 : f32
    %363 = vector.broadcast %cst_139 : f32 to vector<16x16xf32>
    %364 = arith.select %2, %362, %363 : vector<16x16xi1>, vector<16x16xf32>
    %cst_140 = arith.constant dense<0.000000e+00> : vector<16xf32>
    %365 = vector.multi_reduction <add>, %364, %cst_140 [1] : vector<16x16xf32> to vector<16xf32>
    %366 = vector.shape_cast %365 : vector<16xf32> to vector<16x1xf32>
    %cst_141 = arith.constant 1.000000e-30 : f32
    %367 = vector.broadcast %cst_141 : f32 to vector<16x1xf32>
    %368 = arith.maximumf %366, %367 : vector<16x1xf32>
    %369 = tpu.reciprocal %368 {approx = true} : vector<16x1xf32> -> vector<16x1xf32>
    %370 = vector.broadcast %369 : vector<16x1xf32> to vector<16x16xf32>
    %371 = arith.mulf %364, %370 : vector<16x16xf32>
    %372 = vector.extract_strided_slice %342 {offsets = [0, 0], sizes = [16, 8], strides = [1, 1]} : vector<16x16xf32> to vector<16x8xf32>
    %cst_142 = arith.constant dense<0.000000e+00> : vector<16x8xf32>
    %373 = tpu.matmul %371, %372, %cst_142 {dimension_numbers = #tpu.dot_dimension_numbers<[1], [0], [0], [1], [0, 0, 1, 1], [], []>} : vector<16x16xf32>, vector<16x8xf32>, vector<16x8xf32> -> vector<16x8xf32>
    %374 = vector.extract_strided_slice %343 {offsets = [0, 3], sizes = [16, 1], strides = [1, 1]} : vector<16x4xf32> to vector<16x1xf32>
    %375 = vector.extract_strided_slice %345 {offsets = [1, 0], sizes = [1, 16], strides = [1, 1]} : vector<2x16xf32> to vector<1x16xf32>
    %376 = vector.broadcast %374 : vector<16x1xf32> to vector<16x16xf32>
    %377 = vector.broadcast %375 : vector<1x16xf32> to vector<16x16xf32>
    %378 = arith.addf %376, %377 : vector<16x16xf32>
    %cst_143 = arith.constant 0.000000e+00 : f32
    %379 = vector.broadcast %cst_143 : f32 to vector<16x16xf32>
    %380 = arith.cmpf ogt, %378, %379 : vector<16x16xf32>
    %cst_144 = arith.constant 2.000000e-01 : f32
    %381 = vector.broadcast %cst_144 : f32 to vector<16x16xf32>
    %382 = arith.mulf %381, %378 : vector<16x16xf32>
    %383 = arith.select %380, %378, %382 : vector<16x16xi1>, vector<16x16xf32>
    %cst_145 = arith.constant -1.000000e+30 : f32
    %384 = vector.broadcast %cst_145 : f32 to vector<16x16xf32>
    %385 = arith.select %2, %383, %384 : vector<16x16xi1>, vector<16x16xf32>
    %cst_146 = arith.constant dense<0xFF800000> : vector<16xf32>
    %386 = vector.multi_reduction <maximumf>, %385, %cst_146 [1] : vector<16x16xf32> to vector<16xf32>
    %387 = vector.shape_cast %386 : vector<16xf32> to vector<16x1xf32>
    %388 = vector.broadcast %387 : vector<16x1xf32> to vector<16x16xf32>
    %389 = arith.subf %385, %388 : vector<16x16xf32>
    %390 = math.exp %389 : vector<16x16xf32>
    %cst_147 = arith.constant 0.000000e+00 : f32
    %391 = vector.broadcast %cst_147 : f32 to vector<16x16xf32>
    %392 = arith.select %2, %390, %391 : vector<16x16xi1>, vector<16x16xf32>
    %cst_148 = arith.constant dense<0.000000e+00> : vector<16xf32>
    %393 = vector.multi_reduction <add>, %392, %cst_148 [1] : vector<16x16xf32> to vector<16xf32>
    %394 = vector.shape_cast %393 : vector<16xf32> to vector<16x1xf32>
    %cst_149 = arith.constant 1.000000e-30 : f32
    %395 = vector.broadcast %cst_149 : f32 to vector<16x1xf32>
    %396 = arith.maximumf %394, %395 : vector<16x1xf32>
    %397 = tpu.reciprocal %396 {approx = true} : vector<16x1xf32> -> vector<16x1xf32>
    %398 = vector.broadcast %397 : vector<16x1xf32> to vector<16x16xf32>
    %399 = arith.mulf %392, %398 : vector<16x16xf32>
    %400 = vector.extract_strided_slice %342 {offsets = [0, 8], sizes = [16, 8], strides = [1, 1]} : vector<16x16xf32> to vector<16x8xf32>
    %cst_150 = arith.constant dense<0.000000e+00> : vector<16x8xf32>
    %401 = tpu.matmul %399, %400, %cst_150 {dimension_numbers = #tpu.dot_dimension_numbers<[1], [0], [0], [1], [0, 0, 1, 1], [], []>} : vector<16x16xf32>, vector<16x8xf32>, vector<16x8xf32> -> vector<16x8xf32>
    %402 = tpu.concatenate %373, %401 in 1 : vector<16x8xf32>, vector<16x8xf32> -> vector<16x16xf32>
    %403 = vector.broadcast %146 : vector<1x16xf32> to vector<16x16xf32>
    %404 = arith.addf %402, %403 : vector<16x16xf32>
    %405 = arith.addf %341, %215 : vector<16x16xf32>
    %406 = arith.addf %404, %278 : vector<16x16xf32>
    %c0_151 = arith.constant 0 : index
    %c0_152 = arith.constant 0 : index
    %407 = vector.load %arg21[%c0_151, %c0_152] : memref<16x8xf32, #tpu.memory_space<vmem>>, vector<16x8xf32>
    %c0_153 = arith.constant 0 : index
    %c0_154 = arith.constant 0 : index
    %408 = vector.load %arg22[%c0_153, %c0_154] : memref<1x8xf32, #tpu.memory_space<vmem>>, vector<1x8xf32>
    %409 = vector.extract_strided_slice %405 {offsets = [0, 0], sizes = [16, 8], strides = [1, 1]} : vector<16x16xf32> to vector<16x8xf32>
    %cst_155 = arith.constant 0.000000e+00 : f32
    %410 = vector.broadcast %cst_155 : f32 to vector<16x8xf32>
    %411 = arith.addf %410, %409 : vector<16x8xf32>
    %412 = vector.extract_strided_slice %405 {offsets = [0, 8], sizes = [16, 8], strides = [1, 1]} : vector<16x16xf32> to vector<16x8xf32>
    %413 = arith.addf %411, %412 : vector<16x8xf32>
    %cst_156 = arith.constant 5.000000e-01 : f32
    %414 = vector.broadcast %cst_156 : f32 to vector<16x8xf32>
    %415 = arith.mulf %413, %414 : vector<16x8xf32>
    %416 = vector.extract_strided_slice %406 {offsets = [0, 0], sizes = [16, 8], strides = [1, 1]} : vector<16x16xf32> to vector<16x8xf32>
    %cst_157 = arith.constant 0.000000e+00 : f32
    %417 = vector.broadcast %cst_157 : f32 to vector<16x8xf32>
    %418 = arith.addf %417, %416 : vector<16x8xf32>
    %419 = vector.extract_strided_slice %406 {offsets = [0, 8], sizes = [16, 8], strides = [1, 1]} : vector<16x16xf32> to vector<16x8xf32>
    %420 = arith.addf %418, %419 : vector<16x8xf32>
    %cst_158 = arith.constant 5.000000e-01 : f32
    %421 = vector.broadcast %cst_158 : f32 to vector<16x8xf32>
    %422 = arith.mulf %420, %421 : vector<16x8xf32>
    %423 = vector.extract_strided_slice %407 {offsets = [0, 0], sizes = [8, 8], strides = [1, 1]} : vector<16x8xf32> to vector<8x8xf32>
    %cst_159 = arith.constant dense<0.000000e+00> : vector<16x8xf32>
    %424 = tpu.matmul %415, %423, %cst_159 {dimension_numbers = #tpu.dot_dimension_numbers<[1], [0], [0], [1], [0, 0, 1, 1], [], []>} : vector<16x8xf32>, vector<8x8xf32>, vector<16x8xf32> -> vector<16x8xf32>
    %425 = vector.extract_strided_slice %407 {offsets = [8, 0], sizes = [8, 8], strides = [1, 1]} : vector<16x8xf32> to vector<8x8xf32>
    %cst_160 = arith.constant dense<0.000000e+00> : vector<16x8xf32>
    %426 = tpu.matmul %422, %425, %cst_160 {dimension_numbers = #tpu.dot_dimension_numbers<[1], [0], [0], [1], [0, 0, 1, 1], [], []>} : vector<16x8xf32>, vector<8x8xf32>, vector<16x8xf32> -> vector<16x8xf32>
    %427 = arith.addf %424, %426 : vector<16x8xf32>
    %428 = vector.broadcast %408 : vector<1x8xf32> to vector<16x8xf32>
    %429 = arith.addf %427, %428 : vector<16x8xf32>
    %c0_161 = arith.constant 0 : index
    %c0_162 = arith.constant 0 : index
    %430 = vector.load %arg23[%c0_161, %c0_162] : memref<16x8xf32, #tpu.memory_space<vmem>>, vector<16x8xf32>
    tpu.vector_store %arg23[%c0_161, %c0_162], %429 {strides = array<i32>} : memref<16x8xf32, #tpu.memory_space<vmem>>, vector<16x8xf32>,
    return
  }
}

</mosaic_0001>

<llo_original>
// kernel: _lambda_.1
$region0: #{_lambda_.1}
  #allocation0 [shape = 'u32[]', space=smem, size = 0x4, offset = 0x4, fixed_abs, tag = 'smem constant byte address 0x4 - core index']
  #allocation1 [shape = 'u32[144,128]{1,0:T(1,128)}', space=vmem, size = 0x12000, scoped, tag = 'internal scratch']
  %s0 = inlined_call_operand.vmem [shape: f32[16,16], index: 0, kind: input, shape index: {}]
  %s1 = inlined_call_operand.vmem [shape: f32[16,8], index: 1, kind: input, shape index: {}]
  %s2 = inlined_call_operand.vmem [shape: f32[16,8], index: 2, kind: input, shape index: {}]
  %s3 = inlined_call_operand.vmem [shape: f32[8,16], index: 3, kind: input, shape index: {}]
  %s4 = inlined_call_operand.vmem [shape: f32[16,4], index: 4, kind: input, shape index: {}]
  %s5 = inlined_call_operand.vmem [shape: f32[1,16], index: 5, kind: input, shape index: {}]
  %s6 = inlined_call_operand.vmem [shape: f32[8,16], index: 6, kind: input, shape index: {}]
  %s7 = inlined_call_operand.vmem [shape: f32[16,4], index: 7, kind: input, shape index: {}]
  %s8 = inlined_call_operand.vmem [shape: f32[1,16], index: 8, kind: input, shape index: {}]
  %s9 = inlined_call_operand.vmem [shape: f32[16,16], index: 9, kind: input, shape index: {}]
  %s10 = inlined_call_operand.vmem [shape: f32[16,4], index: 10, kind: input, shape index: {}]
  %s11 = inlined_call_operand.vmem [shape: f32[1,16], index: 11, kind: input, shape index: {}]
  %s12 = inlined_call_operand.vmem [shape: f32[16,16], index: 12, kind: input, shape index: {}]
  %s13 = inlined_call_operand.vmem [shape: f32[16,4], index: 13, kind: input, shape index: {}]
  %s14 = inlined_call_operand.vmem [shape: f32[1,16], index: 14, kind: input, shape index: {}]
  %s15 = inlined_call_operand.vmem [shape: f32[16,16], index: 15, kind: input, shape index: {}]
  %s16 = inlined_call_operand.vmem [shape: f32[16,4], index: 16, kind: input, shape index: {}]
  %s17 = inlined_call_operand.vmem [shape: f32[1,16], index: 17, kind: input, shape index: {}]
  %s18 = inlined_call_operand.vmem [shape: f32[16,16], index: 18, kind: input, shape index: {}]
  %s19 = inlined_call_operand.vmem [shape: f32[16,4], index: 19, kind: input, shape index: {}]
  %s20 = inlined_call_operand.vmem [shape: f32[1,16], index: 20, kind: input, shape index: {}]
  %s21 = inlined_call_operand.vmem [shape: f32[16,8], index: 21, kind: input, shape index: {}]
  %s22 = inlined_call_operand.vmem [shape: f32[1,8], index: 22, kind: input, shape index: {}]
  %s23 = inlined_call_operand.vmem [shape: f32[16,8], index: 23, kind: output, shape index: {}]
  %s24 = sld [smem:[#allocation0]]
  $region102: #{_lambda_.1} parent=0
    _
  %s26 = ssub.s32 1, %s24
  %s27 = scalar_select 0, %s26, %s24
  // Predicated region
  $region2: #{_lambda_.1} parent=0 // pred_check
    _
  $region3: #{_lambda_.1} parent=0 // pred_check_branch
    %29 = sbr.rel (0) target = $region5
  $region4: #{_lambda_.1} parent=0 // pred_region
    _
  $region5: #{_lambda_.1} parent=0 // pred_fallthru
    _
  // Predicated region
  $region6: #{_lambda_.1} parent=0 // pred_check
    _
  $region7: #{_lambda_.1} parent=0 // pred_check_branch
    %31 = sbr.rel (0) target = $region9
  $region8: #{_lambda_.1} parent=0 // pred_region
    _
  $region9: #{_lambda_.1} parent=0 // pred_fallthru
    _
  // Predicated region
  $region10: #{_lambda_.1} parent=0 // pred_check
    _
  $region11: #{_lambda_.1} parent=0 // pred_check_branch
    %33 = sbr.rel (0) target = $region13
  $region12: #{_lambda_.1} parent=0 // pred_region
    _
  $region13: #{_lambda_.1} parent=0 // pred_fallthru
    _
  // Predicated region
  $region14: #{_lambda_.1} parent=0 // pred_check
    _
  $region15: #{_lambda_.1} parent=0 // pred_check_branch
    %35 = sbr.rel (0) target = $region17
  $region16: #{_lambda_.1} parent=0 // pred_region
    _
  $region17: #{_lambda_.1} parent=0 // pred_fallthru
    _
  // Predicated region
  $region18: #{_lambda_.1} parent=0 // pred_check
    _
  $region19: #{_lambda_.1} parent=0 // pred_check_branch
    %37 = sbr.rel (0) target = $region21
  $region20: #{_lambda_.1} parent=0 // pred_region
    _
  $region21: #{_lambda_.1} parent=0 // pred_fallthru
    _
  // Predicated region
  $region22: #{_lambda_.1} parent=0 // pred_check
    _
  $region23: #{_lambda_.1} parent=0 // pred_check_branch
    %39 = sbr.rel (0) target = $region25
  $region24: #{_lambda_.1} parent=0 // pred_region
    _
  $region25: #{_lambda_.1} parent=0 // pred_fallthru
    _
  // Predicated region
  $region26: #{_lambda_.1} parent=0 // pred_check
    _
  $region27: #{_lambda_.1} parent=0 // pred_check_branch
    %41 = sbr.rel (0) target = $region29
  $region28: #{_lambda_.1} parent=0 // pred_region
    _
  $region29: #{_lambda_.1} parent=0 // pred_fallthru
    _
  // Predicated region
  $region30: #{_lambda_.1} parent=0 // pred_check
    _
  $region31: #{_lambda_.1} parent=0 // pred_check_branch
    %43 = sbr.rel (0) target = $region33
  $region32: #{_lambda_.1} parent=0 // pred_region
    _
  $region33: #{_lambda_.1} parent=0 // pred_fallthru
    _
  // Predicated region
  $region34: #{_lambda_.1} parent=0 // pred_check
    _
  $region35: #{_lambda_.1} parent=0 // pred_check_branch
    %45 = sbr.rel (0) target = $region37
  $region36: #{_lambda_.1} parent=0 // pred_region
    _
  $region37: #{_lambda_.1} parent=0 // pred_fallthru
    _
  // Predicated region
  $region38: #{_lambda_.1} parent=0 // pred_check
    _
  $region39: #{_lambda_.1} parent=0 // pred_check_branch
    %47 = sbr.rel (0) target = $region41
  $region40: #{_lambda_.1} parent=0 // pred_region
    _
  $region41: #{_lambda_.1} parent=0 // pred_fallthru
    _
  // Predicated region
  $region42: #{_lambda_.1} parent=0 // pred_check
    _
  $region43: #{_lambda_.1} parent=0 // pred_check_branch
    %49 = sbr.rel (0) target = $region45
  $region44: #{_lambda_.1} parent=0 // pred_region
    _
  $region45: #{_lambda_.1} parent=0 // pred_fallthru
    _
  // Predicated region
  $region46: #{_lambda_.1} parent=0 // pred_check
    _
  $region47: #{_lambda_.1} parent=0 // pred_check_branch
    %51 = sbr.rel (0) target = $region49
  $region48: #{_lambda_.1} parent=0 // pred_region
    _
  $region49: #{_lambda_.1} parent=0 // pred_fallthru
    _
  // Predicated region
  $region50: #{_lambda_.1} parent=0 // pred_check
    _
  $region51: #{_lambda_.1} parent=0 // pred_check_branch
    %53 = sbr.rel (0) target = $region53
  $region52: #{_lambda_.1} parent=0 // pred_region
    _
  $region53: #{_lambda_.1} parent=0 // pred_fallthru
    _
  // Predicated region
  $region54: #{_lambda_.1} parent=0 // pred_check
    _
  $region55: #{_lambda_.1} parent=0 // pred_check_branch
    %55 = sbr.rel (0) target = $region57
  $region56: #{_lambda_.1} parent=0 // pred_region
    _
  $region57: #{_lambda_.1} parent=0 // pred_fallthru
    _
  // Predicated region
  $region58: #{_lambda_.1} parent=0 // pred_check
    _
  $region59: #{_lambda_.1} parent=0 // pred_check_branch
    %57 = sbr.rel (0) target = $region61
  $region60: #{_lambda_.1} parent=0 // pred_region
    _
  $region61: #{_lambda_.1} parent=0 // pred_fallthru
    _
  // Predicated region
  $region62: #{_lambda_.1} parent=0 // pred_check
    _
  $region63: #{_lambda_.1} parent=0 // pred_check_branch
    %59 = sbr.rel (0) target = $region65
  $region64: #{_lambda_.1} parent=0 // pred_region
    _
  $region65: #{_lambda_.1} parent=0 // pred_fallthru
    _
  // Predicated region
  $region66: #{_lambda_.1} parent=0 // pred_check
    _
  $region67: #{_lambda_.1} parent=0 // pred_check_branch
    %61 = sbr.rel (0) target = $region69
  $region68: #{_lambda_.1} parent=0 // pred_region
    _
  $region69: #{_lambda_.1} parent=0 // pred_fallthru
    _
  // Predicated region
  $region70: #{_lambda_.1} parent=0 // pred_check
    _
  $region71: #{_lambda_.1} parent=0 // pred_check_branch
    %63 = sbr.rel (0) target = $region73
  $region72: #{_lambda_.1} parent=0 // pred_region
    _
  $region73: #{_lambda_.1} parent=0 // pred_fallthru
    _
  // Predicated region
  $region74: #{_lambda_.1} parent=0 // pred_check
    _
  $region75: #{_lambda_.1} parent=0 // pred_check_branch
    %65 = sbr.rel (0) target = $region77
  $region76: #{_lambda_.1} parent=0 // pred_region
    _
  $region77: #{_lambda_.1} parent=0 // pred_fallthru
    _
  // Predicated region
  $region78: #{_lambda_.1} parent=0 // pred_check
    _
  $region79: #{_lambda_.1} parent=0 // pred_check_branch
    %67 = sbr.rel (0) target = $region81
  $region80: #{_lambda_.1} parent=0 // pred_region
    _
  $region81: #{_lambda_.1} parent=0 // pred_fallthru
    _
  // Predicated region
  $region82: #{_lambda_.1} parent=0 // pred_check
    _
  $region83: #{_lambda_.1} parent=0 // pred_check_branch
    %69 = sbr.rel (0) target = $region85
  $region84: #{_lambda_.1} parent=0 // pred_region
    _
  $region85: #{_lambda_.1} parent=0 // pred_fallthru
    _
  // Predicated region
  $region86: #{_lambda_.1} parent=0 // pred_check
    _
  $region87: #{_lambda_.1} parent=0 // pred_check_branch
    %71 = sbr.rel (0) target = $region89
  $region88: #{_lambda_.1} parent=0 // pred_region
    _
  $region89: #{_lambda_.1} parent=0 // pred_fallthru
    _
  // Predicated region
  $region90: #{_lambda_.1} parent=0 // pred_check
    _
  $region91: #{_lambda_.1} parent=0 // pred_check_branch
    %73 = sbr.rel (0) target = $region93
  $region92: #{_lambda_.1} parent=0 // pred_region
    _
  $region93: #{_lambda_.1} parent=0 // pred_fallthru
    _
  %v74 = vld [vmem:[%s0] sm:$0xff]
  %v75 = vld [vmem:[%s0 + $0x8] sm:$0xff]
  %vm76 = vcmp.gt.f32.partialorder %v74, 0.0
  %vm77 = vcmp.gt.f32.partialorder %v75, 0.0
  %v78 = vld [vmem:[%s1] sm:$0xff]
  %v79 = vld [vmem:[%s1 + $0x8] sm:$0xff]
  %v80 = vld [vmem:[%s2] sm:$0xff]
  %v81 = vld [vmem:[%s2 + $0x8] sm:$0xff]
  %v82 = vld [vmem:[%s3] sm:$0xff]
  %v83 = vld [vmem:[%s4] sm:$0xff]
  %v84 = vld [vmem:[%s4 + $0x8] sm:$0xff]
  %v85 = vld [vmem:[%s5] sm:$0x1]
  %v86 = vld [vmem:[%s6] sm:$0xff]
  %v87 = vld [vmem:[%s7] sm:$0xff]
  %v88 = vld [vmem:[%s7 + $0x8] sm:$0xff]
  %v89 = vld [vmem:[%s8] sm:$0x1]
  %vm90 = vcmask 64512
  %v92 = vsel %vm90, %v78, 0
  %v95 = vsel %vm90, %v79, 0
  %97 = vmatprep.subr.mxu0 0.0
  %98 = vmatpush1.msra.mxu0 %v82
  %99 = vmatprep.subr.mxu0 0.0
  %100 = vmatpush1.msra.mxu0 0.0
  %101 = vmatprep.subr.mxu0 0.0
  %102 = vmatpush1.msra.mxu0 0.0
  %103 = vmatprep.subr.mxu0 0.0
  %104 = vmatpush1.msra.mxu0 0.0
  %105 = vmatprep.subr.mxu0 0.0
  %106 = vmatpush1.msra.mxu0 0.0
  %107 = vmatprep.subr.mxu0 0.0
  %108 = vmatpush1.msra.mxu0 0.0
  %109 = vmatprep.subr.mxu0 0.0
  %110 = vmatpush1.msra.mxu0 0.0
  %111 = vmatprep.subr.mxu0 0.0
  %112 = vmatpush1.msra.mxu0 0.0
  %113 = vmatprep.subr.mxu0 0.0
  %114 = vmatpush1.msra.mxu0 0.0
  %115 = vmatprep.subr.mxu0 0.0
  %116 = vmatpush1.msra.mxu0 0.0
  %117 = vmatprep.subr.mxu0 0.0
  %118 = vmatpush1.msra.mxu0 0.0
  %119 = vmatprep.subr.mxu0 0.0
  %120 = vmatpush1.msra.mxu0 0.0
  %121 = vmatprep.subr.mxu0 0.0
  %122 = vmatpush1.msra.mxu0 0.0
  %123 = vmatprep.subr.mxu0 0.0
  %124 = vmatpush1.msra.mxu0 0.0
  %125 = vmatprep.subr.mxu0 0.0
  %126 = vmatpush1.msra.mxu0 0.0
  %127 = vmatprep.subr.mxu0 0.0
  %128 = vmatpush1.msra.mxu0 0.0
  %129 = vmatprep.subr.mxu0 0.0
  %130 = vmatpush1.msra.mxu0 0.0
  %131 = vmatprep.subr.mxu0 0.0
  %132 = vmatpush1.msra.mxu0 0.0
  %133 = vmatprep.subr.mxu0 0.0
  %134 = vmatpush1.msra.mxu0 0.0
  %135 = vmatprep.subr.mxu0 0.0
  %136 = vmatpush1.msra.mxu0 0.0
  %137 = vmatprep.subr.mxu0 0.0
  %138 = vmatpush1.msra.mxu0 0.0
  %139 = vmatprep.subr.mxu0 0.0
  %140 = vmatpush1.msra.mxu0 0.0
  %141 = vmatprep.subr.mxu0 0.0
  %142 = vmatpush1.msra.mxu0 0.0
  %143 = vmatprep.subr.mxu0 0.0
  %144 = vmatpush1.msra.mxu0 0.0
  %145 = vmatprep.subr.mxu0 0.0
  %146 = vmatpush1.msra.mxu0 0.0
  %147 = vmatprep.subr.mxu0 0.0
  %148 = vmatpush1.msra.mxu0 0.0
  %149 = vmatprep.subr.mxu0 0.0
  %150 = vmatpush1.msra.mxu0 0.0
  %151 = vmatprep.subr.mxu0 0.0
  %152 = vmatpush1.msra.mxu0 0.0
  %153 = vmatprep.subr.mxu0 0.0
  %154 = vmatpush1.msra.mxu0 0.0
  %155 = vmatprep.subr.mxu0 0.0
  %156 = vmatpush1.msra.mxu0 0.0
  %157 = vmatprep.subr.mxu0 0.0
  %158 = vmatpush1.msra.mxu0 0.0
  %159 = vmatprep.subr.mxu0 0.0
  %160 = vmatpush1.msra.mxu0 0.0
  %161 = vmatprep.mubr.f32.mxu0 0.0
  %162 = vmatmul.mubr.f32.gmra.mrb[0].mxu0 %v92
  %v163 = vpop.f32.mrb[0].mxu0
  %v164 = vadd.f32 0.0, %v163
  %v165 = vpop.f32.mrb[0].mxu0
  %166 = vmatprep.mubr.f32.mxu0 0.0
  %167 = vmatmul.mubr.f32.gmra.mrb[0].mxu0 %v95
  %v168 = vpop.f32.mrb[0].mxu0
  %v169 = vadd.f32 0.0, %v168
  %v170 = vpop.f32.mrb[0].mxu0
  %171 = vdwg.mxu0
  %vm172 = vcmask 130048
  %v174 = vsel %vm172, %v164, 0
  %v177 = vsel %vm172, %v169, 0
  %179 = vmatprep.subr.mxu0 0.0
  %180 = vmatpush1.msra.mxu0 %v83
  %181 = vmatprep.subr.mxu0 0.0
  %182 = vmatpush1.msra.mxu0 %v84
  %183 = vmatprep.subr.mxu0 0.0
  %184 = vmatpush1.msra.mxu0 0.0
  %185 = vmatprep.subr.mxu0 0.0
  %186 = vmatpush1.msra.mxu0 0.0
  %187 = vmatprep.subr.mxu0 0.0
  %188 = vmatpush1.msra.mxu0 0.0
  %189 = vmatprep.subr.mxu0 0.0
  %190 = vmatpush1.msra.mxu0 0.0
  %191 = vmatprep.subr.mxu0 0.0
  %192 = vmatpush1.msra.mxu0 0.0
  %193 = vmatprep.subr.mxu0 0.0
  %194 = vmatpush1.msra.mxu0 0.0
  %195 = vmatprep.subr.mxu0 0.0
  %196 = vmatpush1.msra.mxu0 0.0
  %197 = vmatprep.subr.mxu0 0.0
  %198 = vmatpush1.msra.mxu0 0.0
  %199 = vmatprep.subr.mxu0 0.0
  %200 = vmatpush1.msra.mxu0 0.0
  %201 = vmatprep.subr.mxu0 0.0
  %202 = vmatpush1.msra.mxu0 0.0
  %203 = vmatprep.subr.mxu0 0.0
  %204 = vmatpush1.msra.mxu0 0.0
  %205 = vmatprep.subr.mxu0 0.0
  %206 = vmatpush1.msra.mxu0 0.0
  %207 = vmatprep.subr.mxu0 0.0
  %208 = vmatpush1.msra.mxu0 0.0
  %209 = vmatprep.subr.mxu0 0.0
  %210 = vmatpush1.msra.mxu0 0.0
  %211 = vmatprep.subr.mxu0 0.0
  %212 = vmatpush1.msra.mxu0 0.0
  %213 = vmatprep.subr.mxu0 0.0
  %214 = vmatpush1.msra.mxu0 0.0
  %215 = vmatprep.subr.mxu0 0.0
  %216 = vmatpush1.msra.mxu0 0.0
  %217 = vmatprep.subr.mxu0 0.0
  %218 = vmatpush1.msra.mxu0 0.0
  %219 = vmatprep.subr.mxu0 0.0
  %220 = vmatpush1.msra.mxu0 0.0
  %221 = vmatprep.subr.mxu0 0.0
  %222 = vmatpush1.msra.mxu0 0.0
  %223 = vmatprep.subr.mxu0 0.0
  %224 = vmatpush1.msra.mxu0 0.0
  %225 = vmatprep.subr.mxu0 0.0
  %226 = vmatpush1.msra.mxu0 0.0
  %227 = vmatprep.subr.mxu0 0.0
  %228 = vmatpush1.msra.mxu0 0.0
  %229 = vmatprep.subr.mxu0 0.0
  %230 = vmatpush1.msra.mxu0 0.0
  %231 = vmatprep.subr.mxu0 0.0
  %232 = vmatpush1.msra.mxu0 0.0
  %233 = vmatprep.subr.mxu0 0.0
  %234 = vmatpush1.msra.mxu0 0.0
  %235 = vmatprep.subr.mxu0 0.0
  %236 = vmatpush1.msra.mxu0 0.0
  %237 = vmatprep.subr.mxu0 0.0
  %238 = vmatpush1.msra.mxu0 0.0
  %239 = vmatprep.subr.mxu0 0.0
  %240 = vmatpush1.msra.mxu0 0.0
  %241 = vmatprep.subr.mxu0 0.0
  %242 = vmatpush1.msra.mxu0 0.0
  %243 = vmatprep.mubr.f32.mxu0 0.0
  %244 = vmatmul.mubr.f32.gmra.mrb[0].mxu0 %v174
  %v245 = vpop.f32.mrb[0].mxu0
  %v246 = vadd.f32 0.0, %v245
  %v247 = vpop.f32.mrb[0].mxu0
  %248 = vmatprep.mubr.f32.mxu0 0.0
  %249 = vmatmul.mubr.f32.gmra.mrb[0].mxu0 %v177
  %v250 = vpop.f32.mrb[0].mxu0
  %v251 = vadd.f32 0.0, %v250
  %v252 = vpop.f32.mrb[0].mxu0
  %253 = vdwg.mxu0
  %254 = vxpose.xlu0.b32.start [1/16] %v246, 128
  %255 = vxpose.xlu0.b32.cont [2/16] %v251, 128
  %256 = vxpose.xlu0.b32.cont [3/16] 0.0, 128
  %257 = vxpose.xlu0.b32.cont [4/16] 0.0, 128
  %258 = vxpose.xlu0.b32.cont [5/16] 0.0, 128
  %259 = vxpose.xlu0.b32.cont [6/16] 0.0, 128
  %260 = vxpose.xlu0.b32.cont [7/16] 0.0, 128
  %261 = vxpose.xlu0.b32.cont [8/16] 0.0, 128
  %262 = vxpose.xlu0.b32.cont [9/16] 0.0, 128
  %263 = vxpose.xlu0.b32.cont [10/16] 0.0, 128
  %264 = vxpose.xlu0.b32.cont [11/16] 0.0, 128
  %265 = vxpose.xlu0.b32.cont [12/16] 0.0, 128
  %266 = vxpose.xlu0.b32.cont [13/16] 0.0, 128
  %267 = vxpose.xlu0.b32.cont [14/16] 0.0, 128
  %268 = vxpose.xlu0.b32.cont [15/16] 0.0, 128
  %269 = vxpose.xlu0.b32.end [16/16] 0.0, 128
  %v270 = vpop.trf.xlu0
  %v271 = vpop.trf.xlu0
  %v272 = vpop.trf.xlu0
  %v273 = vpop.trf.xlu0
  %v274 = vpop.trf.xlu0
  %v275 = vpop.trf.xlu0
  %v276 = vpop.trf.xlu0
  %v277 = vpop.trf.xlu0
  %v278 = vpop.trf.xlu0
  %v279 = vpop.trf.xlu0
  %v280 = vpop.trf.xlu0
  %v281 = vpop.trf.xlu0
  %v282 = vpop.trf.xlu0
  %v283 = vpop.trf.xlu0
  %v284 = vpop.trf.xlu0
  %v285 = vpop.trf.xlu0
  %287 = vset.pattern.permute.xlu0 2
  %288 = vperm.xlu0 %287, %v246
  %v289 = vpop.permute.xlu0 %288
  %292 = vset.pattern.permute.xlu0 2
  %293 = vperm.xlu0 %292, %v251
  %v294 = vpop.permute.xlu0 %293
  %v296 = vlaneseq
  %v297 = vshrl.u32 %v296, 7
  %v298 = vsub.s32 0, %v297
  %v299 = vrot.slane %v270, %v298
  %v300 = vadd.f32 %v289, %v299
  %v301 = vadd.f32 %v294, %v299
  %vm302 = vcmp.gt.f32.partialorder %v300, 0.0
  %vm303 = vcmp.gt.f32.partialorder %v301, 0.0
  %v304 = vmul.f32 %v300, 0.2
  %v305 = vmul.f32 %v301, 0.2
  %v306 = vsel %vm302, %v300, %v304
  %v307 = vsel %vm303, %v301, %v305
  %v308 = vsel %vm76, %v306, -1e+30
  %v309 = vsel %vm77, %v307, -1e+30
  %v310 = vsel %vm172, %v308, -inf
  %311 = vmax.xlane.f32.xlu0 %v310
  %v312 = vpop.xlane.xlu0 %311
  %v313 = vsel %vm172, %v309, -inf
  %314 = vmax.xlane.f32.xlu0 %v313
  %v315 = vpop.xlane.xlu0 %314
  %v316 = vsub.f32 %v308, %v312
  %v317 = vsub.f32 %v309, %v315
  %v318 = vmul.f32 %v316, 1.442695
  %v319 = vpow.pop %v318
  %v320 = vmul.f32 %v317, 1.442695
  %v321 = vpow.pop %v320
  %v322 = vsel %vm76, %v319, 0.0
  %v323 = vsel %vm77, %v321, 0.0
  %v324 = vsel %vm172, %v322, 0.0
  %325 = vadd.xlane.f32.xlu0 %v324
  %v326 = vpop.xlane.xlu0 %325
  %v327 = vsel %vm172, %v323, 0.0
  %328 = vadd.xlane.f32.xlu0 %v327
  %v329 = vpop.xlane.xlu0 %328
  %v330 = vmax.f32 %v326, 1e-30
  %v331 = vmax.f32 %v329, 1e-30
  %v332 = vrcp.pop %v330
  %v333 = vrcp.pop %v331
  %v334 = vmul.f32 %v322, %v332
  %v335 = vmul.f32 %v323, %v333
  %v337 = vsel %vm172, %v334, 0
  %v340 = vsel %vm172, %v335, 0
  %342 = vmatprep.subr.mxu0 0.0
  %343 = vmatpush1.msra.mxu0 %v164
  %344 = vmatprep.subr.mxu0 0.0
  %345 = vmatpush1.msra.mxu0 %v169
  %346 = vmatprep.subr.mxu0 0.0
  %347 = vmatpush1.msra.mxu0 0.0
  %348 = vmatprep.subr.mxu0 0.0
  %349 = vmatpush1.msra.mxu0 0.0
  %350 = vmatprep.subr.mxu0 0.0
  %351 = vmatpush1.msra.mxu0 0.0
  %352 = vmatprep.subr.mxu0 0.0
  %353 = vmatpush1.msra.mxu0 0.0
  %354 = vmatprep.subr.mxu0 0.0
  %355 = vmatpush1.msra.mxu0 0.0
  %356 = vmatprep.subr.mxu0 0.0
  %357 = vmatpush1.msra.mxu0 0.0
  %358 = vmatprep.subr.mxu0 0.0
  %359 = vmatpush1.msra.mxu0 0.0
  %360 = vmatprep.subr.mxu0 0.0
  %361 = vmatpush1.msra.mxu0 0.0
  %362 = vmatprep.subr.mxu0 0.0
  %363 = vmatpush1.msra.mxu0 0.0
  %364 = vmatprep.subr.mxu0 0.0
  %365 = vmatpush1.msra.mxu0 0.0
  %366 = vmatprep.subr.mxu0 0.0
  %367 = vmatpush1.msra.mxu0 0.0
  %368 = vmatprep.subr.mxu0 0.0
  %369 = vmatpush1.msra.mxu0 0.0
  %370 = vmatprep.subr.mxu0 0.0
  %371 = vmatpush1.msra.mxu0 0.0
  %372 = vmatprep.subr.mxu0 0.0
  %373 = vmatpush1.msra.mxu0 0.0
  %374 = vmatprep.subr.mxu0 0.0
  %375 = vmatpush1.msra.mxu0 0.0
  %376 = vmatprep.subr.mxu0 0.0
  %377 = vmatpush1.msra.mxu0 0.0
  %378 = vmatprep.subr.mxu0 0.0
  %379 = vmatpush1.msra.mxu0 0.0
  %380 = vmatprep.subr.mxu0 0.0
  %381 = vmatpush1.msra.mxu0 0.0
  %382 = vmatprep.subr.mxu0 0.0
  %383 = vmatpush1.msra.mxu0 0.0
  %384 = vmatprep.subr.mxu0 0.0
  %385 = vmatpush1.msra.mxu0 0.0
  %386 = vmatprep.subr.mxu0 0.0
  %387 = vmatpush1.msra.mxu0 0.0
  %388 = vmatprep.subr.mxu0 0.0
  %389 = vmatpush1.msra.mxu0 0.0
  %390 = vmatprep.subr.mxu0 0.0
  %391 = vmatpush1.msra.mxu0 0.0
  %392 = vmatprep.subr.mxu0 0.0
  %393 = vmatpush1.msra.mxu0 0.0
  %394 = vmatprep.subr.mxu0 0.0
  %395 = vmatpush1.msra.mxu0 0.0
  %396 = vmatprep.subr.mxu0 0.0
  %397 = vmatpush1.msra.mxu0 0.0
  %398 = vmatprep.subr.mxu0 0.0
  %399 = vmatpush1.msra.mxu0 0.0
  %400 = vmatprep.subr.mxu0 0.0
  %401 = vmatpush1.msra.mxu0 0.0
  %402 = vmatprep.subr.mxu0 0.0
  %403 = vmatpush1.msra.mxu0 0.0
  %404 = vmatprep.subr.mxu0 0.0
  %405 = vmatpush1.msra.mxu0 0.0
  %406 = vmatprep.mubr.f32.mxu0 0.0
  %407 = vmatmul.mubr.f32.gmra.mrb[0].mxu0 %v337
  %v408 = vpop.f32.mrb[0].mxu0
  %v409 = vadd.f32 0.0, %v408
  %v410 = vpop.f32.mrb[0].mxu0
  %411 = vmatprep.mubr.f32.mxu0 0.0
  %412 = vmatmul.mubr.f32.gmra.mrb[0].mxu0 %v340
  %v413 = vpop.f32.mrb[0].mxu0
  %v414 = vadd.f32 0.0, %v413
  %v415 = vpop.f32.mrb[0].mxu0
  %416 = vdwg.mxu0
  %417 = vset.pattern.permute.xlu0 3
  %418 = vperm.xlu0 %417, %v246
  %v419 = vpop.permute.xlu0 %418
  %421 = vset.pattern.permute.xlu0 3
  %422 = vperm.xlu0 %421, %v251
  %v423 = vpop.permute.xlu0 %422
  %v425 = vlaneseq
  %v426 = vshrl.u32 %v425, 7
  %v427 = vsub.s32 1, %v426
  %v428 = vrot.slane %v270, %v427
  %v429 = vadd.f32 %v419, %v428
  %v430 = vadd.f32 %v423, %v428
  %vm431 = vcmp.gt.f32.partialorder %v429, 0.0
  %vm432 = vcmp.gt.f32.partialorder %v430, 0.0
  %v433 = vmul.f32 %v429, 0.2
  %v434 = vmul.f32 %v430, 0.2
  %v435 = vsel %vm431, %v429, %v433
  %v436 = vsel %vm432, %v430, %v434
  %v437 = vsel %vm76, %v435, -1e+30
  %v438 = vsel %vm77, %v436, -1e+30
  %v439 = vsel %vm172, %v437, -inf
  %440 = vmax.xlane.f32.xlu0 %v439
  %v441 = vpop.xlane.xlu0 %440
  %v442 = vsel %vm172, %v438, -inf
  %443 = vmax.xlane.f32.xlu0 %v442
  %v444 = vpop.xlane.xlu0 %443
  %v445 = vsub.f32 %v437, %v441
  %v446 = vsub.f32 %v438, %v444
  %v447 = vmul.f32 %v445, 1.442695
  %v448 = vpow.pop %v447
  %v449 = vmul.f32 %v446, 1.442695
  %v450 = vpow.pop %v449
  %v451 = vsel %vm76, %v448, 0.0
  %v452 = vsel %vm77, %v450, 0.0
  %v453 = vsel %vm172, %v451, 0.0
  %454 = vadd.xlane.f32.xlu0 %v453
  %v455 = vpop.xlane.xlu0 %454
  %v456 = vsel %vm172, %v452, 0.0
  %457 = vadd.xlane.f32.xlu0 %v456
  %v458 = vpop.xlane.xlu0 %457
  %v459 = vmax.f32 %v455, 1e-30
  %v460 = vmax.f32 %v458, 1e-30
  %v461 = vrcp.pop %v459
  %v462 = vrcp.pop %v460
  %v463 = vmul.f32 %v451, %v461
  %v464 = vmul.f32 %v452, %v462
  %465 = vrot.lane.b32.xlu0 %v164, 120
  %v466 = vpop.permute.xlu0 %465
  %467 = vrot.lane.b32.xlu0 %v169, 120
  %v468 = vpop.permute.xlu0 %467
  %v472 = vsel %vm172, %v463, 0
  %v475 = vsel %vm172, %v464, 0
  %477 = vmatprep.subr.mxu0 0.0
  %478 = vmatpush1.msra.mxu0 %v466
  %479 = vmatprep.subr.mxu0 0.0
  %480 = vmatpush1.msra.mxu0 %v468
  %481 = vmatprep.subr.mxu0 0.0
  %482 = vmatpush1.msra.mxu0 0.0
  %483 = vmatprep.subr.mxu0 0.0
  %484 = vmatpush1.msra.mxu0 0.0
  %485 = vmatprep.subr.mxu0 0.0
  %486 = vmatpush1.msra.mxu0 0.0
  %487 = vmatprep.subr.mxu0 0.0
  %488 = vmatpush1.msra.mxu0 0.0
  %489 = vmatprep.subr.mxu0 0.0
  %490 = vmatpush1.msra.mxu0 0.0
  %491 = vmatprep.subr.mxu0 0.0
  %492 = vmatpush1.msra.mxu0 0.0
  %493 = vmatprep.subr.mxu0 0.0
  %494 = vmatpush1.msra.mxu0 0.0
  %495 = vmatprep.subr.mxu0 0.0
  %496 = vmatpush1.msra.mxu0 0.0
  %497 = vmatprep.subr.mxu0 0.0
  %498 = vmatpush1.msra.mxu0 0.0
  %499 = vmatprep.subr.mxu0 0.0
  %500 = vmatpush1.msra.mxu0 0.0
  %501 = vmatprep.subr.mxu0 0.0
  %502 = vmatpush1.msra.mxu0 0.0
  %503 = vmatprep.subr.mxu0 0.0
  %504 = vmatpush1.msra.mxu0 0.0
  %505 = vmatprep.subr.mxu0 0.0
  %506 = vmatpush1.msra.mxu0 0.0
  %507 = vmatprep.subr.mxu0 0.0
  %508 = vmatpush1.msra.mxu0 0.0
  %509 = vmatprep.subr.mxu0 0.0
  %510 = vmatpush1.msra.mxu0 0.0
  %511 = vmatprep.subr.mxu0 0.0
  %512 = vmatpush1.msra.mxu0 0.0
  %513 = vmatprep.subr.mxu0 0.0
  %514 = vmatpush1.msra.mxu0 0.0
  %515 = vmatprep.subr.mxu0 0.0
  %516 = vmatpush1.msra.mxu0 0.0
  %517 = vmatprep.subr.mxu0 0.0
  %518 = vmatpush1.msra.mxu0 0.0
  %519 = vmatprep.subr.mxu0 0.0
  %520 = vmatpush1.msra.mxu0 0.0
  %521 = vmatprep.subr.mxu0 0.0
  %522 = vmatpush1.msra.mxu0 0.0
  %523 = vmatprep.subr.mxu0 0.0
  %524 = vmatpush1.msra.mxu0 0.0
  %525 = vmatprep.subr.mxu0 0.0
  %526 = vmatpush1.msra.mxu0 0.0
  %527 = vmatprep.subr.mxu0 0.0
  %528 = vmatpush1.msra.mxu0 0.0
  %529 = vmatprep.subr.mxu0 0.0
  %530 = vmatpush1.msra.mxu0 0.0
  %531 = vmatprep.subr.mxu0 0.0
  %532 = vmatpush1.msra.mxu0 0.0
  %533 = vmatprep.subr.mxu0 0.0
  %534 = vmatpush1.msra.mxu0 0.0
  %535 = vmatprep.subr.mxu0 0.0
  %536 = vmatpush1.msra.mxu0 0.0
  %537 = vmatprep.subr.mxu0 0.0
  %538 = vmatpush1.msra.mxu0 0.0
  %539 = vmatprep.subr.mxu0 0.0
  %540 = vmatpush1.msra.mxu0 0.0
  %541 = vmatprep.mubr.f32.mxu0 0.0
  %542 = vmatmul.mubr.f32.gmra.mrb[0].mxu0 %v472
  %v543 = vpop.f32.mrb[0].mxu0
  %v544 = vadd.f32 0.0, %v543
  %v545 = vpop.f32.mrb[0].mxu0
  %546 = vmatprep.mubr.f32.mxu0 0.0
  %547 = vmatmul.mubr.f32.gmra.mrb[0].mxu0 %v475
  %v548 = vpop.f32.mrb[0].mxu0
  %v549 = vadd.f32 0.0, %v548
  %v550 = vpop.f32.mrb[0].mxu0
  %551 = vdwg.mxu0
  %554 = vrot.lane.b32.xlu0 %v544, 8
  %v555 = vpop.permute.xlu0 %554
  %556 = vrot.lane.b32.xlu0 %v549, 8
  %v557 = vpop.permute.xlu0 %556
  %v560 = vsel %vm90, %v409, %v555
  %v561 = vsel %vm90, %v414, %v557
  %v563 = vlaneseq
  %v564 = vshrl.u32 %v563, 7
  %v565 = vsub.s32 0, %v564
  %v566 = vrot.slane %v85, %v565
  %v568 = vadd.f32 %v560, %v566
  %v569 = vadd.f32 %v561, %v566
  %v571 = vsel %vm90, %v80, 0
  %v574 = vsel %vm90, %v81, 0
  %576 = vmatprep.subr.mxu0 0.0
  %577 = vmatpush1.msra.mxu0 %v86
  %578 = vmatprep.subr.mxu0 0.0
  %579 = vmatpush1.msra.mxu0 0.0
  %580 = vmatprep.subr.mxu0 0.0
  %581 = vmatpush1.msra.mxu0 0.0
  %582 = vmatprep.subr.mxu0 0.0
  %583 = vmatpush1.msra.mxu0 0.0
  %584 = vmatprep.subr.mxu0 0.0
  %585 = vmatpush1.msra.mxu0 0.0
  %586 = vmatprep.subr.mxu0 0.0
  %587 = vmatpush1.msra.mxu0 0.0
  %588 = vmatprep.subr.mxu0 0.0
  %589 = vmatpush1.msra.mxu0 0.0
  %590 = vmatprep.subr.mxu0 0.0
  %591 = vmatpush1.msra.mxu0 0.0
  %592 = vmatprep.subr.mxu0 0.0
  %593 = vmatpush1.msra.mxu0 0.0
  %594 = vmatprep.subr.mxu0 0.0
  %595 = vmatpush1.msra.mxu0 0.0
  %596 = vmatprep.subr.mxu0 0.0
  %597 = vmatpush1.msra.mxu0 0.0
  %598 = vmatprep.subr.mxu0 0.0
  %599 = vmatpush1.msra.mxu0 0.0
  %600 = vmatprep.subr.mxu0 0.0
  %601 = vmatpush1.msra.mxu0 0.0
  %602 = vmatprep.subr.mxu0 0.0
  %603 = vmatpush1.msra.mxu0 0.0
  %604 = vmatprep.subr.mxu0 0.0
  %605 = vmatpush1.msra.mxu0 0.0
  %606 = vmatprep.subr.mxu0 0.0
  %607 = vmatpush1.msra.mxu0 0.0
  %608 = vmatprep.subr.mxu0 0.0
  %609 = vmatpush1.msra.mxu0 0.0
  %610 = vmatprep.subr.mxu0 0.0
  %611 = vmatpush1.msra.mxu0 0.0
  %612 = vmatprep.subr.mxu0 0.0
  %613 = vmatpush1.msra.mxu0 0.0
  %614 = vmatprep.subr.mxu0 0.0
  %615 = vmatpush1.msra.mxu0 0.0
  %616 = vmatprep.subr.mxu0 0.0
  %617 = vmatpush1.msra.mxu0 0.0
  %618 = vmatprep.subr.mxu0 0.0
  %619 = vmatpush1.msra.mxu0 0.0
  %620 = vmatprep.subr.mxu0 0.0
  %621 = vmatpush1.msra.mxu0 0.0
  %622 = vmatprep.subr.mxu0 0.0
  %623 = vmatpush1.msra.mxu0 0.0
  %624 = vmatprep.subr.mxu0 0.0
  %625 = vmatpush1.msra.mxu0 0.0
  %626 = vmatprep.subr.mxu0 0.0
  %627 = vmatpush1.msra.mxu0 0.0
  %628 = vmatprep.subr.mxu0 0.0
  %629 = vmatpush1.msra.mxu0 0.0
  %630 = vmatprep.subr.mxu0 0.0
  %631 = vmatpush1.msra.mxu0 0.0
  %632 = vmatprep.subr.mxu0 0.0
  %633 = vmatpush1.msra.mxu0 0.0
  %634 = vmatprep.subr.mxu0 0.0
  %635 = vmatpush1.msra.mxu0 0.0
  %636 = vmatprep.subr.mxu0 0.0
  %637 = vmatpush1.msra.mxu0 0.0
  %638 = vmatprep.subr.mxu0 0.0
  %639 = vmatpush1.msra.mxu0 0.0
  %640 = vmatprep.mubr.f32.mxu0 0.0
  %641 = vmatmul.mubr.f32.gmra.mrb[0].mxu0 %v571
  %v642 = vpop.f32.mrb[0].mxu0
  %v643 = vadd.f32 0.0, %v642
  %v644 = vpop.f32.mrb[0].mxu0
  %645 = vmatprep.mubr.f32.mxu0 0.0
  %646 = vmatmul.mubr.f32.gmra.mrb[0].mxu0 %v574
  %v647 = vpop.f32.mrb[0].mxu0
  %v648 = vadd.f32 0.0, %v647
  %v649 = vpop.f32.mrb[0].mxu0
  %650 = vdwg.mxu0
  %v652 = vsel %vm172, %v643, 0
  %v655 = vsel %vm172, %v648, 0
  %657 = vmatprep.subr.mxu0 0.0
  %658 = vmatpush1.msra.mxu0 %v87
  %659 = vmatprep.subr.mxu0 0.0
  %660 = vmatpush1.msra.mxu0 %v88
  %661 = vmatprep.subr.mxu0 0.0
  %662 = vmatpush1.msra.mxu0 0.0
  %663 = vmatprep.subr.mxu0 0.0
  %664 = vmatpush1.msra.mxu0 0.0
  %665 = vmatprep.subr.mxu0 0.0
  %666 = vmatpush1.msra.mxu0 0.0
  %667 = vmatprep.subr.mxu0 0.0
  %668 = vmatpush1.msra.mxu0 0.0
  %669 = vmatprep.subr.mxu0 0.0
  %670 = vmatpush1.msra.mxu0 0.0
  %671 = vmatprep.subr.mxu0 0.0
  %672 = vmatpush1.msra.mxu0 0.0
  %673 = vmatprep.subr.mxu0 0.0
  %674 = vmatpush1.msra.mxu0 0.0
  %675 = vmatprep.subr.mxu0 0.0
  %676 = vmatpush1.msra.mxu0 0.0
  %677 = vmatprep.subr.mxu0 0.0
  %678 = vmatpush1.msra.mxu0 0.0
  %679 = vmatprep.subr.mxu0 0.0
  %680 = vmatpush1.msra.mxu0 0.0
  %681 = vmatprep.subr.mxu0 0.0
  %682 = vmatpush1.msra.mxu0 0.0
  %683 = vmatprep.subr.mxu0 0.0
  %684 = vmatpush1.msra.mxu0 0.0
  %685 = vmatprep.subr.mxu0 0.0
  %686 = vmatpush1.msra.mxu0 0.0
  %687 = vmatprep.subr.mxu0 0.0
  %688 = vmatpush1.msra.mxu0 0.0
  %689 = vmatprep.subr.mxu0 0.0
  %690 = vmatpush1.msra.mxu0 0.0
  %691 = vmatprep.subr.mxu0 0.0
  %692 = vmatpush1.msra.mxu0 0.0
  %693 = vmatprep.subr.mxu0 0.0
  %694 = vmatpush1.msra.mxu0 0.0
  %695 = vmatprep.subr.mxu0 0.0
  %696 = vmatpush1.msra.mxu0 0.0
  %697 = vmatprep.subr.mxu0 0.0
  %698 = vmatpush1.msra.mxu0 0.0
  %699 = vmatprep.subr.mxu0 0.0
  %700 = vmatpush1.msra.mxu0 0.0
  %701 = vmatprep.subr.mxu0 0.0
  %702 = vmatpush1.msra.mxu0 0.0
  %703 = vmatprep.subr.mxu0 0.0
  %704 = vmatpush1.msra.mxu0 0.0
  %705 = vmatprep.subr.mxu0 0.0
  %706 = vmatpush1.msra.mxu0 0.0
  %707 = vmatprep.subr.mxu0 0.0
  %708 = vmatpush1.msra.mxu0 0.0
  %709 = vmatprep.subr.mxu0 0.0
  %710 = vmatpush1.msra.mxu0 0.0
  %711 = vmatprep.subr.mxu0 0.0
  %712 = vmatpush1.msra.mxu0 0.0
  %713 = vmatprep.subr.mxu0 0.0
  %714 = vmatpush1.msra.mxu0 0.0
  %715 = vmatprep.subr.mxu0 0.0
  %716 = vmatpush1.msra.mxu0 0.0
  %717 = vmatprep.subr.mxu0 0.0
  %718 = vmatpush1.msra.mxu0 0.0
  %719 = vmatprep.subr.mxu0 0.0
  %720 = vmatpush1.msra.mxu0 0.0
  %721 = vmatprep.mubr.f32.mxu0 0.0
  %722 = vmatmul.mubr.f32.gmra.mrb[0].mxu0 %v652
  %v723 = vpop.f32.mrb[0].mxu0
  %v724 = vadd.f32 0.0, %v723
  %v725 = vpop.f32.mrb[0].mxu0
  %726 = vmatprep.mubr.f32.mxu0 0.0
  %727 = vmatmul.mubr.f32.gmra.mrb[0].mxu0 %v655
  %v728 = vpop.f32.mrb[0].mxu0
  %v729 = vadd.f32 0.0, %v728
  %v730 = vpop.f32.mrb[0].mxu0
  %731 = vdwg.mxu0
  %732 = vxpose.xlu0.b32.start [1/16] %v724, 128
  %733 = vxpose.xlu0.b32.cont [2/16] %v729, 128
  %734 = vxpose.xlu0.b32.cont [3/16] 0.0, 128
  %735 = vxpose.xlu0.b32.cont [4/16] 0.0, 128
  %736 = vxpose.xlu0.b32.cont [5/16] 0.0, 128
  %737 = vxpose.xlu0.b32.cont [6/16] 0.0, 128
  %738 = vxpose.xlu0.b32.cont [7/16] 0.0, 128
  %739 = vxpose.xlu0.b32.cont [8/16] 0.0, 128
  %740 = vxpose.xlu0.b32.cont [9/16] 0.0, 128
  %741 = vxpose.xlu0.b32.cont [10/16] 0.0, 128
  %742 = vxpose.xlu0.b32.cont [11/16] 0.0, 128
  %743 = vxpose.xlu0.b32.cont [12/16] 0.0, 128
  %744 = vxpose.xlu0.b32.cont [13/16] 0.0, 128
  %745 = vxpose.xlu0.b32.cont [14/16] 0.0, 128
  %746 = vxpose.xlu0.b32.cont [15/16] 0.0, 128
  %747 = vxpose.xlu0.b32.end [16/16] 0.0, 128
  %v748 = vpop.trf.xlu0
  %v749 = vpop.trf.xlu0
  %v750 = vpop.trf.xlu0
  %v751 = vpop.trf.xlu0
  %v752 = vpop.trf.xlu0
  %v753 = vpop.trf.xlu0
  %v754 = vpop.trf.xlu0
  %v755 = vpop.trf.xlu0
  %v756 = vpop.trf.xlu0
  %v757 = vpop.trf.xlu0
  %v758 = vpop.trf.xlu0
  %v759 = vpop.trf.xlu0
  %v760 = vpop.trf.xlu0
  %v761 = vpop.trf.xlu0
  %v762 = vpop.trf.xlu0
  %v763 = vpop.trf.xlu0
  %765 = vset.pattern.permute.xlu0 2
  %766 = vperm.xlu0 %765, %v724
  %v767 = vpop.permute.xlu0 %766
  %770 = vset.pattern.permute.xlu0 2
  %771 = vperm.xlu0 %770, %v729
  %v772 = vpop.permute.xlu0 %771
  %v774 = vlaneseq
  %v775 = vshrl.u32 %v774, 7
  %v776 = vsub.s32 0, %v775
  %v777 = vrot.slane %v748, %v776
  %v778 = vadd.f32 %v767, %v777
  %v779 = vadd.f32 %v772, %v777
  %vm780 = vcmp.gt.f32.partialorder %v778, 0.0
  %vm781 = vcmp.gt.f32.partialorder %v779, 0.0
  %v782 = vmul.f32 %v778, 0.2
  %v783 = vmul.f32 %v779, 0.2
  %v784 = vsel %vm780, %v778, %v782
  %v785 = vsel %vm781, %v779, %v783
  %v786 = vsel %vm76, %v784, -1e+30
  %v787 = vsel %vm77, %v785, -1e+30
  %v788 = vsel %vm172, %v786, -inf
  %789 = vmax.xlane.f32.xlu0 %v788
  %v790 = vpop.xlane.xlu0 %789
  %v791 = vsel %vm172, %v787, -inf
  %792 = vmax.xlane.f32.xlu0 %v791
  %v793 = vpop.xlane.xlu0 %792
  %v794 = vsub.f32 %v786, %v790
  %v795 = vsub.f32 %v787, %v793
  %v796 = vmul.f32 %v794, 1.442695
  %v797 = vpow.pop %v796
  %v798 = vmul.f32 %v795, 1.442695
  %v799 = vpow.pop %v798
  %v800 = vsel %vm76, %v797, 0.0
  %v801 = vsel %vm77, %v799, 0.0
  %v802 = vsel %vm172, %v800, 0.0
  %803 = vadd.xlane.f32.xlu0 %v802
  %v804 = vpop.xlane.xlu0 %803
  %v805 = vsel %vm172, %v801, 0.0
  %806 = vadd.xlane.f32.xlu0 %v805
  %v807 = vpop.xlane.xlu0 %806
  %v808 = vmax.f32 %v804, 1e-30
  %v809 = vmax.f32 %v807, 1e-30
  %v810 = vrcp.pop %v808
  %v811 = vrcp.pop %v809
  %v812 = vmul.f32 %v800, %v810
  %v813 = vmul.f32 %v801, %v811
  %v815 = vsel %vm172, %v812, 0
  %v818 = vsel %vm172, %v813, 0
  %820 = vmatprep.subr.mxu0 0.0
  %821 = vmatpush1.msra.mxu0 %v643
  %822 = vmatprep.subr.mxu0 0.0
  %823 = vmatpush1.msra.mxu0 %v648
  %824 = vmatprep.subr.mxu0 0.0
  %825 = vmatpush1.msra.mxu0 0.0
  %826 = vmatprep.subr.mxu0 0.0
  %827 = vmatpush1.msra.mxu0 0.0
  %828 = vmatprep.subr.mxu0 0.0
  %829 = vmatpush1.msra.mxu0 0.0
  %830 = vmatprep.subr.mxu0 0.0
  %831 = vmatpush1.msra.mxu0 0.0
  %832 = vmatprep.subr.mxu0 0.0
  %833 = vmatpush1.msra.mxu0 0.0
  %834 = vmatprep.subr.mxu0 0.0
  %835 = vmatpush1.msra.mxu0 0.0
  %836 = vmatprep.subr.mxu0 0.0
  %837 = vmatpush1.msra.mxu0 0.0
  %838 = vmatprep.subr.mxu0 0.0
  %839 = vmatpush1.msra.mxu0 0.0
  %840 = vmatprep.subr.mxu0 0.0
  %841 = vmatpush1.msra.mxu0 0.0
  %842 = vmatprep.subr.mxu0 0.0
  %843 = vmatpush1.msra.mxu0 0.0
  %844 = vmatprep.subr.mxu0 0.0
  %845 = vmatpush1.msra.mxu0 0.0
  %846 = vmatprep.subr.mxu0 0.0
  %847 = vmatpush1.msra.mxu0 0.0
  %848 = vmatprep.subr.mxu0 0.0
  %849 = vmatpush1.msra.mxu0 0.0
  %850 = vmatprep.subr.mxu0 0.0
  %851 = vmatpush1.msra.mxu0 0.0
  %852 = vmatprep.subr.mxu0 0.0
  %853 = vmatpush1.msra.mxu0 0.0
  %854 = vmatprep.subr.mxu0 0.0
  %855 = vmatpush1.msra.mxu0 0.0
  %856 = vmatprep.subr.mxu0 0.0
  %857 = vmatpush1.msra.mxu0 0.0
  %858 = vmatprep.subr.mxu0 0.0
  %859 = vmatpush1.msra.mxu0 0.0
  %860 = vmatprep.subr.mxu0 0.0
  %861 = vmatpush1.msra.mxu0 0.0
  %862 = vmatprep.subr.mxu0 0.0
  %863 = vmatpush1.msra.mxu0 0.0
  %864 = vmatprep.subr.mxu0 0.0
  %865 = vmatpush1.msra.mxu0 0.0
  %866 = vmatprep.subr.mxu0 0.0
  %867 = vmatpush1.msra.mxu0 0.0
  %868 = vmatprep.subr.mxu0 0.0
  %869 = vmatpush1.msra.mxu0 0.0
  %870 = vmatprep.subr.mxu0 0.0
  %871 = vmatpush1.msra.mxu0 0.0
  %872 = vmatprep.subr.mxu0 0.0
  %873 = vmatpush1.msra.mxu0 0.0
  %874 = vmatprep.subr.mxu0 0.0
  %875 = vmatpush1.msra.mxu0 0.0
  %876 = vmatprep.subr.mxu0 0.0
  %877 = vmatpush1.msra.mxu0 0.0
  %878 = vmatprep.subr.mxu0 0.0
  %879 = vmatpush1.msra.mxu0 0.0
  %880 = vmatprep.subr.mxu0 0.0
  %881 = vmatpush1.msra.mxu0 0.0
  %882 = vmatprep.subr.mxu0 0.0
  %883 = vmatpush1.msra.mxu0 0.0
  %884 = vmatprep.mubr.f32.mxu0 0.0
  %885 = vmatmul.mubr.f32.gmra.mrb[0].mxu0 %v815
  %v886 = vpop.f32.mrb[0].mxu0
  %v887 = vadd.f32 0.0, %v886
  %v888 = vpop.f32.mrb[0].mxu0
  %889 = vmatprep.mubr.f32.mxu0 0.0
  %890 = vmatmul.mubr.f32.gmra.mrb[0].mxu0 %v818
  %v891 = vpop.f32.mrb[0].mxu0
  %v892 = vadd.f32 0.0, %v891
  %v893 = vpop.f32.mrb[0].mxu0
  %894 = vdwg.mxu0
  %895 = vset.pattern.permute.xlu0 3
  %896 = vperm.xlu0 %895, %v724
  %v897 = vpop.permute.xlu0 %896
  %899 = vset.pattern.permute.xlu0 3
  %900 = vperm.xlu0 %899, %v729
  %v901 = vpop.permute.xlu0 %900
  %v903 = vlaneseq
  %v904 = vshrl.u32 %v903, 7
  %v905 = vsub.s32 1, %v904
  %v906 = vrot.slane %v748, %v905
  %v907 = vadd.f32 %v897, %v906
  %v908 = vadd.f32 %v901, %v906
  %vm909 = vcmp.gt.f32.partialorder %v907, 0.0
  %vm910 = vcmp.gt.f32.partialorder %v908, 0.0
  %v911 = vmul.f32 %v907, 0.2
  %v912 = vmul.f32 %v908, 0.2
  %v913 = vsel %vm909, %v907, %v911
  %v914 = vsel %vm910, %v908, %v912
  %v915 = vsel %vm76, %v913, -1e+30
  %v916 = vsel %vm77, %v914, -1e+30
  %v917 = vsel %vm172, %v915, -inf
  %918 = vmax.xlane.f32.xlu0 %v917
  %v919 = vpop.xlane.xlu0 %918
  %v920 = vsel %vm172, %v916, -inf
  %921 = vmax.xlane.f32.xlu0 %v920
  %v922 = vpop.xlane.xlu0 %921
  %v923 = vsub.f32 %v915, %v919
  %v924 = vsub.f32 %v916, %v922
  %v925 = vmul.f32 %v923, 1.442695
  %v926 = vpow.pop %v925
  %v927 = vmul.f32 %v924, 1.442695
  %v928 = vpow.pop %v927
  %v929 = vsel %vm76, %v926, 0.0
  %v930 = vsel %vm77, %v928, 0.0
  %v931 = vsel %vm172, %v929, 0.0
  %932 = vadd.xlane.f32.xlu0 %v931
  %v933 = vpop.xlane.xlu0 %932
  %v934 = vsel %vm172, %v930, 0.0
  %935 = vadd.xlane.f32.xlu0 %v934
  %v936 = vpop.xlane.xlu0 %935
  %v937 = vmax.f32 %v933, 1e-30
  %v938 = vmax.f32 %v936, 1e-30
  %v939 = vrcp.pop %v937
  %v940 = vrcp.pop %v938
  %v941 = vmul.f32 %v929, %v939
  %v942 = vmul.f32 %v930, %v940
  %943 = vrot.lane.b32.xlu0 %v643, 120
  %v944 = vpop.permute.xlu0 %943
  %945 = vrot.lane.b32.xlu0 %v648, 120
  %v946 = vpop.permute.xlu0 %945
  %v950 = vsel %vm172, %v941, 0
  %v953 = vsel %vm172, %v942, 0
  %955 = vmatprep.subr.mxu0 0.0
  %956 = vmatpush1.msra.mxu0 %v944
  %957 = vmatprep.subr.mxu0 0.0
  %958 = vmatpush1.msra.mxu0 %v946
  %959 = vmatprep.subr.mxu0 0.0
  %960 = vmatpush1.msra.mxu0 0.0
  %961 = vmatprep.subr.mxu0 0.0
  %962 = vmatpush1.msra.mxu0 0.0
  %963 = vmatprep.subr.mxu0 0.0
  %964 = vmatpush1.msra.mxu0 0.0
  %965 = vmatprep.subr.mxu0 0.0
  %966 = vmatpush1.msra.mxu0 0.0
  %967 = vmatprep.subr.mxu0 0.0
  %968 = vmatpush1.msra.mxu0 0.0
  %969 = vmatprep.subr.mxu0 0.0
  %970 = vmatpush1.msra.mxu0 0.0
  %971 = vmatprep.subr.mxu0 0.0
  %972 = vmatpush1.msra.mxu0 0.0
  %973 = vmatprep.subr.mxu0 0.0
  %974 = vmatpush1.msra.mxu0 0.0
  %975 = vmatprep.subr.mxu0 0.0
  %976 = vmatpush1.msra.mxu0 0.0
  %977 = vmatprep.subr.mxu0 0.0
  %978 = vmatpush1.msra.mxu0 0.0
  %979 = vmatprep.subr.mxu0 0.0
  %980 = vmatpush1.msra.mxu0 0.0
  %981 = vmatprep.subr.mxu0 0.0
  %982 = vmatpush1.msra.mxu0 0.0
  %983 = vmatprep.subr.mxu0 0.0
  %984 = vmatpush1.msra.mxu0 0.0
  %985 = vmatprep.subr.mxu0 0.0
  %986 = vmatpush1.msra.mxu0 0.0
  %987 = vmatprep.subr.mxu0 0.0
  %988 = vmatpush1.msra.mxu0 0.0
  %989 = vmatprep.subr.mxu0 0.0
  %990 = vmatpush1.msra.mxu0 0.0
  %991 = vmatprep.subr.mxu0 0.0
  %992 = vmatpush1.msra.mxu0 0.0
  %993 = vmatprep.subr.mxu0 0.0
  %994 = vmatpush1.msra.mxu0 0.0
  %995 = vmatprep.subr.mxu0 0.0
  %996 = vmatpush1.msra.mxu0 0.0
  %997 = vmatprep.subr.mxu0 0.0
  %998 = vmatpush1.msra.mxu0 0.0
  %999 = vmatprep.subr.mxu0 0.0
  %1000 = vmatpush1.msra.mxu0 0.0
  %1001 = vmatprep.subr.mxu0 0.0
  %1002 = vmatpush1.msra.mxu0 0.0
  %1003 = vmatprep.subr.mxu0 0.0
  %1004 = vmatpush1.msra.mxu0 0.0
  %1005 = vmatprep.subr.mxu0 0.0
  %1006 = vmatpush1.msra.mxu0 0.0
  %1007 = vmatprep.subr.mxu0 0.0
  %1008 = vmatpush1.msra.mxu0 0.0
  %1009 = vmatprep.subr.mxu0 0.0
  %1010 = vmatpush1.msra.mxu0 0.0
  %1011 = vmatprep.subr.mxu0 0.0
  %1012 = vmatpush1.msra.mxu0 0.0
  %1013 = vmatprep.subr.mxu0 0.0
  %1014 = vmatpush1.msra.mxu0 0.0
  %1015 = vmatprep.subr.mxu0 0.0
  %1016 = vmatpush1.msra.mxu0 0.0
  %1017 = vmatprep.subr.mxu0 0.0
  %1018 = vmatpush1.msra.mxu0 0.0
  %1019 = vmatprep.mubr.f32.mxu0 0.0
  %1020 = vmatmul.mubr.f32.gmra.mrb[0].mxu0 %v950
  %v1021 = vpop.f32.mrb[0].mxu0
  %v1022 = vadd.f32 0.0, %v1021
  %v1023 = vpop.f32.mrb[0].mxu0
  %1024 = vmatprep.mubr.f32.mxu0 0.0
  %1025 = vmatmul.mubr.f32.gmra.mrb[0].mxu0 %v953
  %v1026 = vpop.f32.mrb[0].mxu0
  %v1027 = vadd.f32 0.0, %v1026
  %v1028 = vpop.f32.mrb[0].mxu0
  %1029 = vdwg.mxu0
  %1032 = vrot.lane.b32.xlu0 %v1022, 8
  %v1033 = vpop.permute.xlu0 %1032
  %1034 = vrot.lane.b32.xlu0 %v1027, 8
  %v1035 = vpop.permute.xlu0 %1034
  %v1038 = vsel %vm90, %v887, %v1033
  %v1039 = vsel %vm90, %v892, %v1035
  %v1041 = vlaneseq
  %v1042 = vshrl.u32 %v1041, 7
  %v1043 = vsub.s32 0, %v1042
  %v1044 = vrot.slane %v89, %v1043
  %v1046 = vadd.f32 %v1038, %v1044
  %v1047 = vadd.f32 %v1039, %v1044
  %v1048 = vmax.f32 %v568, 0.0
  %v1049 = vmax.f32 %v569, 0.0
  %v1050 = vmax.f32 %v1046, 0.0
  %v1051 = vmax.f32 %v1047, 0.0
  %v1052 = vld [vmem:[%s9] sm:$0xff]
  %v1053 = vld [vmem:[%s9 + $0x8] sm:$0xff]
  %v1054 = vld [vmem:[%s10] sm:$0xff]
  %v1055 = vld [vmem:[%s10 + $0x8] sm:$0xff]
  %v1056 = vld [vmem:[%s11] sm:$0x1]
  %v1057 = vld [vmem:[%s12] sm:$0xff]
  %v1058 = vld [vmem:[%s12 + $0x8] sm:$0xff]
  %v1059 = vld [vmem:[%s13] sm:$0xff]
  %v1060 = vld [vmem:[%s13 + $0x8] sm:$0xff]
  %v1061 = vld [vmem:[%s14] sm:$0x1]
  %v1062 = vld [vmem:[%s15] sm:$0xff]
  %v1063 = vld [vmem:[%s15 + $0x8] sm:$0xff]
  %v1064 = vld [vmem:[%s16] sm:$0xff]
  %v1065 = vld [vmem:[%s16 + $0x8] sm:$0xff]
  %v1066 = vld [vmem:[%s17] sm:$0x1]
  %v1067 = vld [vmem:[%s18] sm:$0xff]
  %v1068 = vld [vmem:[%s18 + $0x8] sm:$0xff]
  %v1069 = vld [vmem:[%s19] sm:$0xff]
  %v1070 = vld [vmem:[%s19 + $0x8] sm:$0xff]
  %v1071 = vld [vmem:[%s20] sm:$0x1]
  %v1073 = vsel %vm172, %v1050, 0
  %v1076 = vsel %vm172, %v1051, 0
  %1078 = vmatprep.subr.mxu0 0.0
  %1079 = vmatpush1.msra.mxu0 %v1062
  %1080 = vmatprep.subr.mxu0 0.0
  %1081 = vmatpush1.msra.mxu0 %v1063
  %1082 = vmatprep.subr.mxu0 0.0
  %1083 = vmatpush1.msra.mxu0 0.0
  %1084 = vmatprep.subr.mxu0 0.0
  %1085 = vmatpush1.msra.mxu0 0.0
  %1086 = vmatprep.subr.mxu0 0.0
  %1087 = vmatpush1.msra.mxu0 0.0
  %1088 = vmatprep.subr.mxu0 0.0
  %1089 = vmatpush1.msra.mxu0 0.0
  %1090 = vmatprep.subr.mxu0 0.0
  %1091 = vmatpush1.msra.mxu0 0.0
  %1092 = vmatprep.subr.mxu0 0.0
  %1093 = vmatpush1.msra.mxu0 0.0
  %1094 = vmatprep.subr.mxu0 0.0
  %1095 = vmatpush1.msra.mxu0 0.0
  %1096 = vmatprep.subr.mxu0 0.0
  %1097 = vmatpush1.msra.mxu0 0.0
  %1098 = vmatprep.subr.mxu0 0.0
  %1099 = vmatpush1.msra.mxu0 0.0
  %1100 = vmatprep.subr.mxu0 0.0
  %1101 = vmatpush1.msra.mxu0 0.0
  %1102 = vmatprep.subr.mxu0 0.0
  %1103 = vmatpush1.msra.mxu0 0.0
  %1104 = vmatprep.subr.mxu0 0.0
  %1105 = vmatpush1.msra.mxu0 0.0
  %1106 = vmatprep.subr.mxu0 0.0
  %1107 = vmatpush1.msra.mxu0 0.0
  %1108 = vmatprep.subr.mxu0 0.0
  %1109 = vmatpush1.msra.mxu0 0.0
  %1110 = vmatprep.subr.mxu0 0.0
  %1111 = vmatpush1.msra.mxu0 0.0
  %1112 = vmatprep.subr.mxu0 0.0
  %1113 = vmatpush1.msra.mxu0 0.0
  %1114 = vmatprep.subr.mxu0 0.0
  %1115 = vmatpush1.msra.mxu0 0.0
  %1116 = vmatprep.subr.mxu0 0.0
  %1117 = vmatpush1.msra.mxu0 0.0
  %1118 = vmatprep.subr.mxu0 0.0
  %1119 = vmatpush1.msra.mxu0 0.0
  %1120 = vmatprep.subr.mxu0 0.0
  %1121 = vmatpush1.msra.mxu0 0.0
  %1122 = vmatprep.subr.mxu0 0.0
  %1123 = vmatpush1.msra.mxu0 0.0
  %1124 = vmatprep.subr.mxu0 0.0
  %1125 = vmatpush1.msra.mxu0 0.0
  %1126 = vmatprep.subr.mxu0 0.0
  %1127 = vmatpush1.msra.mxu0 0.0
  %1128 = vmatprep.subr.mxu0 0.0
  %1129 = vmatpush1.msra.mxu0 0.0
  %1130 = vmatprep.subr.mxu0 0.0
  %1131 = vmatpush1.msra.mxu0 0.0
  %1132 = vmatprep.subr.mxu0 0.0
  %1133 = vmatpush1.msra.mxu0 0.0
  %1134 = vmatprep.subr.mxu0 0.0
  %1135 = vmatpush1.msra.mxu0 0.0
  %1136 = vmatprep.subr.mxu0 0.0
  %1137 = vmatpush1.msra.mxu0 0.0
  %1138 = vmatprep.subr.mxu0 0.0
  %1139 = vmatpush1.msra.mxu0 0.0
  %1140 = vmatprep.subr.mxu0 0.0
  %1141 = vmatpush1.msra.mxu0 0.0
  %1142 = vmatprep.mubr.f32.mxu0 0.0
  %1143 = vmatmul.mubr.f32.gmra.mrb[0].mxu0 %v1073
  %v1144 = vpop.f32.mrb[0].mxu0
  %v1145 = vadd.f32 0.0, %v1144
  %v1146 = vpop.f32.mrb[0].mxu0
  %1147 = vmatprep.mubr.f32.mxu0 0.0
  %1148 = vmatmul.mubr.f32.gmra.mrb[0].mxu0 %v1076
  %v1149 = vpop.f32.mrb[0].mxu0
  %v1150 = vadd.f32 0.0, %v1149
  %v1151 = vpop.f32.mrb[0].mxu0
  %1152 = vdwg.mxu0
  %v1154 = vsel %vm172, %v1145, 0
  %v1157 = vsel %vm172, %v1150, 0
  %1159 = vmatprep.subr.mxu0 0.0
  %1160 = vmatpush1.msra.mxu0 %v1064
  %1161 = vmatprep.subr.mxu0 0.0
  %1162 = vmatpush1.msra.mxu0 %v1065
  %1163 = vmatprep.subr.mxu0 0.0
  %1164 = vmatpush1.msra.mxu0 0.0
  %1165 = vmatprep.subr.mxu0 0.0
  %1166 = vmatpush1.msra.mxu0 0.0
  %1167 = vmatprep.subr.mxu0 0.0
  %1168 = vmatpush1.msra.mxu0 0.0
  %1169 = vmatprep.subr.mxu0 0.0
  %1170 = vmatpush1.msra.mxu0 0.0
  %1171 = vmatprep.subr.mxu0 0.0
  %1172 = vmatpush1.msra.mxu0 0.0
  %1173 = vmatprep.subr.mxu0 0.0
  %1174 = vmatpush1.msra.mxu0 0.0
  %1175 = vmatprep.subr.mxu0 0.0
  %1176 = vmatpush1.msra.mxu0 0.0
  %1177 = vmatprep.subr.mxu0 0.0
  %1178 = vmatpush1.msra.mxu0 0.0
  %1179 = vmatprep.subr.mxu0 0.0
  %1180 = vmatpush1.msra.mxu0 0.0
  %1181 = vmatprep.subr.mxu0 0.0
  %1182 = vmatpush1.msra.mxu0 0.0
  %1183 = vmatprep.subr.mxu0 0.0
  %1184 = vmatpush1.msra.mxu0 0.0
  %1185 = vmatprep.subr.mxu0 0.0
  %1186 = vmatpush1.msra.mxu0 0.0
  %1187 = vmatprep.subr.mxu0 0.0
  %1188 = vmatpush1.msra.mxu0 0.0
  %1189 = vmatprep.subr.mxu0 0.0
  %1190 = vmatpush1.msra.mxu0 0.0
  %1191 = vmatprep.subr.mxu0 0.0
  %1192 = vmatpush1.msra.mxu0 0.0
  %1193 = vmatprep.subr.mxu0 0.0
  %1194 = vmatpush1.msra.mxu0 0.0
  %1195 = vmatprep.subr.mxu0 0.0
  %1196 = vmatpush1.msra.mxu0 0.0
  %1197 = vmatprep.subr.mxu0 0.0
  %1198 = vmatpush1.msra.mxu0 0.0
  %1199 = vmatprep.subr.mxu0 0.0
  %1200 = vmatpush1.msra.mxu0 0.0
  %1201 = vmatprep.subr.mxu0 0.0
  %1202 = vmatpush1.msra.mxu0 0.0
  %1203 = vmatprep.subr.mxu0 0.0
  %1204 = vmatpush1.msra.mxu0 0.0
  %1205 = vmatprep.subr.mxu0 0.0
  %1206 = vmatpush1.msra.mxu0 0.0
  %1207 = vmatprep.subr.mxu0 0.0
  %1208 = vmatpush1.msra.mxu0 0.0
  %1209 = vmatprep.subr.mxu0 0.0
  %1210 = vmatpush1.msra.mxu0 0.0
  %1211 = vmatprep.subr.mxu0 0.0
  %1212 = vmatpush1.msra.mxu0 0.0
  %1213 = vmatprep.subr.mxu0 0.0
  %1214 = vmatpush1.msra.mxu0 0.0
  %1215 = vmatprep.subr.mxu0 0.0
  %1216 = vmatpush1.msra.mxu0 0.0
  %1217 = vmatprep.subr.mxu0 0.0
  %1218 = vmatpush1.msra.mxu0 0.0
  %1219 = vmatprep.subr.mxu0 0.0
  %1220 = vmatpush1.msra.mxu0 0.0
  %1221 = vmatprep.subr.mxu0 0.0
  %1222 = vmatpush1.msra.mxu0 0.0
  %1223 = vmatprep.mubr.f32.mxu0 0.0
  %1224 = vmatmul.mubr.f32.gmra.mrb[0].mxu0 %v1154
  %v1225 = vpop.f32.mrb[0].mxu0
  %v1226 = vadd.f32 0.0, %v1225
  %v1227 = vpop.f32.mrb[0].mxu0
  %1228 = vmatprep.mubr.f32.mxu0 0.0
  %1229 = vmatmul.mubr.f32.gmra.mrb[0].mxu0 %v1157
  %v1230 = vpop.f32.mrb[0].mxu0
  %v1231 = vadd.f32 0.0, %v1230
  %v1232 = vpop.f32.mrb[0].mxu0
  %1233 = vdwg.mxu0
  %1234 = vxpose.xlu0.b32.start [1/16] %v1226, 128
  %1235 = vxpose.xlu0.b32.cont [2/16] %v1231, 128
  %1236 = vxpose.xlu0.b32.cont [3/16] 0.0, 128
  %1237 = vxpose.xlu0.b32.cont [4/16] 0.0, 128
  %1238 = vxpose.xlu0.b32.cont [5/16] 0.0, 128
  %1239 = vxpose.xlu0.b32.cont [6/16] 0.0, 128
  %1240 = vxpose.xlu0.b32.cont [7/16] 0.0, 128
  %1241 = vxpose.xlu0.b32.cont [8/16] 0.0, 128
  %1242 = vxpose.xlu0.b32.cont [9/16] 0.0, 128
  %1243 = vxpose.xlu0.b32.cont [10/16] 0.0, 128
  %1244 = vxpose.xlu0.b32.cont [11/16] 0.0, 128
  %1245 = vxpose.xlu0.b32.cont [12/16] 0.0, 128
  %1246 = vxpose.xlu0.b32.cont [13/16] 0.0, 128
  %1247 = vxpose.xlu0.b32.cont [14/16] 0.0, 128
  %1248 = vxpose.xlu0.b32.cont [15/16] 0.0, 128
  %1249 = vxpose.xlu0.b32.end [16/16] 0.0, 128
  %v1250 = vpop.trf.xlu0
  %v1251 = vpop.trf.xlu0
  %v1252 = vpop.trf.xlu0
  %v1253 = vpop.trf.xlu0
  %v1254 = vpop.trf.xlu0
  %v1255 = vpop.trf.xlu0
  %v1256 = vpop.trf.xlu0
  %v1257 = vpop.trf.xlu0
  %v1258 = vpop.trf.xlu0
  %v1259 = vpop.trf.xlu0
  %v1260 = vpop.trf.xlu0
  %v1261 = vpop.trf.xlu0
  %v1262 = vpop.trf.xlu0
  %v1263 = vpop.trf.xlu0
  %v1264 = vpop.trf.xlu0
  %v1265 = vpop.trf.xlu0
  %1267 = vset.pattern.permute.xlu0 2
  %1268 = vperm.xlu0 %1267, %v1226
  %v1269 = vpop.permute.xlu0 %1268
  %1272 = vset.pattern.permute.xlu0 2
  %1273 = vperm.xlu0 %1272, %v1231
  %v1274 = vpop.permute.xlu0 %1273
  %v1276 = vlaneseq
  %v1277 = vshrl.u32 %v1276, 7
  %v1278 = vsub.s32 0, %v1277
  %v1279 = vrot.slane %v1250, %v1278
  %v1280 = vadd.f32 %v1269, %v1279
  %v1281 = vadd.f32 %v1274, %v1279
  %vm1282 = vcmp.gt.f32.partialorder %v1280, 0.0
  %vm1283 = vcmp.gt.f32.partialorder %v1281, 0.0
  %v1284 = vmul.f32 %v1280, 0.2
  %v1285 = vmul.f32 %v1281, 0.2
  %v1286 = vsel %vm1282, %v1280, %v1284
  %v1287 = vsel %vm1283, %v1281, %v1285
  %v1288 = vsel %vm76, %v1286, -1e+30
  %v1289 = vsel %vm77, %v1287, -1e+30
  %v1290 = vsel %vm172, %v1288, -inf
  %1291 = vmax.xlane.f32.xlu0 %v1290
  %v1292 = vpop.xlane.xlu0 %1291
  %v1293 = vsel %vm172, %v1289, -inf
  %1294 = vmax.xlane.f32.xlu0 %v1293
  %v1295 = vpop.xlane.xlu0 %1294
  %v1296 = vsub.f32 %v1288, %v1292
  %v1297 = vsub.f32 %v1289, %v1295
  %v1298 = vmul.f32 %v1296, 1.442695
  %v1299 = vpow.pop %v1298
  %v1300 = vmul.f32 %v1297, 1.442695
  %v1301 = vpow.pop %v1300
  %v1302 = vsel %vm76, %v1299, 0.0
  %v1303 = vsel %vm77, %v1301, 0.0
  %v1304 = vsel %vm172, %v1302, 0.0
  %1305 = vadd.xlane.f32.xlu0 %v1304
  %v1306 = vpop.xlane.xlu0 %1305
  %v1307 = vsel %vm172, %v1303, 0.0
  %1308 = vadd.xlane.f32.xlu0 %v1307
  %v1309 = vpop.xlane.xlu0 %1308
  %v1310 = vmax.f32 %v1306, 1e-30
  %v1311 = vmax.f32 %v1309, 1e-30
  %v1312 = vrcp.pop %v1310
  %v1313 = vrcp.pop %v1311
  %v1314 = vmul.f32 %v1302, %v1312
  %v1315 = vmul.f32 %v1303, %v1313
  %v1317 = vsel %vm172, %v1314, 0
  %v1320 = vsel %vm172, %v1315, 0
  %1322 = vmatprep.subr.mxu0 0.0
  %1323 = vmatpush1.msra.mxu0 %v1145
  %1324 = vmatprep.subr.mxu0 0.0
  %1325 = vmatpush1.msra.mxu0 %v1150
  %1326 = vmatprep.subr.mxu0 0.0
  %1327 = vmatpush1.msra.mxu0 0.0
  %1328 = vmatprep.subr.mxu0 0.0
  %1329 = vmatpush1.msra.mxu0 0.0
  %1330 = vmatprep.subr.mxu0 0.0
  %1331 = vmatpush1.msra.mxu0 0.0
  %1332 = vmatprep.subr.mxu0 0.0
  %1333 = vmatpush1.msra.mxu0 0.0
  %1334 = vmatprep.subr.mxu0 0.0
  %1335 = vmatpush1.msra.mxu0 0.0
  %1336 = vmatprep.subr.mxu0 0.0
  %1337 = vmatpush1.msra.mxu0 0.0
  %1338 = vmatprep.subr.mxu0 0.0
  %1339 = vmatpush1.msra.mxu0 0.0
  %1340 = vmatprep.subr.mxu0 0.0
  %1341 = vmatpush1.msra.mxu0 0.0
  %1342 = vmatprep.subr.mxu0 0.0
  %1343 = vmatpush1.msra.mxu0 0.0
  %1344 = vmatprep.subr.mxu0 0.0
  %1345 = vmatpush1.msra.mxu0 0.0
  %1346 = vmatprep.subr.mxu0 0.0
  %1347 = vmatpush1.msra.mxu0 0.0
  %1348 = vmatprep.subr.mxu0 0.0
  %1349 = vmatpush1.msra.mxu0 0.0
  %1350 = vmatprep.subr.mxu0 0.0
  %1351 = vmatpush1.msra.mxu0 0.0
  %1352 = vmatprep.subr.mxu0 0.0
  %1353 = vmatpush1.msra.mxu0 0.0
  %1354 = vmatprep.subr.mxu0 0.0
  %1355 = vmatpush1.msra.mxu0 0.0
  %1356 = vmatprep.subr.mxu0 0.0
  %1357 = vmatpush1.msra.mxu0 0.0
  %1358 = vmatprep.subr.mxu0 0.0
  %1359 = vmatpush1.msra.mxu0 0.0
  %1360 = vmatprep.subr.mxu0 0.0
  %1361 = vmatpush1.msra.mxu0 0.0
  %1362 = vmatprep.subr.mxu0 0.0
  %1363 = vmatpush1.msra.mxu0 0.0
  %1364 = vmatprep.subr.mxu0 0.0
  %1365 = vmatpush1.msra.mxu0 0.0
  %1366 = vmatprep.subr.mxu0 0.0
  %1367 = vmatpush1.msra.mxu0 0.0
  %1368 = vmatprep.subr.mxu0 0.0
  %1369 = vmatpush1.msra.mxu0 0.0
  %1370 = vmatprep.subr.mxu0 0.0
  %1371 = vmatpush1.msra.mxu0 0.0
  %1372 = vmatprep.subr.mxu0 0.0
  %1373 = vmatpush1.msra.mxu0 0.0
  %1374 = vmatprep.subr.mxu0 0.0
  %1375 = vmatpush1.msra.mxu0 0.0
  %1376 = vmatprep.subr.mxu0 0.0
  %1377 = vmatpush1.msra.mxu0 0.0
  %1378 = vmatprep.subr.mxu0 0.0
  %1379 = vmatpush1.msra.mxu0 0.0
  %1380 = vmatprep.subr.mxu0 0.0
  %1381 = vmatpush1.msra.mxu0 0.0
  %1382 = vmatprep.subr.mxu0 0.0
  %1383 = vmatpush1.msra.mxu0 0.0
  %1384 = vmatprep.subr.mxu0 0.0
  %1385 = vmatpush1.msra.mxu0 0.0
  %1386 = vmatprep.mubr.f32.mxu0 0.0
  %1387 = vmatmul.mubr.f32.gmra.mrb[0].mxu0 %v1317
  %v1388 = vpop.f32.mrb[0].mxu0
  %v1389 = vadd.f32 0.0, %v1388
  %v1390 = vpop.f32.mrb[0].mxu0
  %1391 = vmatprep.mubr.f32.mxu0 0.0
  %1392 = vmatmul.mubr.f32.gmra.mrb[0].mxu0 %v1320
  %v1393 = vpop.f32.mrb[0].mxu0
  %v1394 = vadd.f32 0.0, %v1393
  %v1395 = vpop.f32.mrb[0].mxu0
  %1396 = vdwg.mxu0
  %1397 = vset.pattern.permute.xlu0 3
  %1398 = vperm.xlu0 %1397, %v1226
  %v1399 = vpop.permute.xlu0 %1398
  %1401 = vset.pattern.permute.xlu0 3
  %1402 = vperm.xlu0 %1401, %v1231
  %v1403 = vpop.permute.xlu0 %1402
  %v1405 = vlaneseq
  %v1406 = vshrl.u32 %v1405, 7
  %v1407 = vsub.s32 1, %v1406
  %v1408 = vrot.slane %v1250, %v1407
  %v1409 = vadd.f32 %v1399, %v1408
  %v1410 = vadd.f32 %v1403, %v1408
  %vm1411 = vcmp.gt.f32.partialorder %v1409, 0.0
  %vm1412 = vcmp.gt.f32.partialorder %v1410, 0.0
  %v1413 = vmul.f32 %v1409, 0.2
  %v1414 = vmul.f32 %v1410, 0.2
  %v1415 = vsel %vm1411, %v1409, %v1413
  %v1416 = vsel %vm1412, %v1410, %v1414
  %v1417 = vsel %vm76, %v1415, -1e+30
  %v1418 = vsel %vm77, %v1416, -1e+30
  %v1419 = vsel %vm172, %v1417, -inf
  %1420 = vmax.xlane.f32.xlu0 %v1419
  %v1421 = vpop.xlane.xlu0 %1420
  %v1422 = vsel %vm172, %v1418, -inf
  %1423 = vmax.xlane.f32.xlu0 %v1422
  %v1424 = vpop.xlane.xlu0 %1423
  %v1425 = vsub.f32 %v1417, %v1421
  %v1426 = vsub.f32 %v1418, %v1424
  %v1427 = vmul.f32 %v1425, 1.442695
  %v1428 = vpow.pop %v1427
  %v1429 = vmul.f32 %v1426, 1.442695
  %v1430 = vpow.pop %v1429
  %v1431 = vsel %vm76, %v1428, 0.0
  %v1432 = vsel %vm77, %v1430, 0.0
  %v1433 = vsel %vm172, %v1431, 0.0
  %1434 = vadd.xlane.f32.xlu0 %v1433
  %v1435 = vpop.xlane.xlu0 %1434
  %v1436 = vsel %vm172, %v1432, 0.0
  %1437 = vadd.xlane.f32.xlu0 %v1436
  %v1438 = vpop.xlane.xlu0 %1437
  %v1439 = vmax.f32 %v1435, 1e-30
  %v1440 = vmax.f32 %v1438, 1e-30
  %v1441 = vrcp.pop %v1439
  %v1442 = vrcp.pop %v1440
  %v1443 = vmul.f32 %v1431, %v1441
  %v1444 = vmul.f32 %v1432, %v1442
  %1445 = vrot.lane.b32.xlu0 %v1145, 120
  %v1446 = vpop.permute.xlu0 %1445
  %1447 = vrot.lane.b32.xlu0 %v1150, 120
  %v1448 = vpop.permute.xlu0 %1447
  %v1452 = vsel %vm172, %v1443, 0
  %v1455 = vsel %vm172, %v1444, 0
  %1457 = vmatprep.subr.mxu0 0.0
  %1458 = vmatpush1.msra.mxu0 %v1446
  %1459 = vmatprep.subr.mxu0 0.0
  %1460 = vmatpush1.msra.mxu0 %v1448
  %1461 = vmatprep.subr.mxu0 0.0
  %1462 = vmatpush1.msra.mxu0 0.0
  %1463 = vmatprep.subr.mxu0 0.0
  %1464 = vmatpush1.msra.mxu0 0.0
  %1465 = vmatprep.subr.mxu0 0.0
  %1466 = vmatpush1.msra.mxu0 0.0
  %1467 = vmatprep.subr.mxu0 0.0
  %1468 = vmatpush1.msra.mxu0 0.0
  %1469 = vmatprep.subr.mxu0 0.0
  %1470 = vmatpush1.msra.mxu0 0.0
  %1471 = vmatprep.subr.mxu0 0.0
  %1472 = vmatpush1.msra.mxu0 0.0
  %1473 = vmatprep.subr.mxu0 0.0
  %1474 = vmatpush1.msra.mxu0 0.0
  %1475 = vmatprep.subr.mxu0 0.0
  %1476 = vmatpush1.msra.mxu0 0.0
  %1477 = vmatprep.subr.mxu0 0.0
  %1478 = vmatpush1.msra.mxu0 0.0
  %1479 = vmatprep.subr.mxu0 0.0
  %1480 = vmatpush1.msra.mxu0 0.0
  %1481 = vmatprep.subr.mxu0 0.0
  %1482 = vmatpush1.msra.mxu0 0.0
  %1483 = vmatprep.subr.mxu0 0.0
  %1484 = vmatpush1.msra.mxu0 0.0
  %1485 = vmatprep.subr.mxu0 0.0
  %1486 = vmatpush1.msra.mxu0 0.0
  %1487 = vmatprep.subr.mxu0 0.0
  %1488 = vmatpush1.msra.mxu0 0.0
  %1489 = vmatprep.subr.mxu0 0.0
  %1490 = vmatpush1.msra.mxu0 0.0
  %1491 = vmatprep.subr.mxu0 0.0
  %1492 = vmatpush1.msra.mxu0 0.0
  %1493 = vmatprep.subr.mxu0 0.0
  %1494 = vmatpush1.msra.mxu0 0.0
  %1495 = vmatprep.subr.mxu0 0.0
  %1496 = vmatpush1.msra.mxu0 0.0
  %1497 = vmatprep.subr.mxu0 0.0
  %1498 = vmatpush1.msra.mxu0 0.0
  %1499 = vmatprep.subr.mxu0 0.0
  %1500 = vmatpush1.msra.mxu0 0.0
  %1501 = vmatprep.subr.mxu0 0.0
  %1502 = vmatpush1.msra.mxu0 0.0
  %1503 = vmatprep.subr.mxu0 0.0
  %1504 = vmatpush1.msra.mxu0 0.0
  %1505 = vmatprep.subr.mxu0 0.0
  %1506 = vmatpush1.msra.mxu0 0.0
  %1507 = vmatprep.subr.mxu0 0.0
  %1508 = vmatpush1.msra.mxu0 0.0
  %1509 = vmatprep.subr.mxu0 0.0
  %1510 = vmatpush1.msra.mxu0 0.0
  %1511 = vmatprep.subr.mxu0 0.0
  %1512 = vmatpush1.msra.mxu0 0.0
  %1513 = vmatprep.subr.mxu0 0.0
  %1514 = vmatpush1.msra.mxu0 0.0
  %1515 = vmatprep.subr.mxu0 0.0
  %1516 = vmatpush1.msra.mxu0 0.0
  %1517 = vmatprep.subr.mxu0 0.0
  %1518 = vmatpush1.msra.mxu0 0.0
  %1519 = vmatprep.subr.mxu0 0.0
  %1520 = vmatpush1.msra.mxu0 0.0
  %1521 = vmatprep.mubr.f32.mxu0 0.0
  %1522 = vmatmul.mubr.f32.gmra.mrb[0].mxu0 %v1452
  %v1523 = vpop.f32.mrb[0].mxu0
  %v1524 = vadd.f32 0.0, %v1523
  %v1525 = vpop.f32.mrb[0].mxu0
  %1526 = vmatprep.mubr.f32.mxu0 0.0
  %1527 = vmatmul.mubr.f32.gmra.mrb[0].mxu0 %v1455
  %v1528 = vpop.f32.mrb[0].mxu0
  %v1529 = vadd.f32 0.0, %v1528
  %v1530 = vpop.f32.mrb[0].mxu0
  %1531 = vdwg.mxu0
  %1534 = vrot.lane.b32.xlu0 %v1524, 8
  %v1535 = vpop.permute.xlu0 %1534
  %1536 = vrot.lane.b32.xlu0 %v1529, 8
  %v1537 = vpop.permute.xlu0 %1536
  %v1540 = vsel %vm90, %v1389, %v1535
  %v1541 = vsel %vm90, %v1394, %v1537
  %v1543 = vlaneseq
  %v1544 = vshrl.u32 %v1543, 7
  %v1545 = vsub.s32 0, %v1544
  %v1546 = vrot.slane %v1066, %v1545
  %v1548 = vadd.f32 %v1540, %v1546
  %v1549 = vadd.f32 %v1541, %v1546
  %v1551 = vsel %vm172, %v1048, 0
  %v1554 = vsel %vm172, %v1049, 0
  %1556 = vmatprep.subr.mxu0 0.0
  %1557 = vmatpush1.msra.mxu0 %v1067
  %1558 = vmatprep.subr.mxu0 0.0
  %1559 = vmatpush1.msra.mxu0 %v1068
  %1560 = vmatprep.subr.mxu0 0.0
  %1561 = vmatpush1.msra.mxu0 0.0
  %1562 = vmatprep.subr.mxu0 0.0
  %1563 = vmatpush1.msra.mxu0 0.0
  %1564 = vmatprep.subr.mxu0 0.0
  %1565 = vmatpush1.msra.mxu0 0.0
  %1566 = vmatprep.subr.mxu0 0.0
  %1567 = vmatpush1.msra.mxu0 0.0
  %1568 = vmatprep.subr.mxu0 0.0
  %1569 = vmatpush1.msra.mxu0 0.0
  %1570 = vmatprep.subr.mxu0 0.0
  %1571 = vmatpush1.msra.mxu0 0.0
  %1572 = vmatprep.subr.mxu0 0.0
  %1573 = vmatpush1.msra.mxu0 0.0
  %1574 = vmatprep.subr.mxu0 0.0
  %1575 = vmatpush1.msra.mxu0 0.0
  %1576 = vmatprep.subr.mxu0 0.0
  %1577 = vmatpush1.msra.mxu0 0.0
  %1578 = vmatprep.subr.mxu0 0.0
  %1579 = vmatpush1.msra.mxu0 0.0
  %1580 = vmatprep.subr.mxu0 0.0
  %1581 = vmatpush1.msra.mxu0 0.0
  %1582 = vmatprep.subr.mxu0 0.0
  %1583 = vmatpush1.msra.mxu0 0.0
  %1584 = vmatprep.subr.mxu0 0.0
  %1585 = vmatpush1.msra.mxu0 0.0
  %1586 = vmatprep.subr.mxu0 0.0
  %1587 = vmatpush1.msra.mxu0 0.0
  %1588 = vmatprep.subr.mxu0 0.0
  %1589 = vmatpush1.msra.mxu0 0.0
  %1590 = vmatprep.subr.mxu0 0.0
  %1591 = vmatpush1.msra.mxu0 0.0
  %1592 = vmatprep.subr.mxu0 0.0
  %1593 = vmatpush1.msra.mxu0 0.0
  %1594 = vmatprep.subr.mxu0 0.0
  %1595 = vmatpush1.msra.mxu0 0.0
  %1596 = vmatprep.subr.mxu0 0.0
  %1597 = vmatpush1.msra.mxu0 0.0
  %1598 = vmatprep.subr.mxu0 0.0
  %1599 = vmatpush1.msra.mxu0 0.0
  %1600 = vmatprep.subr.mxu0 0.0
  %1601 = vmatpush1.msra.mxu0 0.0
  %1602 = vmatprep.subr.mxu0 0.0
  %1603 = vmatpush1.msra.mxu0 0.0
  %1604 = vmatprep.subr.mxu0 0.0
  %1605 = vmatpush1.msra.mxu0 0.0
  %1606 = vmatprep.subr.mxu0 0.0
  %1607 = vmatpush1.msra.mxu0 0.0
  %1608 = vmatprep.subr.mxu0 0.0
  %1609 = vmatpush1.msra.mxu0 0.0
  %1610 = vmatprep.subr.mxu0 0.0
  %1611 = vmatpush1.msra.mxu0 0.0
  %1612 = vmatprep.subr.mxu0 0.0
  %1613 = vmatpush1.msra.mxu0 0.0
  %1614 = vmatprep.subr.mxu0 0.0
  %1615 = vmatpush1.msra.mxu0 0.0
  %1616 = vmatprep.subr.mxu0 0.0
  %1617 = vmatpush1.msra.mxu0 0.0
  %1618 = vmatprep.subr.mxu0 0.0
  %1619 = vmatpush1.msra.mxu0 0.0
  %1620 = vmatprep.mubr.f32.mxu0 0.0
  %1621 = vmatmul.mubr.f32.gmra.mrb[0].mxu0 %v1551
  %v1622 = vpop.f32.mrb[0].mxu0
  %v1623 = vadd.f32 0.0, %v1622
  %v1624 = vpop.f32.mrb[0].mxu0
  %1625 = vmatprep.mubr.f32.mxu0 0.0
  %1626 = vmatmul.mubr.f32.gmra.mrb[0].mxu0 %v1554
  %v1627 = vpop.f32.mrb[0].mxu0
  %v1628 = vadd.f32 0.0, %v1627
  %v1629 = vpop.f32.mrb[0].mxu0
  %1630 = vdwg.mxu0
  %v1632 = vsel %vm172, %v1623, 0
  %v1635 = vsel %vm172, %v1628, 0
  %1637 = vmatprep.subr.mxu0 0.0
  %1638 = vmatpush1.msra.mxu0 %v1069
  %1639 = vmatprep.subr.mxu0 0.0
  %1640 = vmatpush1.msra.mxu0 %v1070
  %1641 = vmatprep.subr.mxu0 0.0
  %1642 = vmatpush1.msra.mxu0 0.0
  %1643 = vmatprep.subr.mxu0 0.0
  %1644 = vmatpush1.msra.mxu0 0.0
  %1645 = vmatprep.subr.mxu0 0.0
  %1646 = vmatpush1.msra.mxu0 0.0
  %1647 = vmatprep.subr.mxu0 0.0
  %1648 = vmatpush1.msra.mxu0 0.0
  %1649 = vmatprep.subr.mxu0 0.0
  %1650 = vmatpush1.msra.mxu0 0.0
  %1651 = vmatprep.subr.mxu0 0.0
  %1652 = vmatpush1.msra.mxu0 0.0
  %1653 = vmatprep.subr.mxu0 0.0
  %1654 = vmatpush1.msra.mxu0 0.0
  %1655 = vmatprep.subr.mxu0 0.0
  %1656 = vmatpush1.msra.mxu0 0.0
  %1657 = vmatprep.subr.mxu0 0.0
  %1658 = vmatpush1.msra.mxu0 0.0
  %1659 = vmatprep.subr.mxu0 0.0
  %1660 = vmatpush1.msra.mxu0 0.0
  %1661 = vmatprep.subr.mxu0 0.0
  %1662 = vmatpush1.msra.mxu0 0.0
  %1663 = vmatprep.subr.mxu0 0.0
  %1664 = vmatpush1.msra.mxu0 0.0
  %1665 = vmatprep.subr.mxu0 0.0
  %1666 = vmatpush1.msra.mxu0 0.0
  %1667 = vmatprep.subr.mxu0 0.0
  %1668 = vmatpush1.msra.mxu0 0.0
  %1669 = vmatprep.subr.mxu0 0.0
  %1670 = vmatpush1.msra.mxu0 0.0
  %1671 = vmatprep.subr.mxu0 0.0
  %1672 = vmatpush1.msra.mxu0 0.0
  %1673 = vmatprep.subr.mxu0 0.0
  %1674 = vmatpush1.msra.mxu0 0.0
  %1675 = vmatprep.subr.mxu0 0.0
  %1676 = vmatpush1.msra.mxu0 0.0
  %1677 = vmatprep.subr.mxu0 0.0
  %1678 = vmatpush1.msra.mxu0 0.0
  %1679 = vmatprep.subr.mxu0 0.0
  %1680 = vmatpush1.msra.mxu0 0.0
  %1681 = vmatprep.subr.mxu0 0.0
  %1682 = vmatpush1.msra.mxu0 0.0
  %1683 = vmatprep.subr.mxu0 0.0
  %1684 = vmatpush1.msra.mxu0 0.0
  %1685 = vmatprep.subr.mxu0 0.0
  %1686 = vmatpush1.msra.mxu0 0.0
  %1687 = vmatprep.subr.mxu0 0.0
  %1688 = vmatpush1.msra.mxu0 0.0
  %1689 = vmatprep.subr.mxu0 0.0
  %1690 = vmatpush1.msra.mxu0 0.0
  %1691 = vmatprep.subr.mxu0 0.0
  %1692 = vmatpush1.msra.mxu0 0.0
  %1693 = vmatprep.subr.mxu0 0.0
  %1694 = vmatpush1.msra.mxu0 0.0
  %1695 = vmatprep.subr.mxu0 0.0
  %1696 = vmatpush1.msra.mxu0 0.0
  %1697 = vmatprep.subr.mxu0 0.0
  %1698 = vmatpush1.msra.mxu0 0.0
  %1699 = vmatprep.subr.mxu0 0.0
  %1700 = vmatpush1.msra.mxu0 0.0
  %1701 = vmatprep.mubr.f32.mxu0 0.0
  %1702 = vmatmul.mubr.f32.gmra.mrb[0].mxu0 %v1632
  %v1703 = vpop.f32.mrb[0].mxu0
  %v1704 = vadd.f32 0.0, %v1703
  %v1705 = vpop.f32.mrb[0].mxu0
  %1706 = vmatprep.mubr.f32.mxu0 0.0
  %1707 = vmatmul.mubr.f32.gmra.mrb[0].mxu0 %v1635
  %v1708 = vpop.f32.mrb[0].mxu0
  %v1709 = vadd.f32 0.0, %v1708
  %v1710 = vpop.f32.mrb[0].mxu0
  %1711 = vdwg.mxu0
  %1712 = vxpose.xlu0.b32.start [1/16] %v1704, 128
  %1713 = vxpose.xlu0.b32.cont [2/16] %v1709, 128
  %1714 = vxpose.xlu0.b32.cont [3/16] 0.0, 128
  %1715 = vxpose.xlu0.b32.cont [4/16] 0.0, 128
  %1716 = vxpose.xlu0.b32.cont [5/16] 0.0, 128
  %1717 = vxpose.xlu0.b32.cont [6/16] 0.0, 128
  %1718 = vxpose.xlu0.b32.cont [7/16] 0.0, 128
  %1719 = vxpose.xlu0.b32.cont [8/16] 0.0, 128
  %1720 = vxpose.xlu0.b32.cont [9/16] 0.0, 128
  %1721 = vxpose.xlu0.b32.cont [10/16] 0.0, 128
  %1722 = vxpose.xlu0.b32.cont [11/16] 0.0, 128
  %1723 = vxpose.xlu0.b32.cont [12/16] 0.0, 128
  %1724 = vxpose.xlu0.b32.cont [13/16] 0.0, 128
  %1725 = vxpose.xlu0.b32.cont [14/16] 0.0, 128
  %1726 = vxpose.xlu0.b32.cont [15/16] 0.0, 128
  %1727 = vxpose.xlu0.b32.end [16/16] 0.0, 128
  %v1728 = vpop.trf.xlu0
  %v1729 = vpop.trf.xlu0
  %v1730 = vpop.trf.xlu0
  %v1731 = vpop.trf.xlu0
  %v1732 = vpop.trf.xlu0
  %v1733 = vpop.trf.xlu0
  %v1734 = vpop.trf.xlu0
  %v1735 = vpop.trf.xlu0
  %v1736 = vpop.trf.xlu0
  %v1737 = vpop.trf.xlu0
  %v1738 = vpop.trf.xlu0
  %v1739 = vpop.trf.xlu0
  %v1740 = vpop.trf.xlu0
  %v1741 = vpop.trf.xlu0
  %v1742 = vpop.trf.xlu0
  %v1743 = vpop.trf.xlu0
  %1745 = vset.pattern.permute.xlu0 2
  %1746 = vperm.xlu0 %1745, %v1704
  %v1747 = vpop.permute.xlu0 %1746
  %1750 = vset.pattern.permute.xlu0 2
  %1751 = vperm.xlu0 %1750, %v1709
  %v1752 = vpop.permute.xlu0 %1751
  %v1754 = vlaneseq
  %v1755 = vshrl.u32 %v1754, 7
  %v1756 = vsub.s32 0, %v1755
  %v1757 = vrot.slane %v1728, %v1756
  %v1758 = vadd.f32 %v1747, %v1757
  %v1759 = vadd.f32 %v1752, %v1757
  %vm1760 = vcmp.gt.f32.partialorder %v1758, 0.0
  %vm1761 = vcmp.gt.f32.partialorder %v1759, 0.0
  %v1762 = vmul.f32 %v1758, 0.2
  %v1763 = vmul.f32 %v1759, 0.2
  %v1764 = vsel %vm1760, %v1758, %v1762
  %v1765 = vsel %vm1761, %v1759, %v1763
  %v1766 = vsel %vm76, %v1764, -1e+30
  %v1767 = vsel %vm77, %v1765, -1e+30
  %v1768 = vsel %vm172, %v1766, -inf
  %1769 = vmax.xlane.f32.xlu0 %v1768
  %v1770 = vpop.xlane.xlu0 %1769
  %v1771 = vsel %vm172, %v1767, -inf
  %1772 = vmax.xlane.f32.xlu0 %v1771
  %v1773 = vpop.xlane.xlu0 %1772
  %v1774 = vsub.f32 %v1766, %v1770
  %v1775 = vsub.f32 %v1767, %v1773
  %v1776 = vmul.f32 %v1774, 1.442695
  %v1777 = vpow.pop %v1776
  %v1778 = vmul.f32 %v1775, 1.442695
  %v1779 = vpow.pop %v1778
  %v1780 = vsel %vm76, %v1777, 0.0
  %v1781 = vsel %vm77, %v1779, 0.0
  %v1782 = vsel %vm172, %v1780, 0.0
  %1783 = vadd.xlane.f32.xlu0 %v1782
  %v1784 = vpop.xlane.xlu0 %1783
  %v1785 = vsel %vm172, %v1781, 0.0
  %1786 = vadd.xlane.f32.xlu0 %v1785
  %v1787 = vpop.xlane.xlu0 %1786
  %v1788 = vmax.f32 %v1784, 1e-30
  %v1789 = vmax.f32 %v1787, 1e-30
  %v1790 = vrcp.pop %v1788
  %v1791 = vrcp.pop %v1789
  %v1792 = vmul.f32 %v1780, %v1790
  %v1793 = vmul.f32 %v1781, %v1791
  %v1795 = vsel %vm172, %v1792, 0
  %v1798 = vsel %vm172, %v1793, 0
  %1800 = vmatprep.subr.mxu0 0.0
  %1801 = vmatpush1.msra.mxu0 %v1623
  %1802 = vmatprep.subr.mxu0 0.0
  %1803 = vmatpush1.msra.mxu0 %v1628
  %1804 = vmatprep.subr.mxu0 0.0
  %1805 = vmatpush1.msra.mxu0 0.0
  %1806 = vmatprep.subr.mxu0 0.0
  %1807 = vmatpush1.msra.mxu0 0.0
  %1808 = vmatprep.subr.mxu0 0.0
  %1809 = vmatpush1.msra.mxu0 0.0
  %1810 = vmatprep.subr.mxu0 0.0
  %1811 = vmatpush1.msra.mxu0 0.0
  %1812 = vmatprep.subr.mxu0 0.0
  %1813 = vmatpush1.msra.mxu0 0.0
  %1814 = vmatprep.subr.mxu0 0.0
  %1815 = vmatpush1.msra.mxu0 0.0
  %1816 = vmatprep.subr.mxu0 0.0
  %1817 = vmatpush1.msra.mxu0 0.0
  %1818 = vmatprep.subr.mxu0 0.0
  %1819 = vmatpush1.msra.mxu0 0.0
  %1820 = vmatprep.subr.mxu0 0.0
  %1821 = vmatpush1.msra.mxu0 0.0
  %1822 = vmatprep.subr.mxu0 0.0
  %1823 = vmatpush1.msra.mxu0 0.0
  %1824 = vmatprep.subr.mxu0 0.0
  %1825 = vmatpush1.msra.mxu0 0.0
  %1826 = vmatprep.subr.mxu0 0.0
  %1827 = vmatpush1.msra.mxu0 0.0
  %1828 = vmatprep.subr.mxu0 0.0
  %1829 = vmatpush1.msra.mxu0 0.0
  %1830 = vmatprep.subr.mxu0 0.0
  %1831 = vmatpush1.msra.mxu0 0.0
  %1832 = vmatprep.subr.mxu0 0.0
  %1833 = vmatpush1.msra.mxu0 0.0
  %1834 = vmatprep.subr.mxu0 0.0
  %1835 = vmatpush1.msra.mxu0 0.0
  %1836 = vmatprep.subr.mxu0 0.0
  %1837 = vmatpush1.msra.mxu0 0.0
  %1838 = vmatprep.subr.mxu0 0.0
  %1839 = vmatpush1.msra.mxu0 0.0
  %1840 = vmatprep.subr.mxu0 0.0
  %1841 = vmatpush1.msra.mxu0 0.0
  %1842 = vmatprep.subr.mxu0 0.0
  %1843 = vmatpush1.msra.mxu0 0.0
  %1844 = vmatprep.subr.mxu0 0.0
  %1845 = vmatpush1.msra.mxu0 0.0
  %1846 = vmatprep.subr.mxu0 0.0
  %1847 = vmatpush1.msra.mxu0 0.0
  %1848 = vmatprep.subr.mxu0 0.0
  %1849 = vmatpush1.msra.mxu0 0.0
  %1850 = vmatprep.subr.mxu0 0.0
  %1851 = vmatpush1.msra.mxu0 0.0
  %1852 = vmatprep.subr.mxu0 0.0
  %1853 = vmatpush1.msra.mxu0 0.0
  %1854 = vmatprep.subr.mxu0 0.0
  %1855 = vmatpush1.msra.mxu0 0.0
  %1856 = vmatprep.subr.mxu0 0.0
  %1857 = vmatpush1.msra.mxu0 0.0
  %1858 = vmatprep.subr.mxu0 0.0
  %1859 = vmatpush1.msra.mxu0 0.0
  %1860 = vmatprep.subr.mxu0 0.0
  %1861 = vmatpush1.msra.mxu0 0.0
  %1862 = vmatprep.subr.mxu0 0.0
  %1863 = vmatpush1.msra.mxu0 0.0
  %1864 = vmatprep.mubr.f32.mxu0 0.0
  %1865 = vmatmul.mubr.f32.gmra.mrb[0].mxu0 %v1795
  %v1866 = vpop.f32.mrb[0].mxu0
  %v1867 = vadd.f32 0.0, %v1866
  %v1868 = vpop.f32.mrb[0].mxu0
  %1869 = vmatprep.mubr.f32.mxu0 0.0
  %1870 = vmatmul.mubr.f32.gmra.mrb[0].mxu0 %v1798
  %v1871 = vpop.f32.mrb[0].mxu0
  %v1872 = vadd.f32 0.0, %v1871
  %v1873 = vpop.f32.mrb[0].mxu0
  %1874 = vdwg.mxu0
  %1875 = vset.pattern.permute.xlu0 3
  %1876 = vperm.xlu0 %1875, %v1704
  %v1877 = vpop.permute.xlu0 %1876
  %1879 = vset.pattern.permute.xlu0 3
  %1880 = vperm.xlu0 %1879, %v1709
  %v1881 = vpop.permute.xlu0 %1880
  %v1883 = vlaneseq
  %v1884 = vshrl.u32 %v1883, 7
  %v1885 = vsub.s32 1, %v1884
  %v1886 = vrot.slane %v1728, %v1885
  %v1887 = vadd.f32 %v1877, %v1886
  %v1888 = vadd.f32 %v1881, %v1886
  %vm1889 = vcmp.gt.f32.partialorder %v1887, 0.0
  %vm1890 = vcmp.gt.f32.partialorder %v1888, 0.0
  %v1891 = vmul.f32 %v1887, 0.2
  %v1892 = vmul.f32 %v1888, 0.2
  %v1893 = vsel %vm1889, %v1887, %v1891
  %v1894 = vsel %vm1890, %v1888, %v1892
  %v1895 = vsel %vm76, %v1893, -1e+30
  %v1896 = vsel %vm77, %v1894, -1e+30
  %v1897 = vsel %vm172, %v1895, -inf
  %1898 = vmax.xlane.f32.xlu0 %v1897
  %v1899 = vpop.xlane.xlu0 %1898
  %v1900 = vsel %vm172, %v1896, -inf
  %1901 = vmax.xlane.f32.xlu0 %v1900
  %v1902 = vpop.xlane.xlu0 %1901
  %v1903 = vsub.f32 %v1895, %v1899
  %v1904 = vsub.f32 %v1896, %v1902
  %v1905 = vmul.f32 %v1903, 1.442695
  %v1906 = vpow.pop %v1905
  %v1907 = vmul.f32 %v1904, 1.442695
  %v1908 = vpow.pop %v1907
  %v1909 = vsel %vm76, %v1906, 0.0
  %v1910 = vsel %vm77, %v1908, 0.0
  %v1911 = vsel %vm172, %v1909, 0.0
  %1912 = vadd.xlane.f32.xlu0 %v1911
  %v1913 = vpop.xlane.xlu0 %1912
  %v1914 = vsel %vm172, %v1910, 0.0
  %1915 = vadd.xlane.f32.xlu0 %v1914
  %v1916 = vpop.xlane.xlu0 %1915
  %v1917 = vmax.f32 %v1913, 1e-30
  %v1918 = vmax.f32 %v1916, 1e-30
  %v1919 = vrcp.pop %v1917
  %v1920 = vrcp.pop %v1918
  %v1921 = vmul.f32 %v1909, %v1919
  %v1922 = vmul.f32 %v1910, %v1920
  %1923 = vrot.lane.b32.xlu0 %v1623, 120
  %v1924 = vpop.permute.xlu0 %1923
  %1925 = vrot.lane.b32.xlu0 %v1628, 120
  %v1926 = vpop.permute.xlu0 %1925
  %v1930 = vsel %vm172, %v1921, 0
  %v1933 = vsel %vm172, %v1922, 0
  %1935 = vmatprep.subr.mxu0 0.0
  %1936 = vmatpush1.msra.mxu0 %v1924
  %1937 = vmatprep.subr.mxu0 0.0
  %1938 = vmatpush1.msra.mxu0 %v1926
  %1939 = vmatprep.subr.mxu0 0.0
  %1940 = vmatpush1.msra.mxu0 0.0
  %1941 = vmatprep.subr.mxu0 0.0
  %1942 = vmatpush1.msra.mxu0 0.0
  %1943 = vmatprep.subr.mxu0 0.0
  %1944 = vmatpush1.msra.mxu0 0.0
  %1945 = vmatprep.subr.mxu0 0.0
  %1946 = vmatpush1.msra.mxu0 0.0
  %1947 = vmatprep.subr.mxu0 0.0
  %1948 = vmatpush1.msra.mxu0 0.0
  %1949 = vmatprep.subr.mxu0 0.0
  %1950 = vmatpush1.msra.mxu0 0.0
  %1951 = vmatprep.subr.mxu0 0.0
  %1952 = vmatpush1.msra.mxu0 0.0
  %1953 = vmatprep.subr.mxu0 0.0
  %1954 = vmatpush1.msra.mxu0 0.0
  %1955 = vmatprep.subr.mxu0 0.0
  %1956 = vmatpush1.msra.mxu0 0.0
  %1957 = vmatprep.subr.mxu0 0.0
  %1958 = vmatpush1.msra.mxu0 0.0
  %1959 = vmatprep.subr.mxu0 0.0
  %1960 = vmatpush1.msra.mxu0 0.0
  %1961 = vmatprep.subr.mxu0 0.0
  %1962 = vmatpush1.msra.mxu0 0.0
  %1963 = vmatprep.subr.mxu0 0.0
  %1964 = vmatpush1.msra.mxu0 0.0
  %1965 = vmatprep.subr.mxu0 0.0
  %1966 = vmatpush1.msra.mxu0 0.0
  %1967 = vmatprep.subr.mxu0 0.0
  %1968 = vmatpush1.msra.mxu0 0.0
  %1969 = vmatprep.subr.mxu0 0.0
  %1970 = vmatpush1.msra.mxu0 0.0
  %1971 = vmatprep.subr.mxu0 0.0
  %1972 = vmatpush1.msra.mxu0 0.0
  %1973 = vmatprep.subr.mxu0 0.0
  %1974 = vmatpush1.msra.mxu0 0.0
  %1975 = vmatprep.subr.mxu0 0.0
  %1976 = vmatpush1.msra.mxu0 0.0
  %1977 = vmatprep.subr.mxu0 0.0
  %1978 = vmatpush1.msra.mxu0 0.0
  %1979 = vmatprep.subr.mxu0 0.0
  %1980 = vmatpush1.msra.mxu0 0.0
  %1981 = vmatprep.subr.mxu0 0.0
  %1982 = vmatpush1.msra.mxu0 0.0
  %1983 = vmatprep.subr.mxu0 0.0
  %1984 = vmatpush1.msra.mxu0 0.0
  %1985 = vmatprep.subr.mxu0 0.0
  %1986 = vmatpush1.msra.mxu0 0.0
  %1987 = vmatprep.subr.mxu0 0.0
  %1988 = vmatpush1.msra.mxu0 0.0
  %1989 = vmatprep.subr.mxu0 0.0
  %1990 = vmatpush1.msra.mxu0 0.0
  %1991 = vmatprep.subr.mxu0 0.0
  %1992 = vmatpush1.msra.mxu0 0.0
  %1993 = vmatprep.subr.mxu0 0.0
  %1994 = vmatpush1.msra.mxu0 0.0
  %1995 = vmatprep.subr.mxu0 0.0
  %1996 = vmatpush1.msra.mxu0 0.0
  %1997 = vmatprep.subr.mxu0 0.0
  %1998 = vmatpush1.msra.mxu0 0.0
  %1999 = vmatprep.mubr.f32.mxu0 0.0
  %2000 = vmatmul.mubr.f32.gmra.mrb[0].mxu0 %v1930
  %v2001 = vpop.f32.mrb[0].mxu0
  %v2002 = vadd.f32 0.0, %v2001
  %v2003 = vpop.f32.mrb[0].mxu0
  %2004 = vmatprep.mubr.f32.mxu0 0.0
  %2005 = vmatmul.mubr.f32.gmra.mrb[0].mxu0 %v1933
  %v2006 = vpop.f32.mrb[0].mxu0
  %v2007 = vadd.f32 0.0, %v2006
  %v2008 = vpop.f32.mrb[0].mxu0
  %2009 = vdwg.mxu0
  %2012 = vrot.lane.b32.xlu0 %v2002, 8
  %v2013 = vpop.permute.xlu0 %2012
  %2014 = vrot.lane.b32.xlu0 %v2007, 8
  %v2015 = vpop.permute.xlu0 %2014
  %v2018 = vsel %vm90, %v1867, %v2013
  %v2019 = vsel %vm90, %v1872, %v2015
  %v2021 = vlaneseq
  %v2022 = vshrl.u32 %v2021, 7
  %v2023 = vsub.s32 0, %v2022
  %v2024 = vrot.slane %v1071, %v2023
  %v2026 = vadd.f32 %v2018, %v2024
  %v2027 = vadd.f32 %v2019, %v2024
  %2028 = vmatprep.subr.mxu0 0.0
  %2029 = vmatpush1.msra.mxu0 %v1052
  %2030 = vmatprep.subr.mxu0 0.0
  %2031 = vmatpush1.msra.mxu0 %v1053
  %2032 = vmatprep.subr.mxu0 0.0
  %2033 = vmatpush1.msra.mxu0 0.0
  %2034 = vmatprep.subr.mxu0 0.0
  %2035 = vmatpush1.msra.mxu0 0.0
  %2036 = vmatprep.subr.mxu0 0.0
  %2037 = vmatpush1.msra.mxu0 0.0
  %2038 = vmatprep.subr.mxu0 0.0
  %2039 = vmatpush1.msra.mxu0 0.0
  %2040 = vmatprep.subr.mxu0 0.0
  %2041 = vmatpush1.msra.mxu0 0.0
  %2042 = vmatprep.subr.mxu0 0.0
  %2043 = vmatpush1.msra.mxu0 0.0
  %2044 = vmatprep.subr.mxu0 0.0
  %2045 = vmatpush1.msra.mxu0 0.0
  %2046 = vmatprep.subr.mxu0 0.0
  %2047 = vmatpush1.msra.mxu0 0.0
  %2048 = vmatprep.subr.mxu0 0.0
  %2049 = vmatpush1.msra.mxu0 0.0
  %2050 = vmatprep.subr.mxu0 0.0
  %2051 = vmatpush1.msra.mxu0 0.0
  %2052 = vmatprep.subr.mxu0 0.0
  %2053 = vmatpush1.msra.mxu0 0.0
  %2054 = vmatprep.subr.mxu0 0.0
  %2055 = vmatpush1.msra.mxu0 0.0
  %2056 = vmatprep.subr.mxu0 0.0
  %2057 = vmatpush1.msra.mxu0 0.0
  %2058 = vmatprep.subr.mxu0 0.0
  %2059 = vmatpush1.msra.mxu0 0.0
  %2060 = vmatprep.subr.mxu0 0.0
  %2061 = vmatpush1.msra.mxu0 0.0
  %2062 = vmatprep.subr.mxu0 0.0
  %2063 = vmatpush1.msra.mxu0 0.0
  %2064 = vmatprep.subr.mxu0 0.0
  %2065 = vmatpush1.msra.mxu0 0.0
  %2066 = vmatprep.subr.mxu0 0.0
  %2067 = vmatpush1.msra.mxu0 0.0
  %2068 = vmatprep.subr.mxu0 0.0
  %2069 = vmatpush1.msra.mxu0 0.0
  %2070 = vmatprep.subr.mxu0 0.0
  %2071 = vmatpush1.msra.mxu0 0.0
  %2072 = vmatprep.subr.mxu0 0.0
  %2073 = vmatpush1.msra.mxu0 0.0
  %2074 = vmatprep.subr.mxu0 0.0
  %2075 = vmatpush1.msra.mxu0 0.0
  %2076 = vmatprep.subr.mxu0 0.0
  %2077 = vmatpush1.msra.mxu0 0.0
  %2078 = vmatprep.subr.mxu0 0.0
  %2079 = vmatpush1.msra.mxu0 0.0
  %2080 = vmatprep.subr.mxu0 0.0
  %2081 = vmatpush1.msra.mxu0 0.0
  %2082 = vmatprep.subr.mxu0 0.0
  %2083 = vmatpush1.msra.mxu0 0.0
  %2084 = vmatprep.subr.mxu0 0.0
  %2085 = vmatpush1.msra.mxu0 0.0
  %2086 = vmatprep.subr.mxu0 0.0
  %2087 = vmatpush1.msra.mxu0 0.0
  %2088 = vmatprep.subr.mxu0 0.0
  %2089 = vmatpush1.msra.mxu0 0.0
  %2090 = vmatprep.subr.mxu0 0.0
  %2091 = vmatpush1.msra.mxu0 0.0
  %2092 = vmatprep.mubr.f32.mxu0 0.0
  %2093 = vmatmul.mubr.f32.gmra.mrb[0].mxu0 %v1551
  %v2094 = vpop.f32.mrb[0].mxu0
  %v2095 = vadd.f32 0.0, %v2094
  %v2096 = vpop.f32.mrb[0].mxu0
  %2097 = vmatprep.mubr.f32.mxu0 0.0
  %2098 = vmatmul.mubr.f32.gmra.mrb[0].mxu0 %v1554
  %v2099 = vpop.f32.mrb[0].mxu0
  %v2100 = vadd.f32 0.0, %v2099
  %v2101 = vpop.f32.mrb[0].mxu0
  %2102 = vdwg.mxu0
  %v2104 = vsel %vm172, %v2095, 0
  %v2107 = vsel %vm172, %v2100, 0
  %2109 = vmatprep.subr.mxu0 0.0
  %2110 = vmatpush1.msra.mxu0 %v1054
  %2111 = vmatprep.subr.mxu0 0.0
  %2112 = vmatpush1.msra.mxu0 %v1055
  %2113 = vmatprep.subr.mxu0 0.0
  %2114 = vmatpush1.msra.mxu0 0.0
  %2115 = vmatprep.subr.mxu0 0.0
  %2116 = vmatpush1.msra.mxu0 0.0
  %2117 = vmatprep.subr.mxu0 0.0
  %2118 = vmatpush1.msra.mxu0 0.0
  %2119 = vmatprep.subr.mxu0 0.0
  %2120 = vmatpush1.msra.mxu0 0.0
  %2121 = vmatprep.subr.mxu0 0.0
  %2122 = vmatpush1.msra.mxu0 0.0
  %2123 = vmatprep.subr.mxu0 0.0
  %2124 = vmatpush1.msra.mxu0 0.0
  %2125 = vmatprep.subr.mxu0 0.0
  %2126 = vmatpush1.msra.mxu0 0.0
  %2127 = vmatprep.subr.mxu0 0.0
  %2128 = vmatpush1.msra.mxu0 0.0
  %2129 = vmatprep.subr.mxu0 0.0
  %2130 = vmatpush1.msra.mxu0 0.0
  %2131 = vmatprep.subr.mxu0 0.0
  %2132 = vmatpush1.msra.mxu0 0.0
  %2133 = vmatprep.subr.mxu0 0.0
  %2134 = vmatpush1.msra.mxu0 0.0
  %2135 = vmatprep.subr.mxu0 0.0
  %2136 = vmatpush1.msra.mxu0 0.0
  %2137 = vmatprep.subr.mxu0 0.0
  %2138 = vmatpush1.msra.mxu0 0.0
  %2139 = vmatprep.subr.mxu0 0.0
  %2140 = vmatpush1.msra.mxu0 0.0
  %2141 = vmatprep.subr.mxu0 0.0
  %2142 = vmatpush1.msra.mxu0 0.0
  %2143 = vmatprep.subr.mxu0 0.0
  %2144 = vmatpush1.msra.mxu0 0.0
  %2145 = vmatprep.subr.mxu0 0.0
  %2146 = vmatpush1.msra.mxu0 0.0
  %2147 = vmatprep.subr.mxu0 0.0
  %2148 = vmatpush1.msra.mxu0 0.0
  %2149 = vmatprep.subr.mxu0 0.0
  %2150 = vmatpush1.msra.mxu0 0.0
  %2151 = vmatprep.subr.mxu0 0.0
  %2152 = vmatpush1.msra.mxu0 0.0
  %2153 = vmatprep.subr.mxu0 0.0
  %2154 = vmatpush1.msra.mxu0 0.0
  %2155 = vmatprep.subr.mxu0 0.0
  %2156 = vmatpush1.msra.mxu0 0.0
  %2157 = vmatprep.subr.mxu0 0.0
  %2158 = vmatpush1.msra.mxu0 0.0
  %2159 = vmatprep.subr.mxu0 0.0
  %2160 = vmatpush1.msra.mxu0 0.0
  %2161 = vmatprep.subr.mxu0 0.0
  %2162 = vmatpush1.msra.mxu0 0.0
  %2163 = vmatprep.subr.mxu0 0.0
  %2164 = vmatpush1.msra.mxu0 0.0
  %2165 = vmatprep.subr.mxu0 0.0
  %2166 = vmatpush1.msra.mxu0 0.0
  %2167 = vmatprep.subr.mxu0 0.0
  %2168 = vmatpush1.msra.mxu0 0.0
  %2169 = vmatprep.subr.mxu0 0.0
  %2170 = vmatpush1.msra.mxu0 0.0
  %2171 = vmatprep.subr.mxu0 0.0
  %2172 = vmatpush1.msra.mxu0 0.0
  %2173 = vmatprep.mubr.f32.mxu0 0.0
  %2174 = vmatmul.mubr.f32.gmra.mrb[0].mxu0 %v2104
  %v2175 = vpop.f32.mrb[0].mxu0
  %v2176 = vadd.f32 0.0, %v2175
  %v2177 = vpop.f32.mrb[0].mxu0
  %2178 = vmatprep.mubr.f32.mxu0 0.0
  %2179 = vmatmul.mubr.f32.gmra.mrb[0].mxu0 %v2107
  %v2180 = vpop.f32.mrb[0].mxu0
  %v2181 = vadd.f32 0.0, %v2180
  %v2182 = vpop.f32.mrb[0].mxu0
  %2183 = vdwg.mxu0
  %2184 = vxpose.xlu0.b32.start [1/16] %v2176, 128
  %2185 = vxpose.xlu0.b32.cont [2/16] %v2181, 128
  %2186 = vxpose.xlu0.b32.cont [3/16] 0.0, 128
  %2187 = vxpose.xlu0.b32.cont [4/16] 0.0, 128
  %2188 = vxpose.xlu0.b32.cont [5/16] 0.0, 128
  %2189 = vxpose.xlu0.b32.cont [6/16] 0.0, 128
  %2190 = vxpose.xlu0.b32.cont [7/16] 0.0, 128
  %2191 = vxpose.xlu0.b32.cont [8/16] 0.0, 128
  %2192 = vxpose.xlu0.b32.cont [9/16] 0.0, 128
  %2193 = vxpose.xlu0.b32.cont [10/16] 0.0, 128
  %2194 = vxpose.xlu0.b32.cont [11/16] 0.0, 128
  %2195 = vxpose.xlu0.b32.cont [12/16] 0.0, 128
  %2196 = vxpose.xlu0.b32.cont [13/16] 0.0, 128
  %2197 = vxpose.xlu0.b32.cont [14/16] 0.0, 128
  %2198 = vxpose.xlu0.b32.cont [15/16] 0.0, 128
  %2199 = vxpose.xlu0.b32.end [16/16] 0.0, 128
  %v2200 = vpop.trf.xlu0
  %v2201 = vpop.trf.xlu0
  %v2202 = vpop.trf.xlu0
  %v2203 = vpop.trf.xlu0
  %v2204 = vpop.trf.xlu0
  %v2205 = vpop.trf.xlu0
  %v2206 = vpop.trf.xlu0
  %v2207 = vpop.trf.xlu0
  %v2208 = vpop.trf.xlu0
  %v2209 = vpop.trf.xlu0
  %v2210 = vpop.trf.xlu0
  %v2211 = vpop.trf.xlu0
  %v2212 = vpop.trf.xlu0
  %v2213 = vpop.trf.xlu0
  %v2214 = vpop.trf.xlu0
  %v2215 = vpop.trf.xlu0
  %2217 = vset.pattern.permute.xlu0 2
  %2218 = vperm.xlu0 %2217, %v2176
  %v2219 = vpop.permute.xlu0 %2218
  %2222 = vset.pattern.permute.xlu0 2
  %2223 = vperm.xlu0 %2222, %v2181
  %v2224 = vpop.permute.xlu0 %2223
  %v2226 = vlaneseq
  %v2227 = vshrl.u32 %v2226, 7
  %v2228 = vsub.s32 0, %v2227
  %v2229 = vrot.slane %v2200, %v2228
  %v2230 = vadd.f32 %v2219, %v2229
  %v2231 = vadd.f32 %v2224, %v2229
  %vm2232 = vcmp.gt.f32.partialorder %v2230, 0.0
  %vm2233 = vcmp.gt.f32.partialorder %v2231, 0.0
  %v2234 = vmul.f32 %v2230, 0.2
  %v2235 = vmul.f32 %v2231, 0.2
  %v2236 = vsel %vm2232, %v2230, %v2234
  %v2237 = vsel %vm2233, %v2231, %v2235
  %v2238 = vsel %vm76, %v2236, -1e+30
  %v2239 = vsel %vm77, %v2237, -1e+30
  %v2240 = vsel %vm172, %v2238, -inf
  %2241 = vmax.xlane.f32.xlu0 %v2240
  %v2242 = vpop.xlane.xlu0 %2241
  %v2243 = vsel %vm172, %v2239, -inf
  %2244 = vmax.xlane.f32.xlu0 %v2243
  %v2245 = vpop.xlane.xlu0 %2244
  %v2246 = vsub.f32 %v2238, %v2242
  %v2247 = vsub.f32 %v2239, %v2245
  %v2248 = vmul.f32 %v2246, 1.442695
  %v2249 = vpow.pop %v2248
  %v2250 = vmul.f32 %v2247, 1.442695
  %v2251 = vpow.pop %v2250
  %v2252 = vsel %vm76, %v2249, 0.0
  %v2253 = vsel %vm77, %v2251, 0.0
  %v2254 = vsel %vm172, %v2252, 0.0
  %2255 = vadd.xlane.f32.xlu0 %v2254
  %v2256 = vpop.xlane.xlu0 %2255
  %v2257 = vsel %vm172, %v2253, 0.0
  %2258 = vadd.xlane.f32.xlu0 %v2257
  %v2259 = vpop.xlane.xlu0 %2258
  %v2260 = vmax.f32 %v2256, 1e-30
  %v2261 = vmax.f32 %v2259, 1e-30
  %v2262 = vrcp.pop %v2260
  %v2263 = vrcp.pop %v2261
  %v2264 = vmul.f32 %v2252, %v2262
  %v2265 = vmul.f32 %v2253, %v2263
  %v2267 = vsel %vm172, %v2264, 0
  %v2270 = vsel %vm172, %v2265, 0
  %2272 = vmatprep.subr.mxu0 0.0
  %2273 = vmatpush1.msra.mxu0 %v2095
  %2274 = vmatprep.subr.mxu0 0.0
  %2275 = vmatpush1.msra.mxu0 %v2100
  %2276 = vmatprep.subr.mxu0 0.0
  %2277 = vmatpush1.msra.mxu0 0.0
  %2278 = vmatprep.subr.mxu0 0.0
  %2279 = vmatpush1.msra.mxu0 0.0
  %2280 = vmatprep.subr.mxu0 0.0
  %2281 = vmatpush1.msra.mxu0 0.0
  %2282 = vmatprep.subr.mxu0 0.0
  %2283 = vmatpush1.msra.mxu0 0.0
  %2284 = vmatprep.subr.mxu0 0.0
  %2285 = vmatpush1.msra.mxu0 0.0
  %2286 = vmatprep.subr.mxu0 0.0
  %2287 = vmatpush1.msra.mxu0 0.0
  %2288 = vmatprep.subr.mxu0 0.0
  %2289 = vmatpush1.msra.mxu0 0.0
  %2290 = vmatprep.subr.mxu0 0.0
  %2291 = vmatpush1.msra.mxu0 0.0
  %2292 = vmatprep.subr.mxu0 0.0
  %2293 = vmatpush1.msra.mxu0 0.0
  %2294 = vmatprep.subr.mxu0 0.0
  %2295 = vmatpush1.msra.mxu0 0.0
  %2296 = vmatprep.subr.mxu0 0.0
  %2297 = vmatpush1.msra.mxu0 0.0
  %2298 = vmatprep.subr.mxu0 0.0
  %2299 = vmatpush1.msra.mxu0 0.0
  %2300 = vmatprep.subr.mxu0 0.0
  %2301 = vmatpush1.msra.mxu0 0.0
  %2302 = vmatprep.subr.mxu0 0.0
  %2303 = vmatpush1.msra.mxu0 0.0
  %2304 = vmatprep.subr.mxu0 0.0
  %2305 = vmatpush1.msra.mxu0 0.0
  %2306 = vmatprep.subr.mxu0 0.0
  %2307 = vmatpush1.msra.mxu0 0.0
  %2308 = vmatprep.subr.mxu0 0.0
  %2309 = vmatpush1.msra.mxu0 0.0
  %2310 = vmatprep.subr.mxu0 0.0
  %2311 = vmatpush1.msra.mxu0 0.0
  %2312 = vmatprep.subr.mxu0 0.0
  %2313 = vmatpush1.msra.mxu0 0.0
  %2314 = vmatprep.subr.mxu0 0.0
  %2315 = vmatpush1.msra.mxu0 0.0
  %2316 = vmatprep.subr.mxu0 0.0
  %2317 = vmatpush1.msra.mxu0 0.0
  %2318 = vmatprep.subr.mxu0 0.0
  %2319 = vmatpush1.msra.mxu0 0.0
  %2320 = vmatprep.subr.mxu0 0.0
  %2321 = vmatpush1.msra.mxu0 0.0
  %2322 = vmatprep.subr.mxu0 0.0
  %2323 = vmatpush1.msra.mxu0 0.0
  %2324 = vmatprep.subr.mxu0 0.0
  %2325 = vmatpush1.msra.mxu0 0.0
  %2326 = vmatprep.subr.mxu0 0.0
  %2327 = vmatpush1.msra.mxu0 0.0
  %2328 = vmatprep.subr.mxu0 0.0
  %2329 = vmatpush1.msra.mxu0 0.0
  %2330 = vmatprep.subr.mxu0 0.0
  %2331 = vmatpush1.msra.mxu0 0.0
  %2332 = vmatprep.subr.mxu0 0.0
  %2333 = vmatpush1.msra.mxu0 0.0
  %2334 = vmatprep.subr.mxu0 0.0
  %2335 = vmatpush1.msra.mxu0 0.0
  %2336 = vmatprep.mubr.f32.mxu0 0.0
  %2337 = vmatmul.mubr.f32.gmra.mrb[0].mxu0 %v2267
  %v2338 = vpop.f32.mrb[0].mxu0
  %v2339 = vadd.f32 0.0, %v2338
  %v2340 = vpop.f32.mrb[0].mxu0
  %2341 = vmatprep.mubr.f32.mxu0 0.0
  %2342 = vmatmul.mubr.f32.gmra.mrb[0].mxu0 %v2270
  %v2343 = vpop.f32.mrb[0].mxu0
  %v2344 = vadd.f32 0.0, %v2343
  %v2345 = vpop.f32.mrb[0].mxu0
  %2346 = vdwg.mxu0
  %2347 = vset.pattern.permute.xlu0 3
  %2348 = vperm.xlu0 %2347, %v2176
  %v2349 = vpop.permute.xlu0 %2348
  %2351 = vset.pattern.permute.xlu0 3
  %2352 = vperm.xlu0 %2351, %v2181
  %v2353 = vpop.permute.xlu0 %2352
  %v2355 = vlaneseq
  %v2356 = vshrl.u32 %v2355, 7
  %v2357 = vsub.s32 1, %v2356
  %v2358 = vrot.slane %v2200, %v2357
  %v2359 = vadd.f32 %v2349, %v2358
  %v2360 = vadd.f32 %v2353, %v2358
  %vm2361 = vcmp.gt.f32.partialorder %v2359, 0.0
  %vm2362 = vcmp.gt.f32.partialorder %v2360, 0.0
  %v2363 = vmul.f32 %v2359, 0.2
  %v2364 = vmul.f32 %v2360, 0.2
  %v2365 = vsel %vm2361, %v2359, %v2363
  %v2366 = vsel %vm2362, %v2360, %v2364
  %v2367 = vsel %vm76, %v2365, -1e+30
  %v2368 = vsel %vm77, %v2366, -1e+30
  %v2369 = vsel %vm172, %v2367, -inf
  %2370 = vmax.xlane.f32.xlu0 %v2369
  %v2371 = vpop.xlane.xlu0 %2370
  %v2372 = vsel %vm172, %v2368, -inf
  %2373 = vmax.xlane.f32.xlu0 %v2372
  %v2374 = vpop.xlane.xlu0 %2373
  %v2375 = vsub.f32 %v2367, %v2371
  %v2376 = vsub.f32 %v2368, %v2374
  %v2377 = vmul.f32 %v2375, 1.442695
  %v2378 = vpow.pop %v2377
  %v2379 = vmul.f32 %v2376, 1.442695
  %v2380 = vpow.pop %v2379
  %v2381 = vsel %vm76, %v2378, 0.0
  %v2382 = vsel %vm77, %v2380, 0.0
  %v2383 = vsel %vm172, %v2381, 0.0
  %2384 = vadd.xlane.f32.xlu0 %v2383
  %v2385 = vpop.xlane.xlu0 %2384
  %v2386 = vsel %vm172, %v2382, 0.0
  %2387 = vadd.xlane.f32.xlu0 %v2386
  %v2388 = vpop.xlane.xlu0 %2387
  %v2389 = vmax.f32 %v2385, 1e-30
  %v2390 = vmax.f32 %v2388, 1e-30
  %v2391 = vrcp.pop %v2389
  %v2392 = vrcp.pop %v2390
  %v2393 = vmul.f32 %v2381, %v2391
  %v2394 = vmul.f32 %v2382, %v2392
  %2395 = vrot.lane.b32.xlu0 %v2095, 120
  %v2396 = vpop.permute.xlu0 %2395
  %2397 = vrot.lane.b32.xlu0 %v2100, 120
  %v2398 = vpop.permute.xlu0 %2397
  %v2402 = vsel %vm172, %v2393, 0
  %v2405 = vsel %vm172, %v2394, 0
  %2407 = vmatprep.subr.mxu0 0.0
  %2408 = vmatpush1.msra.mxu0 %v2396
  %2409 = vmatprep.subr.mxu0 0.0
  %2410 = vmatpush1.msra.mxu0 %v2398
  %2411 = vmatprep.subr.mxu0 0.0
  %2412 = vmatpush1.msra.mxu0 0.0
  %2413 = vmatprep.subr.mxu0 0.0
  %2414 = vmatpush1.msra.mxu0 0.0
  %2415 = vmatprep.subr.mxu0 0.0
  %2416 = vmatpush1.msra.mxu0 0.0
  %2417 = vmatprep.subr.mxu0 0.0
  %2418 = vmatpush1.msra.mxu0 0.0
  %2419 = vmatprep.subr.mxu0 0.0
  %2420 = vmatpush1.msra.mxu0 0.0
  %2421 = vmatprep.subr.mxu0 0.0
  %2422 = vmatpush1.msra.mxu0 0.0
  %2423 = vmatprep.subr.mxu0 0.0
  %2424 = vmatpush1.msra.mxu0 0.0
  %2425 = vmatprep.subr.mxu0 0.0
  %2426 = vmatpush1.msra.mxu0 0.0
  %2427 = vmatprep.subr.mxu0 0.0
  %2428 = vmatpush1.msra.mxu0 0.0
  %2429 = vmatprep.subr.mxu0 0.0
  %2430 = vmatpush1.msra.mxu0 0.0
  %2431 = vmatprep.subr.mxu0 0.0
  %2432 = vmatpush1.msra.mxu0 0.0
  %2433 = vmatprep.subr.mxu0 0.0
  %2434 = vmatpush1.msra.mxu0 0.0
  %2435 = vmatprep.subr.mxu0 0.0
  %2436 = vmatpush1.msra.mxu0 0.0
  %2437 = vmatprep.subr.mxu0 0.0
  %2438 = vmatpush1.msra.mxu0 0.0
  %2439 = vmatprep.subr.mxu0 0.0
  %2440 = vmatpush1.msra.mxu0 0.0
  %2441 = vmatprep.subr.mxu0 0.0
  %2442 = vmatpush1.msra.mxu0 0.0
  %2443 = vmatprep.subr.mxu0 0.0
  %2444 = vmatpush1.msra.mxu0 0.0
  %2445 = vmatprep.subr.mxu0 0.0
  %2446 = vmatpush1.msra.mxu0 0.0
  %2447 = vmatprep.subr.mxu0 0.0
  %2448 = vmatpush1.msra.mxu0 0.0
  %2449 = vmatprep.subr.mxu0 0.0
  %2450 = vmatpush1.msra.mxu0 0.0
  %2451 = vmatprep.subr.mxu0 0.0
  %2452 = vmatpush1.msra.mxu0 0.0
  %2453 = vmatprep.subr.mxu0 0.0
  %2454 = vmatpush1.msra.mxu0 0.0
  %2455 = vmatprep.subr.mxu0 0.0
  %2456 = vmatpush1.msra.mxu0 0.0
  %2457 = vmatprep.subr.mxu0 0.0
  %2458 = vmatpush1.msra.mxu0 0.0
  %2459 = vmatprep.subr.mxu0 0.0
  %2460 = vmatpush1.msra.mxu0 0.0
  %2461 = vmatprep.subr.mxu0 0.0
  %2462 = vmatpush1.msra.mxu0 0.0
  %2463 = vmatprep.subr.mxu0 0.0
  %2464 = vmatpush1.msra.mxu0 0.0
  %2465 = vmatprep.subr.mxu0 0.0
  %2466 = vmatpush1.msra.mxu0 0.0
  %2467 = vmatprep.subr.mxu0 0.0
  %2468 = vmatpush1.msra.mxu0 0.0
  %2469 = vmatprep.subr.mxu0 0.0
  %2470 = vmatpush1.msra.mxu0 0.0
  %2471 = vmatprep.mubr.f32.mxu0 0.0
  %2472 = vmatmul.mubr.f32.gmra.mrb[0].mxu0 %v2402
  %v2473 = vpop.f32.mrb[0].mxu0
  %v2474 = vadd.f32 0.0, %v2473
  %v2475 = vpop.f32.mrb[0].mxu0
  %2476 = vmatprep.mubr.f32.mxu0 0.0
  %2477 = vmatmul.mubr.f32.gmra.mrb[0].mxu0 %v2405
  %v2478 = vpop.f32.mrb[0].mxu0
  %v2479 = vadd.f32 0.0, %v2478
  %v2480 = vpop.f32.mrb[0].mxu0
  %2481 = vdwg.mxu0
  %2484 = vrot.lane.b32.xlu0 %v2474, 8
  %v2485 = vpop.permute.xlu0 %2484
  %2486 = vrot.lane.b32.xlu0 %v2479, 8
  %v2487 = vpop.permute.xlu0 %2486
  %v2490 = vsel %vm90, %v2339, %v2485
  %v2491 = vsel %vm90, %v2344, %v2487
  %v2493 = vlaneseq
  %v2494 = vshrl.u32 %v2493, 7
  %v2495 = vsub.s32 0, %v2494
  %v2496 = vrot.slane %v1056, %v2495
  %v2498 = vadd.f32 %v2490, %v2496
  %v2499 = vadd.f32 %v2491, %v2496
  %2500 = vmatprep.subr.mxu0 0.0
  %2501 = vmatpush1.msra.mxu0 %v1057
  %2502 = vmatprep.subr.mxu0 0.0
  %2503 = vmatpush1.msra.mxu0 %v1058
  %2504 = vmatprep.subr.mxu0 0.0
  %2505 = vmatpush1.msra.mxu0 0.0
  %2506 = vmatprep.subr.mxu0 0.0
  %2507 = vmatpush1.msra.mxu0 0.0
  %2508 = vmatprep.subr.mxu0 0.0
  %2509 = vmatpush1.msra.mxu0 0.0
  %2510 = vmatprep.subr.mxu0 0.0
  %2511 = vmatpush1.msra.mxu0 0.0
  %2512 = vmatprep.subr.mxu0 0.0
  %2513 = vmatpush1.msra.mxu0 0.0
  %2514 = vmatprep.subr.mxu0 0.0
  %2515 = vmatpush1.msra.mxu0 0.0
  %2516 = vmatprep.subr.mxu0 0.0
  %2517 = vmatpush1.msra.mxu0 0.0
  %2518 = vmatprep.subr.mxu0 0.0
  %2519 = vmatpush1.msra.mxu0 0.0
  %2520 = vmatprep.subr.mxu0 0.0
  %2521 = vmatpush1.msra.mxu0 0.0
  %2522 = vmatprep.subr.mxu0 0.0
  %2523 = vmatpush1.msra.mxu0 0.0
  %2524 = vmatprep.subr.mxu0 0.0
  %2525 = vmatpush1.msra.mxu0 0.0
  %2526 = vmatprep.subr.mxu0 0.0
  %2527 = vmatpush1.msra.mxu0 0.0
  %2528 = vmatprep.subr.mxu0 0.0
  %2529 = vmatpush1.msra.mxu0 0.0
  %2530 = vmatprep.subr.mxu0 0.0
  %2531 = vmatpush1.msra.mxu0 0.0
  %2532 = vmatprep.subr.mxu0 0.0
  %2533 = vmatpush1.msra.mxu0 0.0
  %2534 = vmatprep.subr.mxu0 0.0
  %2535 = vmatpush1.msra.mxu0 0.0
  %2536 = vmatprep.subr.mxu0 0.0
  %2537 = vmatpush1.msra.mxu0 0.0
  %2538 = vmatprep.subr.mxu0 0.0
  %2539 = vmatpush1.msra.mxu0 0.0
  %2540 = vmatprep.subr.mxu0 0.0
  %2541 = vmatpush1.msra.mxu0 0.0
  %2542 = vmatprep.subr.mxu0 0.0
  %2543 = vmatpush1.msra.mxu0 0.0
  %2544 = vmatprep.subr.mxu0 0.0
  %2545 = vmatpush1.msra.mxu0 0.0
  %2546 = vmatprep.subr.mxu0 0.0
  %2547 = vmatpush1.msra.mxu0 0.0
  %2548 = vmatprep.subr.mxu0 0.0
  %2549 = vmatpush1.msra.mxu0 0.0
  %2550 = vmatprep.subr.mxu0 0.0
  %2551 = vmatpush1.msra.mxu0 0.0
  %2552 = vmatprep.subr.mxu0 0.0
  %2553 = vmatpush1.msra.mxu0 0.0
  %2554 = vmatprep.subr.mxu0 0.0
  %2555 = vmatpush1.msra.mxu0 0.0
  %2556 = vmatprep.subr.mxu0 0.0
  %2557 = vmatpush1.msra.mxu0 0.0
  %2558 = vmatprep.subr.mxu0 0.0
  %2559 = vmatpush1.msra.mxu0 0.0
  %2560 = vmatprep.subr.mxu0 0.0
  %2561 = vmatpush1.msra.mxu0 0.0
  %2562 = vmatprep.subr.mxu0 0.0
  %2563 = vmatpush1.msra.mxu0 0.0
  %2564 = vmatprep.mubr.f32.mxu0 0.0
  %2565 = vmatmul.mubr.f32.gmra.mrb[0].mxu0 %v1073
  %v2566 = vpop.f32.mrb[0].mxu0
  %v2567 = vadd.f32 0.0, %v2566
  %v2568 = vpop.f32.mrb[0].mxu0
  %2569 = vmatprep.mubr.f32.mxu0 0.0
  %2570 = vmatmul.mubr.f32.gmra.mrb[0].mxu0 %v1076
  %v2571 = vpop.f32.mrb[0].mxu0
  %v2572 = vadd.f32 0.0, %v2571
  %v2573 = vpop.f32.mrb[0].mxu0
  %2574 = vdwg.mxu0
  %v2576 = vsel %vm172, %v2567, 0
  %v2579 = vsel %vm172, %v2572, 0
  %2581 = vmatprep.subr.mxu0 0.0
  %2582 = vmatpush1.msra.mxu0 %v1059
  %2583 = vmatprep.subr.mxu0 0.0
  %2584 = vmatpush1.msra.mxu0 %v1060
  %2585 = vmatprep.subr.mxu0 0.0
  %2586 = vmatpush1.msra.mxu0 0.0
  %2587 = vmatprep.subr.mxu0 0.0
  %2588 = vmatpush1.msra.mxu0 0.0
  %2589 = vmatprep.subr.mxu0 0.0
  %2590 = vmatpush1.msra.mxu0 0.0
  %2591 = vmatprep.subr.mxu0 0.0
  %2592 = vmatpush1.msra.mxu0 0.0
  %2593 = vmatprep.subr.mxu0 0.0
  %2594 = vmatpush1.msra.mxu0 0.0
  %2595 = vmatprep.subr.mxu0 0.0
  %2596 = vmatpush1.msra.mxu0 0.0
  %2597 = vmatprep.subr.mxu0 0.0
  %2598 = vmatpush1.msra.mxu0 0.0
  %2599 = vmatprep.subr.mxu0 0.0
  %2600 = vmatpush1.msra.mxu0 0.0
  %2601 = vmatprep.subr.mxu0 0.0
  %2602 = vmatpush1.msra.mxu0 0.0
  %2603 = vmatprep.subr.mxu0 0.0
  %2604 = vmatpush1.msra.mxu0 0.0
  %2605 = vmatprep.subr.mxu0 0.0
  %2606 = vmatpush1.msra.mxu0 0.0
  %2607 = vmatprep.subr.mxu0 0.0
  %2608 = vmatpush1.msra.mxu0 0.0
  %2609 = vmatprep.subr.mxu0 0.0
  %2610 = vmatpush1.msra.mxu0 0.0
  %2611 = vmatprep.subr.mxu0 0.0
  %2612 = vmatpush1.msra.mxu0 0.0
  %2613 = vmatprep.subr.mxu0 0.0
  %2614 = vmatpush1.msra.mxu0 0.0
  %2615 = vmatprep.subr.mxu0 0.0
  %2616 = vmatpush1.msra.mxu0 0.0
  %2617 = vmatprep.subr.mxu0 0.0
  %2618 = vmatpush1.msra.mxu0 0.0
  %2619 = vmatprep.subr.mxu0 0.0
  %2620 = vmatpush1.msra.mxu0 0.0
  %2621 = vmatprep.subr.mxu0 0.0
  %2622 = vmatpush1.msra.mxu0 0.0
  %2623 = vmatprep.subr.mxu0 0.0
  %2624 = vmatpush1.msra.mxu0 0.0
  %2625 = vmatprep.subr.mxu0 0.0
  %2626 = vmatpush1.msra.mxu0 0.0
  %2627 = vmatprep.subr.mxu0 0.0
  %2628 = vmatpush1.msra.mxu0 0.0
  %2629 = vmatprep.subr.mxu0 0.0
  %2630 = vmatpush1.msra.mxu0 0.0
  %2631 = vmatprep.subr.mxu0 0.0
  %2632 = vmatpush1.msra.mxu0 0.0
  %2633 = vmatprep.subr.mxu0 0.0
  %2634 = vmatpush1.msra.mxu0 0.0
  %2635 = vmatprep.subr.mxu0 0.0
  %2636 = vmatpush1.msra.mxu0 0.0
  %2637 = vmatprep.subr.mxu0 0.0
  %2638 = vmatpush1.msra.mxu0 0.0
  %2639 = vmatprep.subr.mxu0 0.0
  %2640 = vmatpush1.msra.mxu0 0.0
  %2641 = vmatprep.subr.mxu0 0.0
  %2642 = vmatpush1.msra.mxu0 0.0
  %2643 = vmatprep.subr.mxu0 0.0
  %2644 = vmatpush1.msra.mxu0 0.0
  %2645 = vmatprep.mubr.f32.mxu0 0.0
  %2646 = vmatmul.mubr.f32.gmra.mrb[0].mxu0 %v2576
  %v2647 = vpop.f32.mrb[0].mxu0
  %v2648 = vadd.f32 0.0, %v2647
  %v2649 = vpop.f32.mrb[0].mxu0
  %2650 = vmatprep.mubr.f32.mxu0 0.0
  %2651 = vmatmul.mubr.f32.gmra.mrb[0].mxu0 %v2579
  %v2652 = vpop.f32.mrb[0].mxu0
  %v2653 = vadd.f32 0.0, %v2652
  %v2654 = vpop.f32.mrb[0].mxu0
  %2655 = vdwg.mxu0
  %2656 = vxpose.xlu0.b32.start [1/16] %v2648, 128
  %2657 = vxpose.xlu0.b32.cont [2/16] %v2653, 128
  %2658 = vxpose.xlu0.b32.cont [3/16] 0.0, 128
  %2659 = vxpose.xlu0.b32.cont [4/16] 0.0, 128
  %2660 = vxpose.xlu0.b32.cont [5/16] 0.0, 128
  %2661 = vxpose.xlu0.b32.cont [6/16] 0.0, 128
  %2662 = vxpose.xlu0.b32.cont [7/16] 0.0, 128
  %2663 = vxpose.xlu0.b32.cont [8/16] 0.0, 128
  %2664 = vxpose.xlu0.b32.cont [9/16] 0.0, 128
  %2665 = vxpose.xlu0.b32.cont [10/16] 0.0, 128
  %2666 = vxpose.xlu0.b32.cont [11/16] 0.0, 128
  %2667 = vxpose.xlu0.b32.cont [12/16] 0.0, 128
  %2668 = vxpose.xlu0.b32.cont [13/16] 0.0, 128
  %2669 = vxpose.xlu0.b32.cont [14/16] 0.0, 128
  %2670 = vxpose.xlu0.b32.cont [15/16] 0.0, 128
  %2671 = vxpose.xlu0.b32.end [16/16] 0.0, 128
  %v2672 = vpop.trf.xlu0
  %v2673 = vpop.trf.xlu0
  %v2674 = vpop.trf.xlu0
  %v2675 = vpop.trf.xlu0
  %v2676 = vpop.trf.xlu0
  %v2677 = vpop.trf.xlu0
  %v2678 = vpop.trf.xlu0
  %v2679 = vpop.trf.xlu0
  %v2680 = vpop.trf.xlu0
  %v2681 = vpop.trf.xlu0
  %v2682 = vpop.trf.xlu0
  %v2683 = vpop.trf.xlu0
  %v2684 = vpop.trf.xlu0
  %v2685 = vpop.trf.xlu0
  %v2686 = vpop.trf.xlu0
  %v2687 = vpop.trf.xlu0
  %2689 = vset.pattern.permute.xlu0 2
  %2690 = vperm.xlu0 %2689, %v2648
  %v2691 = vpop.permute.xlu0 %2690
  %2694 = vset.pattern.permute.xlu0 2
  %2695 = vperm.xlu0 %2694, %v2653
  %v2696 = vpop.permute.xlu0 %2695
  %v2698 = vlaneseq
  %v2699 = vshrl.u32 %v2698, 7
  %v2700 = vsub.s32 0, %v2699
  %v2701 = vrot.slane %v2672, %v2700
  %v2702 = vadd.f32 %v2691, %v2701
  %v2703 = vadd.f32 %v2696, %v2701
  %vm2704 = vcmp.gt.f32.partialorder %v2702, 0.0
  %vm2705 = vcmp.gt.f32.partialorder %v2703, 0.0
  %v2706 = vmul.f32 %v2702, 0.2
  %v2707 = vmul.f32 %v2703, 0.2
  %v2708 = vsel %vm2704, %v2702, %v2706
  %v2709 = vsel %vm2705, %v2703, %v2707
  %v2710 = vsel %vm76, %v2708, -1e+30
  %v2711 = vsel %vm77, %v2709, -1e+30
  %v2712 = vsel %vm172, %v2710, -inf
  %2713 = vmax.xlane.f32.xlu0 %v2712
  %v2714 = vpop.xlane.xlu0 %2713
  %v2715 = vsel %vm172, %v2711, -inf
  %2716 = vmax.xlane.f32.xlu0 %v2715
  %v2717 = vpop.xlane.xlu0 %2716
  %v2718 = vsub.f32 %v2710, %v2714
  %v2719 = vsub.f32 %v2711, %v2717
  %v2720 = vmul.f32 %v2718, 1.442695
  %v2721 = vpow.pop %v2720
  %v2722 = vmul.f32 %v2719, 1.442695
  %v2723 = vpow.pop %v2722
  %v2724 = vsel %vm76, %v2721, 0.0
  %v2725 = vsel %vm77, %v2723, 0.0
  %v2726 = vsel %vm172, %v2724, 0.0
  %2727 = vadd.xlane.f32.xlu0 %v2726
  %v2728 = vpop.xlane.xlu0 %2727
  %v2729 = vsel %vm172, %v2725, 0.0
  %2730 = vadd.xlane.f32.xlu0 %v2729
  %v2731 = vpop.xlane.xlu0 %2730
  %v2732 = vmax.f32 %v2728, 1e-30
  %v2733 = vmax.f32 %v2731, 1e-30
  %v2734 = vrcp.pop %v2732
  %v2735 = vrcp.pop %v2733
  %v2736 = vmul.f32 %v2724, %v2734
  %v2737 = vmul.f32 %v2725, %v2735
  %v2739 = vsel %vm172, %v2736, 0
  %v2742 = vsel %vm172, %v2737, 0
  %2744 = vmatprep.subr.mxu0 0.0
  %2745 = vmatpush1.msra.mxu0 %v2567
  %2746 = vmatprep.subr.mxu0 0.0
  %2747 = vmatpush1.msra.mxu0 %v2572
  %2748 = vmatprep.subr.mxu0 0.0
  %2749 = vmatpush1.msra.mxu0 0.0
  %2750 = vmatprep.subr.mxu0 0.0
  %2751 = vmatpush1.msra.mxu0 0.0
  %2752 = vmatprep.subr.mxu0 0.0
  %2753 = vmatpush1.msra.mxu0 0.0
  %2754 = vmatprep.subr.mxu0 0.0
  %2755 = vmatpush1.msra.mxu0 0.0
  %2756 = vmatprep.subr.mxu0 0.0
  %2757 = vmatpush1.msra.mxu0 0.0
  %2758 = vmatprep.subr.mxu0 0.0
  %2759 = vmatpush1.msra.mxu0 0.0
  %2760 = vmatprep.subr.mxu0 0.0
  %2761 = vmatpush1.msra.mxu0 0.0
  %2762 = vmatprep.subr.mxu0 0.0
  %2763 = vmatpush1.msra.mxu0 0.0
  %2764 = vmatprep.subr.mxu0 0.0
  %2765 = vmatpush1.msra.mxu0 0.0
  %2766 = vmatprep.subr.mxu0 0.0
  %2767 = vmatpush1.msra.mxu0 0.0
  %2768 = vmatprep.subr.mxu0 0.0
  %2769 = vmatpush1.msra.mxu0 0.0
  %2770 = vmatprep.subr.mxu0 0.0
  %2771 = vmatpush1.msra.mxu0 0.0
  %2772 = vmatprep.subr.mxu0 0.0
  %2773 = vmatpush1.msra.mxu0 0.0
  %2774 = vmatprep.subr.mxu0 0.0
  %2775 = vmatpush1.msra.mxu0 0.0
  %2776 = vmatprep.subr.mxu0 0.0
  %2777 = vmatpush1.msra.mxu0 0.0
  %2778 = vmatprep.subr.mxu0 0.0
  %2779 = vmatpush1.msra.mxu0 0.0
  %2780 = vmatprep.subr.mxu0 0.0
  %2781 = vmatpush1.msra.mxu0 0.0
  %2782 = vmatprep.subr.mxu0 0.0
  %2783 = vmatpush1.msra.mxu0 0.0
  %2784 = vmatprep.subr.mxu0 0.0
  %2785 = vmatpush1.msra.mxu0 0.0
  %2786 = vmatprep.subr.mxu0 0.0
  %2787 = vmatpush1.msra.mxu0 0.0
  %2788 = vmatprep.subr.mxu0 0.0
  %2789 = vmatpush1.msra.mxu0 0.0
  %2790 = vmatprep.subr.mxu0 0.0
  %2791 = vmatpush1.msra.mxu0 0.0
  %2792 = vmatprep.subr.mxu0 0.0
  %2793 = vmatpush1.msra.mxu0 0.0
  %2794 = vmatprep.subr.mxu0 0.0
  %2795 = vmatpush1.msra.mxu0 0.0
  %2796 = vmatprep.subr.mxu0 0.0
  %2797 = vmatpush1.msra.mxu0 0.0
  %2798 = vmatprep.subr.mxu0 0.0
  %2799 = vmatpush1.msra.mxu0 0.0
  %2800 = vmatprep.subr.mxu0 0.0
  %2801 = vmatpush1.msra.mxu0 0.0
  %2802 = vmatprep.subr.mxu0 0.0
  %2803 = vmatpush1.msra.mxu0 0.0
  %2804 = vmatprep.subr.mxu0 0.0
  %2805 = vmatpush1.msra.mxu0 0.0
  %2806 = vmatprep.subr.mxu0 0.0
  %2807 = vmatpush1.msra.mxu0 0.0
  %2808 = vmatprep.mubr.f32.mxu0 0.0
  %2809 = vmatmul.mubr.f32.gmra.mrb[0].mxu0 %v2739
  %v2810 = vpop.f32.mrb[0].mxu0
  %v2811 = vadd.f32 0.0, %v2810
  %v2812 = vpop.f32.mrb[0].mxu0
  %2813 = vmatprep.mubr.f32.mxu0 0.0
  %2814 = vmatmul.mubr.f32.gmra.mrb[0].mxu0 %v2742
  %v2815 = vpop.f32.mrb[0].mxu0
  %v2816 = vadd.f32 0.0, %v2815
  %v2817 = vpop.f32.mrb[0].mxu0
  %2818 = vdwg.mxu0
  %2819 = vset.pattern.permute.xlu0 3
  %2820 = vperm.xlu0 %2819, %v2648
  %v2821 = vpop.permute.xlu0 %2820
  %2823 = vset.pattern.permute.xlu0 3
  %2824 = vperm.xlu0 %2823, %v2653
  %v2825 = vpop.permute.xlu0 %2824
  %v2827 = vlaneseq
  %v2828 = vshrl.u32 %v2827, 7
  %v2829 = vsub.s32 1, %v2828
  %v2830 = vrot.slane %v2672, %v2829
  %v2831 = vadd.f32 %v2821, %v2830
  %v2832 = vadd.f32 %v2825, %v2830
  %vm2833 = vcmp.gt.f32.partialorder %v2831, 0.0
  %vm2834 = vcmp.gt.f32.partialorder %v2832, 0.0
  %v2835 = vmul.f32 %v2831, 0.2
  %v2836 = vmul.f32 %v2832, 0.2
  %v2837 = vsel %vm2833, %v2831, %v2835
  %v2838 = vsel %vm2834, %v2832, %v2836
  %v2839 = vsel %vm76, %v2837, -1e+30
  %v2840 = vsel %vm77, %v2838, -1e+30
  %v2841 = vsel %vm172, %v2839, -inf
  %2842 = vmax.xlane.f32.xlu0 %v2841
  %v2843 = vpop.xlane.xlu0 %2842
  %v2844 = vsel %vm172, %v2840, -inf
  %2845 = vmax.xlane.f32.xlu0 %v2844
  %v2846 = vpop.xlane.xlu0 %2845
  %v2847 = vsub.f32 %v2839, %v2843
  %v2848 = vsub.f32 %v2840, %v2846
  %v2849 = vmul.f32 %v2847, 1.442695
  %v2850 = vpow.pop %v2849
  %v2851 = vmul.f32 %v2848, 1.442695
  %v2852 = vpow.pop %v2851
  %v2853 = vsel %vm76, %v2850, 0.0
  %v2854 = vsel %vm77, %v2852, 0.0
  %v2855 = vsel %vm172, %v2853, 0.0
  %2856 = vadd.xlane.f32.xlu0 %v2855
  %v2857 = vpop.xlane.xlu0 %2856
  %v2858 = vsel %vm172, %v2854, 0.0
  %2859 = vadd.xlane.f32.xlu0 %v2858
  %v2860 = vpop.xlane.xlu0 %2859
  %v2861 = vmax.f32 %v2857, 1e-30
  %v2862 = vmax.f32 %v2860, 1e-30
  %v2863 = vrcp.pop %v2861
  %v2864 = vrcp.pop %v2862
  %v2865 = vmul.f32 %v2853, %v2863
  %v2866 = vmul.f32 %v2854, %v2864
  %2867 = vrot.lane.b32.xlu0 %v2567, 120
  %v2868 = vpop.permute.xlu0 %2867
  %2869 = vrot.lane.b32.xlu0 %v2572, 120
  %v2870 = vpop.permute.xlu0 %2869
  %v2874 = vsel %vm172, %v2865, 0
  %v2877 = vsel %vm172, %v2866, 0
  %2879 = vmatprep.subr.mxu0 0.0
  %2880 = vmatpush1.msra.mxu0 %v2868
  %2881 = vmatprep.subr.mxu0 0.0
  %2882 = vmatpush1.msra.mxu0 %v2870
  %2883 = vmatprep.subr.mxu0 0.0
  %2884 = vmatpush1.msra.mxu0 0.0
  %2885 = vmatprep.subr.mxu0 0.0
  %2886 = vmatpush1.msra.mxu0 0.0
  %2887 = vmatprep.subr.mxu0 0.0
  %2888 = vmatpush1.msra.mxu0 0.0
  %2889 = vmatprep.subr.mxu0 0.0
  %2890 = vmatpush1.msra.mxu0 0.0
  %2891 = vmatprep.subr.mxu0 0.0
  %2892 = vmatpush1.msra.mxu0 0.0
  %2893 = vmatprep.subr.mxu0 0.0
  %2894 = vmatpush1.msra.mxu0 0.0
  %2895 = vmatprep.subr.mxu0 0.0
  %2896 = vmatpush1.msra.mxu0 0.0
  %2897 = vmatprep.subr.mxu0 0.0
  %2898 = vmatpush1.msra.mxu0 0.0
  %2899 = vmatprep.subr.mxu0 0.0
  %2900 = vmatpush1.msra.mxu0 0.0
  %2901 = vmatprep.subr.mxu0 0.0
  %2902 = vmatpush1.msra.mxu0 0.0
  %2903 = vmatprep.subr.mxu0 0.0
  %2904 = vmatpush1.msra.mxu0 0.0
  %2905 = vmatprep.subr.mxu0 0.0
  %2906 = vmatpush1.msra.mxu0 0.0
  %2907 = vmatprep.subr.mxu0 0.0
  %2908 = vmatpush1.msra.mxu0 0.0
  %2909 = vmatprep.subr.mxu0 0.0
  %2910 = vmatpush1.msra.mxu0 0.0
  %2911 = vmatprep.subr.mxu0 0.0
  %2912 = vmatpush1.msra.mxu0 0.0
  %2913 = vmatprep.subr.mxu0 0.0
  %2914 = vmatpush1.msra.mxu0 0.0
  %2915 = vmatprep.subr.mxu0 0.0
  %2916 = vmatpush1.msra.mxu0 0.0
  %2917 = vmatprep.subr.mxu0 0.0
  %2918 = vmatpush1.msra.mxu0 0.0
  %2919 = vmatprep.subr.mxu0 0.0
  %2920 = vmatpush1.msra.mxu0 0.0
  %2921 = vmatprep.subr.mxu0 0.0
  %2922 = vmatpush1.msra.mxu0 0.0
  %2923 = vmatprep.subr.mxu0 0.0
  %2924 = vmatpush1.msra.mxu0 0.0
  %2925 = vmatprep.subr.mxu0 0.0
  %2926 = vmatpush1.msra.mxu0 0.0
  %2927 = vmatprep.subr.mxu0 0.0
  %2928 = vmatpush1.msra.mxu0 0.0
  %2929 = vmatprep.subr.mxu0 0.0
  %2930 = vmatpush1.msra.mxu0 0.0
  %2931 = vmatprep.subr.mxu0 0.0
  %2932 = vmatpush1.msra.mxu0 0.0
  %2933 = vmatprep.subr.mxu0 0.0
  %2934 = vmatpush1.msra.mxu0 0.0
  %2935 = vmatprep.subr.mxu0 0.0
  %2936 = vmatpush1.msra.mxu0 0.0
  %2937 = vmatprep.subr.mxu0 0.0
  %2938 = vmatpush1.msra.mxu0 0.0
  %2939 = vmatprep.subr.mxu0 0.0
  %2940 = vmatpush1.msra.mxu0 0.0
  %2941 = vmatprep.subr.mxu0 0.0
  %2942 = vmatpush1.msra.mxu0 0.0
  %2943 = vmatprep.mubr.f32.mxu0 0.0
  %2944 = vmatmul.mubr.f32.gmra.mrb[0].mxu0 %v2874
  %v2945 = vpop.f32.mrb[0].mxu0
  %v2946 = vadd.f32 0.0, %v2945
  %v2947 = vpop.f32.mrb[0].mxu0
  %2948 = vmatprep.mubr.f32.mxu0 0.0
  %2949 = vmatmul.mubr.f32.gmra.mrb[0].mxu0 %v2877
  %v2950 = vpop.f32.mrb[0].mxu0
  %v2951 = vadd.f32 0.0, %v2950
  %v2952 = vpop.f32.mrb[0].mxu0
  %2953 = vdwg.mxu0
  %2956 = vrot.lane.b32.xlu0 %v2946, 8
  %v2957 = vpop.permute.xlu0 %2956
  %2958 = vrot.lane.b32.xlu0 %v2951, 8
  %v2959 = vpop.permute.xlu0 %2958
  %v2962 = vsel %vm90, %v2811, %v2957
  %v2963 = vsel %vm90, %v2816, %v2959
  %v2965 = vlaneseq
  %v2966 = vshrl.u32 %v2965, 7
  %v2967 = vsub.s32 0, %v2966
  %v2968 = vrot.slane %v1061, %v2967
  %v2970 = vadd.f32 %v2962, %v2968
  %v2971 = vadd.f32 %v2963, %v2968
  %v2972 = vadd.f32 %v2498, %v1548
  %v2973 = vadd.f32 %v2499, %v1549
  %v2974 = vadd.f32 %v2970, %v2026
  %v2975 = vadd.f32 %v2971, %v2027
  %v2976 = vld [vmem:[%s21] sm:$0xff]
  %v2977 = vld [vmem:[%s21 + $0x8] sm:$0xff]
  %v2978 = vld [vmem:[%s22] sm:$0x1]
  %v2979 = vadd.f32 %v2972, 0.0
  %v2980 = vadd.f32 %v2973, 0.0
  %2983 = vrot.lane.b32.xlu0 %v2972, 120
  %v2984 = vpop.permute.xlu0 %2983
  %2985 = vrot.lane.b32.xlu0 %v2973, 120
  %v2986 = vpop.permute.xlu0 %2985
  %v2989 = vadd.f32 %v2979, %v2984
  %v2990 = vadd.f32 %v2980, %v2986
  %v2991 = vmul.f32 %v2989, 0.5
  %v2992 = vmul.f32 %v2990, 0.5
  %v2993 = vadd.f32 %v2974, 0.0
  %v2994 = vadd.f32 %v2975, 0.0
  %2997 = vrot.lane.b32.xlu0 %v2974, 120
  %v2998 = vpop.permute.xlu0 %2997
  %2999 = vrot.lane.b32.xlu0 %v2975, 120
  %v3000 = vpop.permute.xlu0 %2999
  %v3003 = vadd.f32 %v2993, %v2998
  %v3004 = vadd.f32 %v2994, %v3000
  %v3005 = vmul.f32 %v3003, 0.5
  %v3006 = vmul.f32 %v3004, 0.5
  %v3008 = vsel %vm90, %v3005, 0
  %v3011 = vsel %vm90, %v3006, 0
  %3013 = vmatprep.subr.mxu0 0.0
  %3014 = vmatpush1.msra.mxu0 %v2977
  %3015 = vmatprep.subr.mxu0 0.0
  %3016 = vmatpush1.msra.mxu0 0.0
  %3017 = vmatprep.subr.mxu0 0.0
  %3018 = vmatpush1.msra.mxu0 0.0
  %3019 = vmatprep.subr.mxu0 0.0
  %3020 = vmatpush1.msra.mxu0 0.0
  %3021 = vmatprep.subr.mxu0 0.0
  %3022 = vmatpush1.msra.mxu0 0.0
  %3023 = vmatprep.subr.mxu0 0.0
  %3024 = vmatpush1.msra.mxu0 0.0
  %3025 = vmatprep.subr.mxu0 0.0
  %3026 = vmatpush1.msra.mxu0 0.0
  %3027 = vmatprep.subr.mxu0 0.0
  %3028 = vmatpush1.msra.mxu0 0.0
  %3029 = vmatprep.subr.mxu0 0.0
  %3030 = vmatpush1.msra.mxu0 0.0
  %3031 = vmatprep.subr.mxu0 0.0
  %3032 = vmatpush1.msra.mxu0 0.0
  %3033 = vmatprep.subr.mxu0 0.0
  %3034 = vmatpush1.msra.mxu0 0.0
  %3035 = vmatprep.subr.mxu0 0.0
  %3036 = vmatpush1.msra.mxu0 0.0
  %3037 = vmatprep.subr.mxu0 0.0
  %3038 = vmatpush1.msra.mxu0 0.0
  %3039 = vmatprep.subr.mxu0 0.0
  %3040 = vmatpush1.msra.mxu0 0.0
  %3041 = vmatprep.subr.mxu0 0.0
  %3042 = vmatpush1.msra.mxu0 0.0
  %3043 = vmatprep.subr.mxu0 0.0
  %3044 = vmatpush1.msra.mxu0 0.0
  %3045 = vmatprep.subr.mxu0 0.0
  %3046 = vmatpush1.msra.mxu0 0.0
  %3047 = vmatprep.subr.mxu0 0.0
  %3048 = vmatpush1.msra.mxu0 0.0
  %3049 = vmatprep.subr.mxu0 0.0
  %3050 = vmatpush1.msra.mxu0 0.0
  %3051 = vmatprep.subr.mxu0 0.0
  %3052 = vmatpush1.msra.mxu0 0.0
  %3053 = vmatprep.subr.mxu0 0.0
  %3054 = vmatpush1.msra.mxu0 0.0
  %3055 = vmatprep.subr.mxu0 0.0
  %3056 = vmatpush1.msra.mxu0 0.0
  %3057 = vmatprep.subr.mxu0 0.0
  %3058 = vmatpush1.msra.mxu0 0.0
  %3059 = vmatprep.subr.mxu0 0.0
  %3060 = vmatpush1.msra.mxu0 0.0
  %3061 = vmatprep.subr.mxu0 0.0
  %3062 = vmatpush1.msra.mxu0 0.0
  %3063 = vmatprep.subr.mxu0 0.0
  %3064 = vmatpush1.msra.mxu0 0.0
  %3065 = vmatprep.subr.mxu0 0.0
  %3066 = vmatpush1.msra.mxu0 0.0
  %3067 = vmatprep.subr.mxu0 0.0
  %3068 = vmatpush1.msra.mxu0 0.0
  %3069 = vmatprep.subr.mxu0 0.0
  %3070 = vmatpush1.msra.mxu0 0.0
  %3071 = vmatprep.subr.mxu0 0.0
  %3072 = vmatpush1.msra.mxu0 0.0
  %3073 = vmatprep.subr.mxu0 0.0
  %3074 = vmatpush1.msra.mxu0 0.0
  %3075 = vmatprep.subr.mxu0 0.0
  %3076 = vmatpush1.msra.mxu0 0.0
  %3077 = vmatprep.mubr.f32.mxu0 0.0
  %3078 = vmatmul.mubr.f32.gmra.mrb[0].mxu0 %v3008
  %v3079 = vpop.f32.mrb[0].mxu0
  %v3080 = vadd.f32 0.0, %v3079
  %v3081 = vpop.f32.mrb[0].mxu0
  %3082 = vmatprep.mubr.f32.mxu0 0.0
  %3083 = vmatmul.mubr.f32.gmra.mrb[0].mxu0 %v3011
  %v3084 = vpop.f32.mrb[0].mxu0
  %v3085 = vadd.f32 0.0, %v3084
  %v3086 = vpop.f32.mrb[0].mxu0
  %3087 = vdwg.mxu0
  %v3089 = vsel %vm90, %v2991, 0
  %v3092 = vsel %vm90, %v2992, 0
  %3094 = vmatprep.subr.mxu0 0.0
  %3095 = vmatpush1.msra.mxu0 %v2976
  %3096 = vmatprep.subr.mxu0 0.0
  %3097 = vmatpush1.msra.mxu0 0.0
  %3098 = vmatprep.subr.mxu0 0.0
  %3099 = vmatpush1.msra.mxu0 0.0
  %3100 = vmatprep.subr.mxu0 0.0
  %3101 = vmatpush1.msra.mxu0 0.0
  %3102 = vmatprep.subr.mxu0 0.0
  %3103 = vmatpush1.msra.mxu0 0.0
  %3104 = vmatprep.subr.mxu0 0.0
  %3105 = vmatpush1.msra.mxu0 0.0
  %3106 = vmatprep.subr.mxu0 0.0
  %3107 = vmatpush1.msra.mxu0 0.0
  %3108 = vmatprep.subr.mxu0 0.0
  %3109 = vmatpush1.msra.mxu0 0.0
  %3110 = vmatprep.subr.mxu0 0.0
  %3111 = vmatpush1.msra.mxu0 0.0
  %3112 = vmatprep.subr.mxu0 0.0
  %3113 = vmatpush1.msra.mxu0 0.0
  %3114 = vmatprep.subr.mxu0 0.0
  %3115 = vmatpush1.msra.mxu0 0.0
  %3116 = vmatprep.subr.mxu0 0.0
  %3117 = vmatpush1.msra.mxu0 0.0
  %3118 = vmatprep.subr.mxu0 0.0
  %3119 = vmatpush1.msra.mxu0 0.0
  %3120 = vmatprep.subr.mxu0 0.0
  %3121 = vmatpush1.msra.mxu0 0.0
  %3122 = vmatprep.subr.mxu0 0.0
  %3123 = vmatpush1.msra.mxu0 0.0
  %3124 = vmatprep.subr.mxu0 0.0
  %3125 = vmatpush1.msra.mxu0 0.0
  %3126 = vmatprep.subr.mxu0 0.0
  %3127 = vmatpush1.msra.mxu0 0.0
  %3128 = vmatprep.subr.mxu0 0.0
  %3129 = vmatpush1.msra.mxu0 0.0
  %3130 = vmatprep.subr.mxu0 0.0
  %3131 = vmatpush1.msra.mxu0 0.0
  %3132 = vmatprep.subr.mxu0 0.0
  %3133 = vmatpush1.msra.mxu0 0.0
  %3134 = vmatprep.subr.mxu0 0.0
  %3135 = vmatpush1.msra.mxu0 0.0
  %3136 = vmatprep.subr.mxu0 0.0
  %3137 = vmatpush1.msra.mxu0 0.0
  %3138 = vmatprep.subr.mxu0 0.0
  %3139 = vmatpush1.msra.mxu0 0.0
  %3140 = vmatprep.subr.mxu0 0.0
  %3141 = vmatpush1.msra.mxu0 0.0
  %3142 = vmatprep.subr.mxu0 0.0
  %3143 = vmatpush1.msra.mxu0 0.0
  %3144 = vmatprep.subr.mxu0 0.0
  %3145 = vmatpush1.msra.mxu0 0.0
  %3146 = vmatprep.subr.mxu0 0.0
  %3147 = vmatpush1.msra.mxu0 0.0
  %3148 = vmatprep.subr.mxu0 0.0
  %3149 = vmatpush1.msra.mxu0 0.0
  %3150 = vmatprep.subr.mxu0 0.0
  %3151 = vmatpush1.msra.mxu0 0.0
  %3152 = vmatprep.subr.mxu0 0.0
  %3153 = vmatpush1.msra.mxu0 0.0
  %3154 = vmatprep.subr.mxu0 0.0
  %3155 = vmatpush1.msra.mxu0 0.0
  %3156 = vmatprep.subr.mxu0 0.0
  %3157 = vmatpush1.msra.mxu0 0.0
  %3158 = vmatprep.mubr.f32.mxu0 0.0
  %3159 = vmatmul.mubr.f32.gmra.mrb[0].mxu0 %v3089
  %v3160 = vpop.f32.mrb[0].mxu0
  %v3161 = vadd.f32 %v3080, %v3160
  %v3162 = vpop.f32.mrb[0].mxu0
  %3163 = vmatprep.mubr.f32.mxu0 0.0
  %3164 = vmatmul.mubr.f32.gmra.mrb[0].mxu0 %v3092
  %v3165 = vpop.f32.mrb[0].mxu0
  %v3166 = vadd.f32 %v3085, %v3165
  %v3167 = vpop.f32.mrb[0].mxu0
  %3168 = vdwg.mxu0
  %v3170 = vlaneseq
  %v3171 = vshrl.u32 %v3170, 7
  %v3172 = vsub.s32 0, %v3171
  %v3173 = vrot.slane %v2978, %v3172
  %v3175 = vadd.f32 %v3161, %v3173
  %v3176 = vadd.f32 %v3166, %v3173
  %3177 = vst.msk [vmem:[%s23] sm:$0xff] %vm90, %v3175
  %3178 = vst.msk [vmem:[%s23 + $0x8] sm:$0xff] %vm90, %v3176
  // Predicated region
  $region94: #{_lambda_.1} parent=0 // pred_check
    _
  $region95: #{_lambda_.1} parent=0 // pred_check_branch
    %3180 = sbr.rel (0) target = $region97
  $region96: #{_lambda_.1} parent=0 // pred_region
    _
  $region97: #{_lambda_.1} parent=0 // pred_fallthru
    _
  // Predicated region
  $region98: #{_lambda_.1} parent=0 // pred_check
    _
  $region99: #{_lambda_.1} parent=0 // pred_check_branch
    %3182 = sbr.rel (0) target = $region101
  $region100: #{_lambda_.1} parent=0 // pred_region
    _
  $region101: #{_lambda_.1} parent=0 // pred_fallthru
    _

</llo_original>
